<compile_context>
chip_gen: v5e
topology: v5e:2x2
jax: 0.10.0
libtpu: 0.0.40
codegen_flags: <defaults>
</compile_context>

<pallas_src>
import functools

import jax
import jax.numpy as jnp
from jax import lax
from jax.experimental import pallas as pl
from jax.experimental.pallas import tpu as pltpu


def _vmem_limit_bytes():
    """Per-generation scoped-VMEM limit (v7x: 64 MiB physical, v5e/v6e: 128)."""
    try:
        cap = int(pltpu.get_tpu_info().vmem_capacity_bytes)
        return max(32 * 1024 * 1024, min(64 * 1024 * 1024, cap // 2))
    except Exception:  # non-TPU backend / interpret mode / older API
        return 32 * 1024 * 1024


_VMEM_LIMIT = _vmem_limit_bytes()


def _sublane(dtype):
    """Minimum sublane multiple for a dtype (f32: 8, bf16: 16, int8/fp8: 32)."""
    return {4: 8, 2: 16, 1: 32}.get(jnp.dtype(dtype).itemsize, 8)


def _pick_tile(dim, cap, align):
    """Largest multiple of `align` <= cap that divides dim; fallback = full dim."""
    t = min(cap, dim)
    t -= t % align
    while t >= align:
        if dim % t == 0:
            return t
        t -= align
    # TODO(synk): ragged last tile for dims not divisible by `align` (e.g. prime
    # sequence lengths) -- currently falls back to one full-size block.
    return dim


def _pick_tile_pref(dim, cap, pref_align, min_align):
    """Prefer the larger (MXU-friendly) alignment, fall back to the sublane min."""
    if dim >= pref_align and dim % pref_align == 0:
        return _pick_tile(dim, cap, pref_align)
    return _pick_tile(dim, cap, min_align)


# ---------------------------------------------------------------------------
# Tiled matmul kernels (QKV projection / output projection)
# ---------------------------------------------------------------------------
def _matmul_kernel(x_ref, w_ref, o_ref, acc_ref):
    @pl.when(pl.program_id(2) == 0)
    def _():
        acc_ref[...] = jnp.zeros_like(acc_ref)

    acc_ref[...] += jnp.dot(x_ref[...], w_ref[...],
                            preferred_element_type=jnp.float32)

    @pl.when(pl.program_id(2) == pl.num_programs(2) - 1)
    def _():
        o_ref[...] = acc_ref[...].astype(o_ref.dtype)


def _matmul_bias_kernel(x_ref, w_ref, b_ref, o_ref, acc_ref):
    @pl.when(pl.program_id(2) == 0)
    def _():
        acc_ref[...] = jnp.zeros_like(acc_ref)

    acc_ref[...] += jnp.dot(x_ref[...], w_ref[...],
                            preferred_element_type=jnp.float32)

    @pl.when(pl.program_id(2) == pl.num_programs(2) - 1)
    def _():
        o_ref[...] = (acc_ref[...] + b_ref[...].astype(jnp.float32)).astype(o_ref.dtype)


def linear_pallas(x, w, b=None):
    M, K = x.shape
    K2, N = w.shape
    assert K == K2
    sub = _sublane(x.dtype)
    # Bigger tiles -> fewer grid steps and less re-streaming; 128-aligned on
    # MXU-facing dims (v6e/v7x MXU is 2x256x256). Working set stays a few MiB.
    tm = _pick_tile_pref(M, 512, 128, sub)
    tn = _pick_tile(N, 512, 128)
    tk = _pick_tile(K, 1024, 128)
    grid = (M // tm, N // tn, K // tk)

    x_spec = pl.BlockSpec((tm, tk), lambda i, j, k: (i, k))
    # NOTE: for decode-like small-M shapes, pipeline_mode=pl.Buffered(3) on
    # w_spec is a further knob worth sweeping (weight streaming dominates).
    w_spec = pl.BlockSpec((tk, tn), lambda i, j, k: (k, j))
    o_spec = pl.BlockSpec((tm, tn), lambda i, j, k: (i, j))
    scratch = [pltpu.VMEM((tm, tn), jnp.float32)]
    cp = pltpu.CompilerParams(
        dimension_semantics=("parallel", "parallel", "arbitrary"),
        vmem_limit_bytes=_VMEM_LIMIT)
    out_shape = jax.ShapeDtypeStruct((M, N), x.dtype)

    if b is not None:
        b2 = b.reshape(1, N)
        b_spec = pl.BlockSpec((1, tn), lambda i, j, k: (0, j))
        return pl.pallas_call(
            _matmul_bias_kernel,
            out_shape=out_shape,
            grid_spec=pltpu.PrefetchScalarGridSpec(
                num_scalar_prefetch=0, grid=grid,
                in_specs=[x_spec, w_spec, b_spec],
                out_specs=o_spec, scratch_shapes=scratch),
            compiler_params=cp,
        )(x, w, b2)

    return pl.pallas_call(
        _matmul_kernel,
        out_shape=out_shape,
        grid_spec=pltpu.PrefetchScalarGridSpec(
            num_scalar_prefetch=0, grid=grid,
            in_specs=[x_spec, w_spec],
            out_specs=o_spec, scratch_shapes=scratch),
        compiler_params=cp,
    )(x, w)


# ---------------------------------------------------------------------------
# RoPE kernel: rotates q and k heads once each, reading straight out of qkv.
# Softmax scale is folded into the q heads here (linear op commutes with RoPE).
# Heads is the INNER grid axis so the cos/sin tables are not re-DMA'd per head.
# ---------------------------------------------------------------------------
def _rope_kernel(x_ref, cos_ref, sin_ref, o_ref, *, num_q_heads, half, scale):
    h = pl.program_id(1)                               # rope-head index (inner axis)
    x = x_ref[...].astype(jnp.float32)                 # (ts, hd)
    x1 = x[:, :half]
    x2 = x[:, half:]
    cos = cos_ref[...]                                 # (ts, half)
    sin = sin_ref[...]                                 # (ts, half)
    out = jnp.concatenate([x1 * cos - x2 * sin, x2 * cos + x1 * sin], axis=-1)
    out = out * jnp.where(h < num_q_heads, scale, 1.0)  # scale only q heads
    o_ref[...] = out.astype(o_ref.dtype)


def rope_pallas(qkv, cos, sin, *, num_q_heads, num_kv_heads, head_dim, scale):
    S = qkv.shape[0]
    n_rope_heads = num_q_heads + num_kv_heads          # q heads then k heads
    ts = _pick_tile(S, 512, _sublane(qkv.dtype))
    grid = (S // ts, n_rope_heads)                     # heads inner: cos/sin cached
    kernel = functools.partial(_rope_kernel, num_q_heads=num_q_heads,
                               half=head_dim // 2, scale=scale)

    return pl.pallas_call(
        kernel,
        out_shape=jax.ShapeDtypeStruct((S, n_rope_heads * head_dim), qkv.dtype),
        grid_spec=pltpu.PrefetchScalarGridSpec(
            num_scalar_prefetch=0, grid=grid,
            in_specs=[
                # q/k heads are the first (nh + nkv) column blocks of qkv
                pl.BlockSpec((ts, head_dim), lambda s, h: (s, h)),
                pl.BlockSpec((ts, head_dim // 2), lambda s, h: (s, 0)),
                pl.BlockSpec((ts, head_dim // 2), lambda s, h: (s, 0)),
            ],
            out_specs=pl.BlockSpec((ts, head_dim), lambda s, h: (s, h))),
        compiler_params=pltpu.CompilerParams(
            dimension_semantics=("parallel", "parallel"),
            vmem_limit_bytes=_VMEM_LIMIT),
    )(qkv, cos, sin)


# ---------------------------------------------------------------------------
# Flash-attention kernel (causal prefill, online softmax, GQA group per step)
# ---------------------------------------------------------------------------
def _flash_attn_kernel(q_ref, k_ref, v_ref, o_ref, m_sc, l_sc, acc_sc, *,
                       tq, tk, group, hd):
    qi = pl.program_id(1)
    ki = pl.program_id(2)

    @pl.when(ki == 0)
    def _init():
        m_sc[...] = jnp.full_like(m_sc, -jnp.inf)
        l_sc[...] = jnp.zeros_like(l_sc)
        acc_sc[...] = jnp.zeros_like(acc_sc)

    # Skip KV blocks that lie entirely above the causal diagonal.
    @pl.when(ki * tk <= qi * tq + (tq - 1))
    def _compute():
        k = k_ref[...]                                  # (tk, hd)
        v = v_ref[...]                                  # (tk, hd)
        row = lax.broadcasted_iota(jnp.int32, (tq, tk), 0) + qi * tq
        col = lax.broadcasted_iota(jnp.int32, (tq, tk), 1) + ki * tk
        causal = col <= row
        # Static unrolled loop over the q heads of this kv group: the K/V tile
        # loaded once is reused `group` times (K/V HBM traffic / group).
        for h in range(group):
            q = q_ref[:, h * hd:(h + 1) * hd]           # (tq, hd), scale pre-folded
            # contract last dims of both operands: no explicit K transpose.
            s = lax.dot_general(q, k, (((1,), (1,)), ((), ())),
                                preferred_element_type=jnp.float32)  # (tq, tk)
            s = jnp.where(causal, s, -1e30)

            m_prev = m_sc[h]                            # (tq, 1)
            m_new = jnp.maximum(m_prev, jnp.max(s, axis=-1, keepdims=True))
            alpha = jnp.exp(m_prev - m_new)
            p = jnp.exp(s - m_new)
            l_sc[h] = alpha * l_sc[h] + jnp.sum(p, axis=-1, keepdims=True)
            acc_sc[h] = alpha * acc_sc[h] + jnp.dot(
                p.astype(v.dtype), v, preferred_element_type=jnp.float32)
            m_sc[h] = m_new

    @pl.when(ki == pl.num_programs(2) - 1)
    def _finalize():
        for h in range(group):
            # TODO(synk): pl.reciprocal(..., approx=True) would move this divide
            # to the EUP slot in compiled mode; plain divide kept for portability.
            o_ref[:, h * hd:(h + 1) * hd] = (acc_sc[h] / l_sc[h]).astype(o_ref.dtype)


def flash_attention_pallas(qk_rot, qkv, *, num_heads, num_kv_heads, head_dim):
    S = qkv.shape[0]
    group = num_heads // num_kv_heads
    sub = _sublane(qkv.dtype)
    tq = _pick_tile_pref(S, 256, 128, sub)
    tk = _pick_tile_pref(S, 256, 128, sub)
    grid = (num_kv_heads, S // tq, S // tk)
    kernel = functools.partial(_flash_attn_kernel, tq=tq, tk=tk,
                               group=group, hd=head_dim)

    def last_visible(qi):
        # last KV block index that is (partly) below/on the causal diagonal
        return (qi * tq + tq - 1) // tk

    # Q covers the whole kv-group (contiguous columns of the (S, nh*hd) layout).
    q_spec = pl.BlockSpec((tq, group * head_dim), lambda g, qi, ki: (qi, g))
    # Clamp ki so fully-masked K/V tiles keep the previous block index and are
    # never DMA'd (their compute is already skipped by the pl.when).
    k_spec = pl.BlockSpec(
        (tk, head_dim),
        lambda g, qi, ki: (jnp.minimum(ki, last_visible(qi)), num_heads + g))
    # V is read straight out of the fused qkv buffer (no wrapper slice/copy).
    v_spec = pl.BlockSpec(
        (tk, head_dim),
        lambda g, qi, ki: (jnp.minimum(ki, last_visible(qi)),
                           num_heads + num_kv_heads + g))
    # Output is written lane-dense as (S, nh*hd), ready for the W_o matmul.
    o_spec = pl.BlockSpec((tq, group * head_dim), lambda g, qi, ki: (qi, g))

    return pl.pallas_call(
        kernel,
        out_shape=jax.ShapeDtypeStruct((S, num_heads * head_dim), qkv.dtype),
        grid_spec=pltpu.PrefetchScalarGridSpec(
            num_scalar_prefetch=0, grid=grid,
            in_specs=[q_spec, k_spec, v_spec],
            out_specs=o_spec,
            scratch_shapes=[
                pltpu.VMEM((group, tq, 1), jnp.float32),          # running max
                pltpu.VMEM((group, tq, 1), jnp.float32),          # running sum
                pltpu.VMEM((group, tq, head_dim), jnp.float32),   # accumulator
            ]),
        compiler_params=pltpu.CompilerParams(
            dimension_semantics=("parallel", "parallel", "arbitrary"),
            vmem_limit_bytes=_VMEM_LIMIT),
    )(qk_rot, qk_rot, qkv)


# ---------------------------------------------------------------------------
# Full forward
# ---------------------------------------------------------------------------
def qwen2_attention_forward(positions, hidden_states, params, cfg):
    """positions: (S,) int32, hidden_states: (S, hidden)."""
    H = cfg["hidden_size"]
    nh = cfg["num_heads"]
    nkv = cfg["num_kv_heads"]
    hd = H // nh
    scale = hd ** -0.5
    # TODO(synk): head_dim=64 variants (Qwen2 0.5B/1.5B) need sub-128 lane blocks.
    assert hd % 128 == 0, "head_dim must be a multiple of 128 for lane-aligned tiles"

    # 1) fused QKV projection (tiled Pallas matmul + bias).
    qkv = linear_pallas(hidden_states, params["w_qkv"], params["b_qkv"])

    # 2) RoPE tables (tiny; plain JAX), half-width (S, hd//2).
    inv_freq = 1.0 / (cfg["rope_theta"] ** (jnp.arange(0, hd, 2, dtype=jnp.float32) / hd))
    freqs = positions.astype(jnp.float32)[:, None] * inv_freq[None, :]     # (S, hd//2)
    cos, sin = jnp.cos(freqs), jnp.sin(freqs)

    # 3) RoPE applied once per q head and once per kv head, reading q/k straight
    #    out of qkv; softmax scale folded into q.
    qk_rot = rope_pallas(qkv, cos, sin, num_q_heads=nh, num_kv_heads=nkv,
                         head_dim=hd, scale=scale)

    # 4) causal flash attention (GQA-aware); output already (S, nh*hd) lane-dense.
    attn = flash_attention_pallas(qk_rot, qkv, num_heads=nh, num_kv_heads=nkv,
                                  head_dim=hd)

    # 5) output projection (no bias).
    return linear_pallas(attn, params["w_o"])


# ---------------------------------------------------------------------------
# Pure-JAX reference (for correctness check)
# ---------------------------------------------------------------------------
def reference_forward(positions, hidden_states, params, cfg):
    H = cfg["hidden_size"]
    nh = cfg["num_heads"]
    nkv = cfg["num_kv_heads"]
    hd = H // nh
    q_size, kv_size = nh * hd, nkv * hd
    scale = hd ** -0.5
    S = hidden_states.shape[0]

    qkv = hidden_states @ params["w_qkv"] + params["b_qkv"]
    q = qkv[:, :q_size].reshape(S, nh, hd)
    k = qkv[:, q_size:q_size + kv_size].reshape(S, nkv, hd)
    v = qkv[:, q_size + kv_size:].reshape(S, nkv, hd)

    inv_freq = 1.0 / (cfg["rope_theta"] ** (jnp.arange(0, hd, 2, dtype=jnp.float32) / hd))
    freqs = positions.astype(jnp.float32)[:, None] * inv_freq[None, :]
    cos, sin = jnp.cos(freqs)[:, None, :], jnp.sin(freqs)[:, None, :]

    def rope(x):
        x1, x2 = x[..., :hd // 2], x[..., hd // 2:]
        return jnp.concatenate([x1 * cos - x2 * sin, x2 * cos + x1 * sin], axis=-1)

    q, k = rope(q), rope(k)
    k = jnp.repeat(k, nh // nkv, axis=1)
    v = jnp.repeat(v, nh // nkv, axis=1)

    s = jnp.einsum("qhd,khd->hqk", q, k) * scale
    mask = jnp.tril(jnp.ones((S, S), dtype=bool))
    s = jnp.where(mask[None], s, -1e30)
    p = jax.nn.softmax(s, axis=-1)
    o = jnp.einsum("hqk,khd->qhd", p, v).reshape(S, nh * hd)
    return o @ params["w_o"]


# ---------------------------------------------------------------------------
if __name__ == "__main__":
    cfg = dict(hidden_size=512, num_heads=4, num_kv_heads=2, rope_theta=10000.0)
    S = 256
    H = cfg["hidden_size"]
    nh, nkv = cfg["num_heads"], cfg["num_kv_heads"]
    hd = H // nh
    q_size, kv_size = nh * hd, nkv * hd

    key = jax.random.PRNGKey(0)
    k1, k2, k3, k4 = jax.random.split(key, 4)
    params = {
        "w_qkv": jax.random.normal(k1, (H, q_size + 2 * kv_size), jnp.float32) * 0.02,
        "b_qkv": jax.random.normal(k2, (q_size + 2 * kv_size,), jnp.float32) * 0.02,
        "w_o": jax.random.normal(k3, (q_size, H), jnp.float32) * 0.02,
    }
    hidden_states = jax.random.normal(k4, (S, H), jnp.float32)
    positions = jnp.arange(S, dtype=jnp.int32)

    out = qwen2_attention_forward(positions, hidden_states, params, cfg)
    out = jax.block_until_ready(out)

    ref = reference_forward(positions, hidden_states, params, cfg)
    assert out.shape == (S, H)
    assert jnp.allclose(out, ref, atol=1e-3, rtol=1e-3), "mismatch vs reference"

    print("KERNEL_OK")
</pallas_src>

<mosaic_0001>
module attributes {stable_mosaic.version = 11 : i64} {
  func.func @_matmul_bias_kernel(%arg0: i32, %arg1: i32, %arg2: i32, %arg3: memref<256x512xf32, #tpu.memory_space<vmem>>, %arg4: memref<512x512xf32, #tpu.memory_space<vmem>>, %arg5: memref<1x512xf32, #tpu.memory_space<vmem>>, %arg6: memref<256x512xf32, #tpu.memory_space<vmem>>, %arg7: memref<256x512xf32, #tpu.memory_space<vmem>>) attributes {dimension_semantics = [#tpu.dimension_semantics<parallel>, #tpu.dimension_semantics<parallel>, #tpu.dimension_semantics<arbitrary>], iteration_bounds = array<i64: 1, 2, 1>, scalar_prefetch = 0 : i64, scratch_operands = 1 : i64, tpu.core_type = #tpu.core_type<tc>, window_params = [{transform_indices = @transform_0, window_bounds = array<i64: 256, 512>}, {transform_indices = @transform_1, window_bounds = array<i64: 512, 512>}, {transform_indices = @transform_2, window_bounds = array<i64: 1, 512>}, {transform_indices = @transform_3, window_bounds = array<i64: 256, 512>}]} {
    %c0_i32 = arith.constant 0 : i32
    %0 = arith.cmpi eq, %arg2, %c0_i32 : i32
    %1 = arith.extui %0 : i1 to i32
    %c0_i32_0 = arith.constant 0 : i32
    %2 = arith.cmpi ne, %1, %c0_i32_0 : i32
    scf.if %2 {
      %cst_10 = arith.constant 0.000000e+00 : f32
      %12 = vector.broadcast %cst_10 : f32 to vector<256x512xf32>
      %c0_11 = arith.constant 0 : index
      %c0_12 = arith.constant 0 : index
      %13 = vector.load %arg7[%c0_11, %c0_12] : memref<256x512xf32, #tpu.memory_space<vmem>>, vector<256x512xf32>
      tpu.vector_store %arg7[%c0_11, %c0_12], %12 {strides = array<i32>} : memref<256x512xf32, #tpu.memory_space<vmem>>, vector<256x512xf32>,
    } else {
    }
    %c0 = arith.constant 0 : index
    %c0_1 = arith.constant 0 : index
    %3 = vector.load %arg7[%c0, %c0_1] : memref<256x512xf32, #tpu.memory_space<vmem>>, vector<256x512xf32>
    %c0_2 = arith.constant 0 : index
    %c0_3 = arith.constant 0 : index
    %4 = vector.load %arg3[%c0_2, %c0_3] : memref<256x512xf32, #tpu.memory_space<vmem>>, vector<256x512xf32>
    %c0_4 = arith.constant 0 : index
    %c0_5 = arith.constant 0 : index
    %5 = vector.load %arg4[%c0_4, %c0_5] : memref<512x512xf32, #tpu.memory_space<vmem>>, vector<512x512xf32>
    %cst = arith.constant dense<0.000000e+00> : vector<256x512xf32>
    %6 = tpu.matmul %4, %5, %cst {dimension_numbers = #tpu.dot_dimension_numbers<[1], [0], [0], [1], [0, 0, 1, 1], [], []>} : vector<256x512xf32>, vector<512x512xf32>, vector<256x512xf32> -> vector<256x512xf32>
    %7 = arith.addf %3, %6 : vector<256x512xf32>
    %c0_6 = arith.constant 0 : index
    %c0_7 = arith.constant 0 : index
    %8 = vector.load %arg7[%c0_6, %c0_7] : memref<256x512xf32, #tpu.memory_space<vmem>>, vector<256x512xf32>
    tpu.vector_store %arg7[%c0_6, %c0_7], %7 {strides = array<i32>} : memref<256x512xf32, #tpu.memory_space<vmem>>, vector<256x512xf32>,
    %c0_i32_8 = arith.constant 0 : i32
    %9 = arith.cmpi eq, %arg2, %c0_i32_8 : i32
    %10 = arith.extui %9 : i1 to i32
    %c0_i32_9 = arith.constant 0 : i32
    %11 = arith.cmpi ne, %10, %c0_i32_9 : i32
    scf.if %11 {
      %c0_10 = arith.constant 0 : index
      %c0_11 = arith.constant 0 : index
      %12 = vector.load %arg7[%c0_10, %c0_11] : memref<256x512xf32, #tpu.memory_space<vmem>>, vector<256x512xf32>
      %c0_12 = arith.constant 0 : index
      %c0_13 = arith.constant 0 : index
      %13 = vector.load %arg5[%c0_12, %c0_13] : memref<1x512xf32, #tpu.memory_space<vmem>>, vector<1x512xf32>
      %14 = vector.broadcast %13 : vector<1x512xf32> to vector<256x512xf32>
      %15 = arith.addf %12, %14 : vector<256x512xf32>
      %c0_14 = arith.constant 0 : index
      %c0_15 = arith.constant 0 : index
      %16 = vector.load %arg6[%c0_14, %c0_15] : memref<256x512xf32, #tpu.memory_space<vmem>>, vector<256x512xf32>
      tpu.vector_store %arg6[%c0_14, %c0_15], %15 {strides = array<i32>} : memref<256x512xf32, #tpu.memory_space<vmem>>, vector<256x512xf32>,
    } else {
    }
    return
  }
  func.func @transform_0(%arg0: i32, %arg1: i32, %arg2: i32) -> (i32, i32) {
    %c0_i32 = arith.constant 0 : i32
    return %arg0, %arg2 : i32, i32
  }
  func.func @transform_1(%arg0: i32, %arg1: i32, %arg2: i32) -> (i32, i32) {
    %c0_i32 = arith.constant 0 : i32
    return %arg2, %arg1 : i32, i32
  }
  func.func @transform_2(%arg0: i32, %arg1: i32, %arg2: i32) -> (i32, i32) {
    %c0_i32 = arith.constant 0 : i32
    %c0_i32_0 = arith.constant 0 : i32
    return %c0_i32, %arg1 : i32, i32
  }
  func.func @transform_3(%arg0: i32, %arg1: i32, %arg2: i32) -> (i32, i32) {
    %c0_i32 = arith.constant 0 : i32
    return %arg0, %arg1 : i32, i32
  }
}

</mosaic_0001>

<llo_original>
// kernel: tpu_custom_call.1
$region0: #{tpu_custom_call.1}
  #allocation0 [shape = 'u32[]', space=smem, size = 0x4, offset = 0x4, fixed_abs, tag = 'smem constant byte address 0x4 - core index']
  #allocation1 [shape = 'u32[72,128]{1,0:T(1,128)}', space=vmem, size = 0x9000, scoped, tag = 'internal scratch']
  #allocation2 [shape = 'f32[256,512]{1,0:T(8,128)}', space=vmem, size = 0x80000, scoped, tag = 'scratch operand']
  %s0 = inlined_call_operand.hbm [shape: f32[256,512], index: 0, kind: input, shape index: {}]
  %s1 = inlined_call_operand.hbm [shape: f32[512,1024], index: 1, kind: input, shape index: {}]
  %s2 = inlined_call_operand.hbm [shape: f32[1,1024], index: 2, kind: input, shape index: {}]
  %s3 = inlined_call_operand.hbm [shape: f32[256,1024], index: 3, kind: output, shape index: {}]
  %s4 = sld [smem:[#allocation0]]
  $region65: #{tpu_custom_call.1} parent=0
    _
  %s6 = ssub.s32 1, %s4
  %s7 = scalar_select 0, %s6, %s4
  $region1: #{tpu_custom_call.1} parent=0
    #allocation3 [shape = 'u8[524288]{0}', space=vmem, size = 0x80000, scoped, tag = 'input window, operand 0, single buffered']
    #allocation4 [shape = 's32[2]{0}', space=sflag, size = 0x8, scoped, tag = 'scoped memory for tpu_custom_call.1']
    #allocation5 [shape = 's32[2]{0}', space=sflag, size = 0x8, scoped, tag = 'scoped memory for tpu_custom_call.1']
    #allocation6 [shape = 'u8[2097152]{0}', space=vmem, size = 0x200000, scoped, tag = 'input window, operand 1']
    #allocation7 [shape = 's32[2]{0}', space=sflag, size = 0x8, scoped, tag = 'scoped memory for tpu_custom_call.1']
    #allocation8 [shape = 'u8[4096]{0}', space=vmem, size = 0x1000, scoped, tag = 'input window, operand 2']
    #allocation9 [shape = 'u8[1048576]{0}', space=vmem, size = 0x100000, scoped, tag = 'output window, operand 0']
    %8 = vsyncpa [#allocation4], 0
    %9 = vsyncpa [#allocation7], 0
    %s10 = scalar_lea.sflag [#allocation7], 1
    %11 = vsyncpa %s10, 0
    %12 = vsyncpa [#allocation5], 0
    %s13 = scalar_lea.sflag [#allocation5], 1
    %14 = vsyncpa %s13, 0
    loop: start=0, step=1, limit=4
    $region2: #{tpu_custom_call.1} parent=1 // loop_pre_header
      _
    $region3: #{tpu_custom_call.1} parent=1 // loop_header
      %s16 = sphi 0, %s20
      %p17 = scmp.ge.s32.totalorder %s16, 4
      %s23 = sphi 0, %s42
      %s24 = sphi 0, %s38
      %s25 = sphi 0, %s34
      %s26 = sphi 0, %s23
      %s27 = sphi 0, %s24
      %s28 = sphi 0, %s25
      %s29 = sphi 0, %s26
      %s30 = sphi 0, %s27
      %s31 = sphi 0, %s28
      %s47 = sphi 0, %s49
      %s50 = sphi 0, %s47
      %s51 = sphi 0, %s50
      %s67 = sphi 0, %s51
      %s75 = sphi 0, %s77
      %s78 = sphi 0, %s75
      %s79 = sphi 0, %s78
      %s95 = sphi 0, %s79
      %s101 = sphi 0, %s103
      %s104 = sphi 0, %s101
      %s105 = sphi 0, %s104
      %s121 = sphi 0, %s105
      %s129 = sphi 0, %s131
      %s132 = sphi 0, %s129
      %s133 = sphi 0, %s132
      %s149 = sphi 0, %s133
    $region4: #{tpu_custom_call.1} parent=1 // loop_header_branch
      %19 = sbr.rel (%p17) target = $region8
    $region5: #{tpu_custom_call.1} parent=1 // loop_body
      %s21 = ssub.s32 %s16, 1
      %s22 = ssub.s32 %s16, 2
      %s32 = sadd.s32 1, %s25
      %p33 = scmp.ge.s32.totalorder %s32, 1
      %s34 = scalar_select %p33, 0, %s32
      %s35 = sadd.s32 1, %s24
      %s36 = scalar_select %p33, %s35, %s24
      %p37 = scmp.ge.s32.totalorder %s36, 2
      %s38 = scalar_select %p37, 0, %s36
      %s39 = sadd.s32 1, %s23
      %s40 = scalar_select %p37, %s39, %s23
      %p41 = scmp.ge.s32.totalorder %s40, 1
      %s42 = scalar_select %p41, 0, %s40
      %s43 = ssub.s32 %s23, %s42
      %s44 = ssub.s32 %s25, %s34
      %s45 = sor.u32 %s43, %s44
      %p46 = scmp.eq.s32.totalorder %s45, 0
      %s48 = sadd.s32 %s47, 1
      %s49 = scalar_select %p46, %s47, %s48
      %p52 = pneg %p46
      %p53 = scmp.eq.s32.totalorder %s16, 1
      %p54 = por %p52, %p53
      %p55 = scmp.ne.s32.totalorder %s47, %s50
      %p56 = scmp.eq.s32.totalorder %s16, 0
      %p57 = por %p55, %p56
      %p58 = scmp.ne.s32.totalorder %s47, %s50
      %p59 = scmp.eq.s32.totalorder %s21, 1
      %p60 = por %p58, %p59
      %p61 = scmp.ne.s32.totalorder %s50, %s51
      %p62 = scmp.eq.s32.totalorder %s21, 0
      %p63 = por %p61, %p62
      %p64 = scmp.ne.s32.totalorder %s50, %s51
      %p65 = scmp.eq.s32.totalorder %s22, 1
      %p66 = por %p64, %p65
      %p68 = scmp.ne.s32.totalorder %s51, %s67
      %p69 = scmp.eq.s32.totalorder %s22, 0
      %p70 = por %p68, %p69
      %s71 = ssub.s32 %s25, %s34
      %s72 = ssub.s32 %s24, %s38
      %s73 = sor.u32 %s71, %s72
      %p74 = scmp.eq.s32.totalorder %s73, 0
      %s76 = sadd.s32 %s75, 1
      %s77 = scalar_select %p74, %s75, %s76
      %p80 = pneg %p74
      %p81 = scmp.eq.s32.totalorder %s16, 1
      %p82 = por %p80, %p81
      %p83 = scmp.ne.s32.totalorder %s75, %s78
      %p84 = scmp.eq.s32.totalorder %s16, 0
      %p85 = por %p83, %p84
      %p86 = scmp.ne.s32.totalorder %s75, %s78
      %p87 = scmp.eq.s32.totalorder %s21, 1
      %p88 = por %p86, %p87
      %p89 = scmp.ne.s32.totalorder %s78, %s79
      %p90 = scmp.eq.s32.totalorder %s21, 0
      %p91 = por %p89, %p90
      %p92 = scmp.ne.s32.totalorder %s78, %s79
      %p93 = scmp.eq.s32.totalorder %s22, 1
      %p94 = por %p92, %p93
      %p96 = scmp.ne.s32.totalorder %s79, %s95
      %p97 = scmp.eq.s32.totalorder %s22, 0
      %p98 = por %p96, %p97
      %s99 = ssub.s32 %s24, %s38
      %p100 = scmp.eq.s32.totalorder %s99, 0
      %s102 = sadd.s32 %s101, 1
      %s103 = scalar_select %p100, %s101, %s102
      %p106 = pneg %p100
      %p107 = scmp.eq.s32.totalorder %s16, 1
      %p108 = por %p106, %p107
      %p109 = scmp.ne.s32.totalorder %s101, %s104
      %p110 = scmp.eq.s32.totalorder %s16, 0
      %p111 = por %p109, %p110
      %p112 = scmp.ne.s32.totalorder %s101, %s104
      %p113 = scmp.eq.s32.totalorder %s21, 1
      %p114 = por %p112, %p113
      %p115 = scmp.ne.s32.totalorder %s104, %s105
      %p116 = scmp.eq.s32.totalorder %s21, 0
      %p117 = por %p115, %p116
      %p118 = scmp.ne.s32.totalorder %s104, %s105
      %p119 = scmp.eq.s32.totalorder %s22, 1
      %p120 = por %p118, %p119
      %p122 = scmp.ne.s32.totalorder %s105, %s121
      %p123 = scmp.eq.s32.totalorder %s22, 0
      %p124 = por %p122, %p123
      %s125 = ssub.s32 %s23, %s42
      %s126 = ssub.s32 %s24, %s38
      %s127 = sor.u32 %s125, %s126
      %p128 = scmp.eq.s32.totalorder %s127, 0
      %s130 = sadd.s32 %s129, 1
      %s131 = scalar_select %p128, %s129, %s130
      %p134 = pneg %p128
      %p135 = scmp.eq.s32.totalorder %s16, 1
      %p136 = por %p134, %p135
      %p137 = scmp.ne.s32.totalorder %s129, %s132
      %p138 = scmp.eq.s32.totalorder %s16, 0
      %p139 = por %p137, %p138
      %p140 = scmp.ne.s32.totalorder %s129, %s132
      %p141 = scmp.eq.s32.totalorder %s21, 1
      %p142 = por %p140, %p141
      %p143 = scmp.ne.s32.totalorder %s132, %s133
      %p144 = scmp.eq.s32.totalorder %s21, 0
      %p145 = por %p143, %p144
      %p146 = scmp.ne.s32.totalorder %s132, %s133
      %p147 = scmp.eq.s32.totalorder %s22, 1
      %p148 = por %p146, %p147
      %p150 = scmp.ne.s32.totalorder %s133, %s149
      %p151 = scmp.eq.s32.totalorder %s22, 0
      %p152 = por %p150, %p151
      %p153 = scmp.le.s32.totalorder 1, %s16
      %p154 = scmp.lt.s32.totalorder %s16, 3
      %p155 = pnand %p153, %p154
      %p156 = pneg %p155
      // Predicated region
      $region9: #{tpu_custom_call.1} parent=5 // pred_check
        _
      $region10: #{tpu_custom_call.1} parent=5 // pred_check_branch
        %158 = sbr.rel (%p155) target = $region12
      $region11: #{tpu_custom_call.1} parent=5 // pred_region
        %s159 = ssub.s32 %s16, 1
        // Predicated region
        $region13: #{tpu_custom_call.1} parent=11 // pred_check
          %p160 = pneg %p63
        $region14: #{tpu_custom_call.1} parent=11 // pred_check_branch
          %162 = sbr.rel (%p160) target = $region16
        $region15: #{tpu_custom_call.1} parent=11 // pred_region
          %s163 = smul.u32 32, %s26
          %s164 = smul.u32 4, %s28
          %166 = vsyncadd [#allocation4], 0
          %s167 = smul.addr %s163, 4
          %s168 = sadd.s32 %s164, %s167
          %s169 = smul.addr %s168, 8
          %s170 = scalar_lea.hbm %s0, %s169
          %s171 = sshll.u32 %s170, 4
          %s172 = int_to_ptr.hbm [resolvable:$true] %s171
          %s173 = sshll.u32 [#allocation3], 4
          %s174 = int_to_ptr.vmem [resolvable:$true] %s173
          %179 = dma.hbm_to_vmem [thread:$0]  %s172, 16384, %s174, [#allocation4], 512, 512, 32
        $region16: #{tpu_custom_call.1} parent=11 // pred_fallthru
          _
      $region12: #{tpu_custom_call.1} parent=5 // pred_fallthru
        _
      %p180 = scmp.lt.s32.totalorder %s16, 2
      // Predicated region
      $region17: #{tpu_custom_call.1} parent=5 // pred_check
        %p181 = pneg %p180
      $region18: #{tpu_custom_call.1} parent=5 // pred_check_branch
        %183 = sbr.rel (%p181) target = $region20
      $region19: #{tpu_custom_call.1} parent=5 // pred_region
        // Predicated region
        $region21: #{tpu_custom_call.1} parent=19 // pred_check
          %p184 = pneg %p85
        $region22: #{tpu_custom_call.1} parent=19 // pred_check_branch
          %186 = sbr.rel (%p184) target = $region24
        $region23: #{tpu_custom_call.1} parent=19 // pred_region
          %s187 = sand.u32 %s16, 1
          %s188 = scalar_lea.sflag [#allocation7], %s187
          %s189 = sand.u32 %s75, 1
          %s190 = smul.addr %s189, 2048
          %s191 = scalar_lea.vmem [#allocation6], %s190
          %s192 = smul.u32 64, %s25
          %s193 = smul.u32 4, %s24
          %195 = vsyncadd %s188, 0
          %s196 = smul.addr %s192, 8
          %s197 = sadd.s32 %s193, %s196
          %s198 = smul.addr %s197, 8
          %s199 = scalar_lea.hbm %s1, %s198
          %s200 = sshll.u32 %s199, 4
          %s201 = int_to_ptr.hbm [resolvable:$true] %s200
          %s202 = sshll.u32 %s191, 4
          %s203 = int_to_ptr.vmem [resolvable:$true] %s202
          %208 = dma.hbm_to_vmem [thread:$0]  %s201, 32768, %s203, %s188, 1024, 512, 32
        $region24: #{tpu_custom_call.1} parent=19 // pred_fallthru
          _
        // Predicated region
        $region25: #{tpu_custom_call.1} parent=19 // pred_check
          %p209 = pneg %p111
        $region26: #{tpu_custom_call.1} parent=19 // pred_check_branch
          %211 = sbr.rel (%p209) target = $region28
        $region27: #{tpu_custom_call.1} parent=19 // pred_region
          %s212 = sand.u32 %s16, 1
          %s213 = scalar_lea.sflag [#allocation7], %s212
          %s214 = sand.u32 %s101, 1
          %s215 = smul.addr %s214, 4
          %s216 = scalar_lea.vmem [#allocation8], %s215
          %s217 = smul.u32 4, %s24
          %219 = vsyncadd %s213, 0
          %s220 = scalar_lea.hbm %s2, %s217
          %s222 = sshll.u32 %s220, 4
          %s223 = int_to_ptr.hbm [resolvable:$true] %s222
          %s224 = sshll.u32 %s216, 4
          %s225 = int_to_ptr.vmem [resolvable:$true] %s224
          %227 = dma.hbm_to_vmem [thread:$0]  %s223, 64, %s225, %s213
        $region28: #{tpu_custom_call.1} parent=19 // pred_fallthru
          _
      $region20: #{tpu_custom_call.1} parent=5 // pred_fallthru
        _
      %p228 = scmp.le.s32.totalorder 1, %s16
      %p229 = scmp.lt.s32.totalorder %s16, 3
      %p230 = pnand %p228, %p229
      %p231 = pneg %p230
      // Predicated region
      $region29: #{tpu_custom_call.1} parent=5 // pred_check
        _
      $region30: #{tpu_custom_call.1} parent=5 // pred_check_branch
        %233 = sbr.rel (%p230) target = $region32
      $region31: #{tpu_custom_call.1} parent=5 // pred_region
        %s234 = ssub.s32 %s16, 1
        // Predicated region
        $region33: #{tpu_custom_call.1} parent=31 // pred_check
          %p235 = pneg %p63
        $region34: #{tpu_custom_call.1} parent=31 // pred_check_branch
          %237 = sbr.rel (%p235) target = $region36
        $region35: #{tpu_custom_call.1} parent=31 // pred_region
          %239 = dma.done [#allocation4], 16384
        $region36: #{tpu_custom_call.1} parent=31 // pred_fallthru
          _
        %s240 = sand.u32 %s21, 1
        %s241 = scalar_lea.sflag [#allocation7], %s240
        %s242 = sand.u32 %s78, 1
        %s243 = smul.addr %s242, 2048
        %s244 = scalar_lea.vmem [#allocation6], %s243
        // Predicated region
        $region37: #{tpu_custom_call.1} parent=31 // pred_check
          %p245 = pneg %p91
        $region38: #{tpu_custom_call.1} parent=31 // pred_check_branch
          %247 = sbr.rel (%p245) target = $region40
        $region39: #{tpu_custom_call.1} parent=31 // pred_region
          %249 = dma.done %s241, 32768
        $region40: #{tpu_custom_call.1} parent=31 // pred_fallthru
          _
        %s250 = sand.u32 %s21, 1
        %s251 = scalar_lea.sflag [#allocation7], %s250
        %s252 = sand.u32 %s104, 1
        %s253 = smul.addr %s252, 4
        %s254 = scalar_lea.vmem [#allocation8], %s253
        // Predicated region
        $region41: #{tpu_custom_call.1} parent=31 // pred_check
          %p255 = pneg %p117
        $region42: #{tpu_custom_call.1} parent=31 // pred_check_branch
          %257 = sbr.rel (%p255) target = $region44
        $region43: #{tpu_custom_call.1} parent=31 // pred_region
          %259 = dma.done %s251, 64
        $region44: #{tpu_custom_call.1} parent=31 // pred_fallthru
          _
        %p260 = pneg %p63
        %p261 = pneg %p60
        %s262 = sand.u32 %s21, 1
        %s263 = scalar_lea.sflag [#allocation7], %s262
        %s264 = sand.u32 %s78, 1
        %s265 = smul.addr %s264, 2048
        %s266 = scalar_lea.vmem [#allocation6], %s265
        %p267 = pneg %p91
        %p268 = pneg %p88
        %s269 = sand.u32 %s21, 1
        %s270 = scalar_lea.sflag [#allocation7], %s269
        %s271 = sand.u32 %s104, 1
        %s272 = smul.addr %s271, 4
        %s273 = scalar_lea.vmem [#allocation8], %s272
        %p274 = pneg %p117
        %p275 = pneg %p114
        %p276 = pneg %p145
        %p277 = pneg %p142
        %s278 = sand.u32 %s132, 1
        %s279 = scalar_lea.sflag [#allocation5], %s278
        %s280 = sand.u32 %s132, 1
        %s281 = smul.addr %s280, 1024
        %s282 = scalar_lea.vmem [#allocation9], %s281
        %s283 = smul.u32 32, %s26
        %s284 = smul.u32 4, %s28
        %s285 = smul.u32 64, %s28
        %s286 = smul.u32 4, %s27
        %s287 = smul.u32 4, %s27
        %s288 = smul.u32 32, %s26
        %s289 = smul.u32 4, %s27
        %p290 = scmp.eq.s32.totalorder %s28, 0
        // Predicated region
        $region45: #{tpu_custom_call.1} parent=31 // pred_check
          %p291 = pneg %p290
        $region46: #{tpu_custom_call.1} parent=31 // pred_check_branch
          %293 = sbr.rel (%p291) target = $region48
        $region47: #{tpu_custom_call.1} parent=31 // pred_region
          %294 = vst [vmem:[#allocation2] sm:$0xff] 0.0
          %295 = vst [vmem:[#allocation2 + $0x8] sm:$0xff] 0.0
          %296 = vst [vmem:[#allocation2 + $0x10] sm:$0xff] 0.0
          %297 = vst [vmem:[#allocation2 + $0x18] sm:$0xff] 0.0
          %298 = vst [vmem:[#allocation2 + $0x20] sm:$0xff] 0.0
          %299 = vst [vmem:[#allocation2 + $0x28] sm:$0xff] 0.0
          %300 = vst [vmem:[#allocation2 + $0x30] sm:$0xff] 0.0
          %301 = vst [vmem:[#allocation2 + $0x38] sm:$0xff] 0.0
          %302 = vst [vmem:[#allocation2 + $0x40] sm:$0xff] 0.0
          %303 = vst [vmem:[#allocation2 + $0x48] sm:$0xff] 0.0
          %304 = vst [vmem:[#allocation2 + $0x50] sm:$0xff] 0.0
          %305 = vst [vmem:[#allocation2 + $0x58] sm:$0xff] 0.0
          %306 = vst [vmem:[#allocation2 + $0x60] sm:$0xff] 0.0
          %307 = vst [vmem:[#allocation2 + $0x68] sm:$0xff] 0.0
          %308 = vst [vmem:[#allocation2 + $0x70] sm:$0xff] 0.0
          %309 = vst [vmem:[#allocation2 + $0x78] sm:$0xff] 0.0
          %310 = vst [vmem:[#allocation2 + $0x80] sm:$0xff] 0.0
          %311 = vst [vmem:[#allocation2 + $0x88] sm:$0xff] 0.0
          %312 = vst [vmem:[#allocation2 + $0x90] sm:$0xff] 0.0
          %313 = vst [vmem:[#allocation2 + $0x98] sm:$0xff] 0.0
          %314 = vst [vmem:[#allocation2 + $0xa0] sm:$0xff] 0.0
          %315 = vst [vmem:[#allocation2 + $0xa8] sm:$0xff] 0.0
          %316 = vst [vmem:[#allocation2 + $0xb0] sm:$0xff] 0.0
          %317 = vst [vmem:[#allocation2 + $0xb8] sm:$0xff] 0.0
          %318 = vst [vmem:[#allocation2 + $0xc0] sm:$0xff] 0.0
          %319 = vst [vmem:[#allocation2 + $0xc8] sm:$0xff] 0.0
          %320 = vst [vmem:[#allocation2 + $0xd0] sm:$0xff] 0.0
          %321 = vst [vmem:[#allocation2 + $0xd8] sm:$0xff] 0.0
          %322 = vst [vmem:[#allocation2 + $0xe0] sm:$0xff] 0.0
          %323 = vst [vmem:[#allocation2 + $0xe8] sm:$0xff] 0.0
          %324 = vst [vmem:[#allocation2 + $0xf0] sm:$0xff] 0.0
          %325 = vst [vmem:[#allocation2 + $0xf8] sm:$0xff] 0.0
          %326 = vst [vmem:[#allocation2 + $0x100] sm:$0xff] 0.0
          %327 = vst [vmem:[#allocation2 + $0x108] sm:$0xff] 0.0
          %328 = vst [vmem:[#allocation2 + $0x110] sm:$0xff] 0.0
          %329 = vst [vmem:[#allocation2 + $0x118] sm:$0xff] 0.0
          %330 = vst [vmem:[#allocation2 + $0x120] sm:$0xff] 0.0
          %331 = vst [vmem:[#allocation2 + $0x128] sm:$0xff] 0.0
          %332 = vst [vmem:[#allocation2 + $0x130] sm:$0xff] 0.0
          %333 = vst [vmem:[#allocation2 + $0x138] sm:$0xff] 0.0
          %334 = vst [vmem:[#allocation2 + $0x140] sm:$0xff] 0.0
          %335 = vst [vmem:[#allocation2 + $0x148] sm:$0xff] 0.0
          %336 = vst [vmem:[#allocation2 + $0x150] sm:$0xff] 0.0
          %337 = vst [vmem:[#allocation2 + $0x158] sm:$0xff] 0.0
          %338 = vst [vmem:[#allocation2 + $0x160] sm:$0xff] 0.0
          %339 = vst [vmem:[#allocation2 + $0x168] sm:$0xff] 0.0
          %340 = vst [vmem:[#allocation2 + $0x170] sm:$0xff] 0.0
          %341 = vst [vmem:[#allocation2 + $0x178] sm:$0xff] 0.0
          %342 = vst [vmem:[#allocation2 + $0x180] sm:$0xff] 0.0
          %343 = vst [vmem:[#allocation2 + $0x188] sm:$0xff] 0.0
          %344 = vst [vmem:[#allocation2 + $0x190] sm:$0xff] 0.0
          %345 = vst [vmem:[#allocation2 + $0x198] sm:$0xff] 0.0
          %346 = vst [vmem:[#allocation2 + $0x1a0] sm:$0xff] 0.0
          %347 = vst [vmem:[#allocation2 + $0x1a8] sm:$0xff] 0.0
          %348 = vst [vmem:[#allocation2 + $0x1b0] sm:$0xff] 0.0
          %349 = vst [vmem:[#allocation2 + $0x1b8] sm:$0xff] 0.0
          %350 = vst [vmem:[#allocation2 + $0x1c0] sm:$0xff] 0.0
          %351 = vst [vmem:[#allocation2 + $0x1c8] sm:$0xff] 0.0
          %352 = vst [vmem:[#allocation2 + $0x1d0] sm:$0xff] 0.0
          %353 = vst [vmem:[#allocation2 + $0x1d8] sm:$0xff] 0.0
          %354 = vst [vmem:[#allocation2 + $0x1e0] sm:$0xff] 0.0
          %355 = vst [vmem:[#allocation2 + $0x1e8] sm:$0xff] 0.0
          %356 = vst [vmem:[#allocation2 + $0x1f0] sm:$0xff] 0.0
          %357 = vst [vmem:[#allocation2 + $0x1f8] sm:$0xff] 0.0
          %358 = vst [vmem:[#allocation2 + $0x200] sm:$0xff] 0.0
          %359 = vst [vmem:[#allocation2 + $0x208] sm:$0xff] 0.0
          %360 = vst [vmem:[#allocation2 + $0x210] sm:$0xff] 0.0
          %361 = vst [vmem:[#allocation2 + $0x218] sm:$0xff] 0.0
          %362 = vst [vmem:[#allocation2 + $0x220] sm:$0xff] 0.0
          %363 = vst [vmem:[#allocation2 + $0x228] sm:$0xff] 0.0
          %364 = vst [vmem:[#allocation2 + $0x230] sm:$0xff] 0.0
          %365 = vst [vmem:[#allocation2 + $0x238] sm:$0xff] 0.0
          %366 = vst [vmem:[#allocation2 + $0x240] sm:$0xff] 0.0
          %367 = vst [vmem:[#allocation2 + $0x248] sm:$0xff] 0.0
          %368 = vst [vmem:[#allocation2 + $0x250] sm:$0xff] 0.0
          %369 = vst [vmem:[#allocation2 + $0x258] sm:$0xff] 0.0
          %370 = vst [vmem:[#allocation2 + $0x260] sm:$0xff] 0.0
          %371 = vst [vmem:[#allocation2 + $0x268] sm:$0xff] 0.0
          %372 = vst [vmem:[#allocation2 + $0x270] sm:$0xff] 0.0
          %373 = vst [vmem:[#allocation2 + $0x278] sm:$0xff] 0.0
          %374 = vst [vmem:[#allocation2 + $0x280] sm:$0xff] 0.0
          %375 = vst [vmem:[#allocation2 + $0x288] sm:$0xff] 0.0
          %376 = vst [vmem:[#allocation2 + $0x290] sm:$0xff] 0.0
          %377 = vst [vmem:[#allocation2 + $0x298] sm:$0xff] 0.0
          %378 = vst [vmem:[#allocation2 + $0x2a0] sm:$0xff] 0.0
          %379 = vst [vmem:[#allocation2 + $0x2a8] sm:$0xff] 0.0
          %380 = vst [vmem:[#allocation2 + $0x2b0] sm:$0xff] 0.0
          %381 = vst [vmem:[#allocation2 + $0x2b8] sm:$0xff] 0.0
          %382 = vst [vmem:[#allocation2 + $0x2c0] sm:$0xff] 0.0
          %383 = vst [vmem:[#allocation2 + $0x2c8] sm:$0xff] 0.0
          %384 = vst [vmem:[#allocation2 + $0x2d0] sm:$0xff] 0.0
          %385 = vst [vmem:[#allocation2 + $0x2d8] sm:$0xff] 0.0
          %386 = vst [vmem:[#allocation2 + $0x2e0] sm:$0xff] 0.0
          %387 = vst [vmem:[#allocation2 + $0x2e8] sm:$0xff] 0.0
          %388 = vst [vmem:[#allocation2 + $0x2f0] sm:$0xff] 0.0
          %389 = vst [vmem:[#allocation2 + $0x2f8] sm:$0xff] 0.0
          %390 = vst [vmem:[#allocation2 + $0x300] sm:$0xff] 0.0
          %391 = vst [vmem:[#allocation2 + $0x308] sm:$0xff] 0.0
          %392 = vst [vmem:[#allocation2 + $0x310] sm:$0xff] 0.0
          %393 = vst [vmem:[#allocation2 + $0x318] sm:$0xff] 0.0
          %394 = vst [vmem:[#allocation2 + $0x320] sm:$0xff] 0.0
          %395 = vst [vmem:[#allocation2 + $0x328] sm:$0xff] 0.0
          %396 = vst [vmem:[#allocation2 + $0x330] sm:$0xff] 0.0
          %397 = vst [vmem:[#allocation2 + $0x338] sm:$0xff] 0.0
          %398 = vst [vmem:[#allocation2 + $0x340] sm:$0xff] 0.0
          %399 = vst [vmem:[#allocation2 + $0x348] sm:$0xff] 0.0
          %400 = vst [vmem:[#allocation2 + $0x350] sm:$0xff] 0.0
          %401 = vst [vmem:[#allocation2 + $0x358] sm:$0xff] 0.0
          %402 = vst [vmem:[#allocation2 + $0x360] sm:$0xff] 0.0
          %403 = vst [vmem:[#allocation2 + $0x368] sm:$0xff] 0.0
          %404 = vst [vmem:[#allocation2 + $0x370] sm:$0xff] 0.0
          %405 = vst [vmem:[#allocation2 + $0x378] sm:$0xff] 0.0
          %406 = vst [vmem:[#allocation2 + $0x380] sm:$0xff] 0.0
          %407 = vst [vmem:[#allocation2 + $0x388] sm:$0xff] 0.0
          %408 = vst [vmem:[#allocation2 + $0x390] sm:$0xff] 0.0
          %409 = vst [vmem:[#allocation2 + $0x398] sm:$0xff] 0.0
          %410 = vst [vmem:[#allocation2 + $0x3a0] sm:$0xff] 0.0
          %411 = vst [vmem:[#allocation2 + $0x3a8] sm:$0xff] 0.0
          %412 = vst [vmem:[#allocation2 + $0x3b0] sm:$0xff] 0.0
          %413 = vst [vmem:[#allocation2 + $0x3b8] sm:$0xff] 0.0
          %414 = vst [vmem:[#allocation2 + $0x3c0] sm:$0xff] 0.0
          %415 = vst [vmem:[#allocation2 + $0x3c8] sm:$0xff] 0.0
          %416 = vst [vmem:[#allocation2 + $0x3d0] sm:$0xff] 0.0
          %417 = vst [vmem:[#allocation2 + $0x3d8] sm:$0xff] 0.0
          %418 = vst [vmem:[#allocation2 + $0x3e0] sm:$0xff] 0.0
          %419 = vst [vmem:[#allocation2 + $0x3e8] sm:$0xff] 0.0
          %420 = vst [vmem:[#allocation2 + $0x3f0] sm:$0xff] 0.0
          %421 = vst [vmem:[#allocation2 + $0x3f8] sm:$0xff] 0.0
        $region48: #{tpu_custom_call.1} parent=31 // pred_fallthru
          _
        %v422 = vld [vmem:[#allocation2] sm:$0xff]
        %v423 = vld [vmem:[#allocation2 + $0x8] sm:$0xff]
        %v424 = vld [vmem:[#allocation2 + $0x10] sm:$0xff]
        %v425 = vld [vmem:[#allocation2 + $0x18] sm:$0xff]
        %v426 = vld [vmem:[#allocation2 + $0x20] sm:$0xff]
        %v427 = vld [vmem:[#allocation2 + $0x28] sm:$0xff]
        %v428 = vld [vmem:[#allocation2 + $0x30] sm:$0xff]
        %v429 = vld [vmem:[#allocation2 + $0x38] sm:$0xff]
        %v430 = vld [vmem:[#allocation2 + $0x40] sm:$0xff]
        %v431 = vld [vmem:[#allocation2 + $0x48] sm:$0xff]
        %v432 = vld [vmem:[#allocation2 + $0x50] sm:$0xff]
        %v433 = vld [vmem:[#allocation2 + $0x58] sm:$0xff]
        %v434 = vld [vmem:[#allocation2 + $0x60] sm:$0xff]
        %v435 = vld [vmem:[#allocation2 + $0x68] sm:$0xff]
        %v436 = vld [vmem:[#allocation2 + $0x70] sm:$0xff]
        %v437 = vld [vmem:[#allocation2 + $0x78] sm:$0xff]
        %v438 = vld [vmem:[#allocation2 + $0x80] sm:$0xff]
        %v439 = vld [vmem:[#allocation2 + $0x88] sm:$0xff]
        %v440 = vld [vmem:[#allocation2 + $0x90] sm:$0xff]
        %v441 = vld [vmem:[#allocation2 + $0x98] sm:$0xff]
        %v442 = vld [vmem:[#allocation2 + $0xa0] sm:$0xff]
        %v443 = vld [vmem:[#allocation2 + $0xa8] sm:$0xff]
        %v444 = vld [vmem:[#allocation2 + $0xb0] sm:$0xff]
        %v445 = vld [vmem:[#allocation2 + $0xb8] sm:$0xff]
        %v446 = vld [vmem:[#allocation2 + $0xc0] sm:$0xff]
        %v447 = vld [vmem:[#allocation2 + $0xc8] sm:$0xff]
        %v448 = vld [vmem:[#allocation2 + $0xd0] sm:$0xff]
        %v449 = vld [vmem:[#allocation2 + $0xd8] sm:$0xff]
        %v450 = vld [vmem:[#allocation2 + $0xe0] sm:$0xff]
        %v451 = vld [vmem:[#allocation2 + $0xe8] sm:$0xff]
        %v452 = vld [vmem:[#allocation2 + $0xf0] sm:$0xff]
        %v453 = vld [vmem:[#allocation2 + $0xf8] sm:$0xff]
        %v454 = vld [vmem:[#allocation2 + $0x100] sm:$0xff]
        %v455 = vld [vmem:[#allocation2 + $0x108] sm:$0xff]
        %v456 = vld [vmem:[#allocation2 + $0x110] sm:$0xff]
        %v457 = vld [vmem:[#allocation2 + $0x118] sm:$0xff]
        %v458 = vld [vmem:[#allocation2 + $0x120] sm:$0xff]
        %v459 = vld [vmem:[#allocation2 + $0x128] sm:$0xff]
        %v460 = vld [vmem:[#allocation2 + $0x130] sm:$0xff]
        %v461 = vld [vmem:[#allocation2 + $0x138] sm:$0xff]
        %v462 = vld [vmem:[#allocation2 + $0x140] sm:$0xff]
        %v463 = vld [vmem:[#allocation2 + $0x148] sm:$0xff]
        %v464 = vld [vmem:[#allocation2 + $0x150] sm:$0xff]
        %v465 = vld [vmem:[#allocation2 + $0x158] sm:$0xff]
        %v466 = vld [vmem:[#allocation2 + $0x160] sm:$0xff]
        %v467 = vld [vmem:[#allocation2 + $0x168] sm:$0xff]
        %v468 = vld [vmem:[#allocation2 + $0x170] sm:$0xff]
        %v469 = vld [vmem:[#allocation2 + $0x178] sm:$0xff]
        %v470 = vld [vmem:[#allocation2 + $0x180] sm:$0xff]
        %v471 = vld [vmem:[#allocation2 + $0x188] sm:$0xff]
        %v472 = vld [vmem:[#allocation2 + $0x190] sm:$0xff]
        %v473 = vld [vmem:[#allocation2 + $0x198] sm:$0xff]
        %v474 = vld [vmem:[#allocation2 + $0x1a0] sm:$0xff]
        %v475 = vld [vmem:[#allocation2 + $0x1a8] sm:$0xff]
        %v476 = vld [vmem:[#allocation2 + $0x1b0] sm:$0xff]
        %v477 = vld [vmem:[#allocation2 + $0x1b8] sm:$0xff]
        %v478 = vld [vmem:[#allocation2 + $0x1c0] sm:$0xff]
        %v479 = vld [vmem:[#allocation2 + $0x1c8] sm:$0xff]
        %v480 = vld [vmem:[#allocation2 + $0x1d0] sm:$0xff]
        %v481 = vld [vmem:[#allocation2 + $0x1d8] sm:$0xff]
        %v482 = vld [vmem:[#allocation2 + $0x1e0] sm:$0xff]
        %v483 = vld [vmem:[#allocation2 + $0x1e8] sm:$0xff]
        %v484 = vld [vmem:[#allocation2 + $0x1f0] sm:$0xff]
        %v485 = vld [vmem:[#allocation2 + $0x1f8] sm:$0xff]
        %v486 = vld [vmem:[#allocation2 + $0x200] sm:$0xff]
        %v487 = vld [vmem:[#allocation2 + $0x208] sm:$0xff]
        %v488 = vld [vmem:[#allocation2 + $0x210] sm:$0xff]
        %v489 = vld [vmem:[#allocation2 + $0x218] sm:$0xff]
        %v490 = vld [vmem:[#allocation2 + $0x220] sm:$0xff]
        %v491 = vld [vmem:[#allocation2 + $0x228] sm:$0xff]
        %v492 = vld [vmem:[#allocation2 + $0x230] sm:$0xff]
        %v493 = vld [vmem:[#allocation2 + $0x238] sm:$0xff]
        %v494 = vld [vmem:[#allocation2 + $0x240] sm:$0xff]
        %v495 = vld [vmem:[#allocation2 + $0x248] sm:$0xff]
        %v496 = vld [vmem:[#allocation2 + $0x250] sm:$0xff]
        %v497 = vld [vmem:[#allocation2 + $0x258] sm:$0xff]
        %v498 = vld [vmem:[#allocation2 + $0x260] sm:$0xff]
        %v499 = vld [vmem:[#allocation2 + $0x268] sm:$0xff]
        %v500 = vld [vmem:[#allocation2 + $0x270] sm:$0xff]
        %v501 = vld [vmem:[#allocation2 + $0x278] sm:$0xff]
        %v502 = vld [vmem:[#allocation2 + $0x280] sm:$0xff]
        %v503 = vld [vmem:[#allocation2 + $0x288] sm:$0xff]
        %v504 = vld [vmem:[#allocation2 + $0x290] sm:$0xff]
        %v505 = vld [vmem:[#allocation2 + $0x298] sm:$0xff]
        %v506 = vld [vmem:[#allocation2 + $0x2a0] sm:$0xff]
        %v507 = vld [vmem:[#allocation2 + $0x2a8] sm:$0xff]
        %v508 = vld [vmem:[#allocation2 + $0x2b0] sm:$0xff]
        %v509 = vld [vmem:[#allocation2 + $0x2b8] sm:$0xff]
        %v510 = vld [vmem:[#allocation2 + $0x2c0] sm:$0xff]
        %v511 = vld [vmem:[#allocation2 + $0x2c8] sm:$0xff]
        %v512 = vld [vmem:[#allocation2 + $0x2d0] sm:$0xff]
        %v513 = vld [vmem:[#allocation2 + $0x2d8] sm:$0xff]
        %v514 = vld [vmem:[#allocation2 + $0x2e0] sm:$0xff]
        %v515 = vld [vmem:[#allocation2 + $0x2e8] sm:$0xff]
        %v516 = vld [vmem:[#allocation2 + $0x2f0] sm:$0xff]
        %v517 = vld [vmem:[#allocation2 + $0x2f8] sm:$0xff]
        %v518 = vld [vmem:[#allocation2 + $0x300] sm:$0xff]
        %v519 = vld [vmem:[#allocation2 + $0x308] sm:$0xff]
        %v520 = vld [vmem:[#allocation2 + $0x310] sm:$0xff]
        %v521 = vld [vmem:[#allocation2 + $0x318] sm:$0xff]
        %v522 = vld [vmem:[#allocation2 + $0x320] sm:$0xff]
        %v523 = vld [vmem:[#allocation2 + $0x328] sm:$0xff]
        %v524 = vld [vmem:[#allocation2 + $0x330] sm:$0xff]
        %v525 = vld [vmem:[#allocation2 + $0x338] sm:$0xff]
        %v526 = vld [vmem:[#allocation2 + $0x340] sm:$0xff]
        %v527 = vld [vmem:[#allocation2 + $0x348] sm:$0xff]
        %v528 = vld [vmem:[#allocation2 + $0x350] sm:$0xff]
        %v529 = vld [vmem:[#allocation2 + $0x358] sm:$0xff]
        %v530 = vld [vmem:[#allocation2 + $0x360] sm:$0xff]
        %v531 = vld [vmem:[#allocation2 + $0x368] sm:$0xff]
        %v532 = vld [vmem:[#allocation2 + $0x370] sm:$0xff]
        %v533 = vld [vmem:[#allocation2 + $0x378] sm:$0xff]
        %v534 = vld [vmem:[#allocation2 + $0x380] sm:$0xff]
        %v535 = vld [vmem:[#allocation2 + $0x388] sm:$0xff]
        %v536 = vld [vmem:[#allocation2 + $0x390] sm:$0xff]
        %v537 = vld [vmem:[#allocation2 + $0x398] sm:$0xff]
        %v538 = vld [vmem:[#allocation2 + $0x3a0] sm:$0xff]
        %v539 = vld [vmem:[#allocation2 + $0x3a8] sm:$0xff]
        %v540 = vld [vmem:[#allocation2 + $0x3b0] sm:$0xff]
        %v541 = vld [vmem:[#allocation2 + $0x3b8] sm:$0xff]
        %v542 = vld [vmem:[#allocation2 + $0x3c0] sm:$0xff]
        %v543 = vld [vmem:[#allocation2 + $0x3c8] sm:$0xff]
        %v544 = vld [vmem:[#allocation2 + $0x3d0] sm:$0xff]
        %v545 = vld [vmem:[#allocation2 + $0x3d8] sm:$0xff]
        %v546 = vld [vmem:[#allocation2 + $0x3e0] sm:$0xff]
        %v547 = vld [vmem:[#allocation2 + $0x3e8] sm:$0xff]
        %v548 = vld [vmem:[#allocation2 + $0x3f0] sm:$0xff]
        %v549 = vld [vmem:[#allocation2 + $0x3f8] sm:$0xff]
        %v550 = vld [vmem:[#allocation3] sm:$0xff]
        %v551 = vld [vmem:[#allocation3 + $0x8] sm:$0xff]
        %v552 = vld [vmem:[#allocation3 + $0x10] sm:$0xff]
        %v553 = vld [vmem:[#allocation3 + $0x18] sm:$0xff]
        %v554 = vld [vmem:[#allocation3 + $0x20] sm:$0xff]
        %v555 = vld [vmem:[#allocation3 + $0x28] sm:$0xff]
        %v556 = vld [vmem:[#allocation3 + $0x30] sm:$0xff]
        %v557 = vld [vmem:[#allocation3 + $0x38] sm:$0xff]
        %v558 = vld [vmem:[#allocation3 + $0x40] sm:$0xff]
        %v559 = vld [vmem:[#allocation3 + $0x48] sm:$0xff]
        %v560 = vld [vmem:[#allocation3 + $0x50] sm:$0xff]
        %v561 = vld [vmem:[#allocation3 + $0x58] sm:$0xff]
        %v562 = vld [vmem:[#allocation3 + $0x60] sm:$0xff]
        %v563 = vld [vmem:[#allocation3 + $0x68] sm:$0xff]
        %v564 = vld [vmem:[#allocation3 + $0x70] sm:$0xff]
        %v565 = vld [vmem:[#allocation3 + $0x78] sm:$0xff]
        %v566 = vld [vmem:[#allocation3 + $0x80] sm:$0xff]
        %v567 = vld [vmem:[#allocation3 + $0x88] sm:$0xff]
        %v568 = vld [vmem:[#allocation3 + $0x90] sm:$0xff]
        %v569 = vld [vmem:[#allocation3 + $0x98] sm:$0xff]
        %v570 = vld [vmem:[#allocation3 + $0xa0] sm:$0xff]
        %v571 = vld [vmem:[#allocation3 + $0xa8] sm:$0xff]
        %v572 = vld [vmem:[#allocation3 + $0xb0] sm:$0xff]
        %v573 = vld [vmem:[#allocation3 + $0xb8] sm:$0xff]
        %v574 = vld [vmem:[#allocation3 + $0xc0] sm:$0xff]
        %v575 = vld [vmem:[#allocation3 + $0xc8] sm:$0xff]
        %v576 = vld [vmem:[#allocation3 + $0xd0] sm:$0xff]
        %v577 = vld [vmem:[#allocation3 + $0xd8] sm:$0xff]
        %v578 = vld [vmem:[#allocation3 + $0xe0] sm:$0xff]
        %v579 = vld [vmem:[#allocation3 + $0xe8] sm:$0xff]
        %v580 = vld [vmem:[#allocation3 + $0xf0] sm:$0xff]
        %v581 = vld [vmem:[#allocation3 + $0xf8] sm:$0xff]
        %v582 = vld [vmem:[#allocation3 + $0x100] sm:$0xff]
        %v583 = vld [vmem:[#allocation3 + $0x108] sm:$0xff]
        %v584 = vld [vmem:[#allocation3 + $0x110] sm:$0xff]
        %v585 = vld [vmem:[#allocation3 + $0x118] sm:$0xff]
        %v586 = vld [vmem:[#allocation3 + $0x120] sm:$0xff]
        %v587 = vld [vmem:[#allocation3 + $0x128] sm:$0xff]
        %v588 = vld [vmem:[#allocation3 + $0x130] sm:$0xff]
        %v589 = vld [vmem:[#allocation3 + $0x138] sm:$0xff]
        %v590 = vld [vmem:[#allocation3 + $0x140] sm:$0xff]
        %v591 = vld [vmem:[#allocation3 + $0x148] sm:$0xff]
        %v592 = vld [vmem:[#allocation3 + $0x150] sm:$0xff]
        %v593 = vld [vmem:[#allocation3 + $0x158] sm:$0xff]
        %v594 = vld [vmem:[#allocation3 + $0x160] sm:$0xff]
        %v595 = vld [vmem:[#allocation3 + $0x168] sm:$0xff]
        %v596 = vld [vmem:[#allocation3 + $0x170] sm:$0xff]
        %v597 = vld [vmem:[#allocation3 + $0x178] sm:$0xff]
        %v598 = vld [vmem:[#allocation3 + $0x180] sm:$0xff]
        %v599 = vld [vmem:[#allocation3 + $0x188] sm:$0xff]
        %v600 = vld [vmem:[#allocation3 + $0x190] sm:$0xff]
        %v601 = vld [vmem:[#allocation3 + $0x198] sm:$0xff]
        %v602 = vld [vmem:[#allocation3 + $0x1a0] sm:$0xff]
        %v603 = vld [vmem:[#allocation3 + $0x1a8] sm:$0xff]
        %v604 = vld [vmem:[#allocation3 + $0x1b0] sm:$0xff]
        %v605 = vld [vmem:[#allocation3 + $0x1b8] sm:$0xff]
        %v606 = vld [vmem:[#allocation3 + $0x1c0] sm:$0xff]
        %v607 = vld [vmem:[#allocation3 + $0x1c8] sm:$0xff]
        %v608 = vld [vmem:[#allocation3 + $0x1d0] sm:$0xff]
        %v609 = vld [vmem:[#allocation3 + $0x1d8] sm:$0xff]
        %v610 = vld [vmem:[#allocation3 + $0x1e0] sm:$0xff]
        %v611 = vld [vmem:[#allocation3 + $0x1e8] sm:$0xff]
        %v612 = vld [vmem:[#allocation3 + $0x1f0] sm:$0xff]
        %v613 = vld [vmem:[#allocation3 + $0x1f8] sm:$0xff]
        %v614 = vld [vmem:[#allocation3 + $0x200] sm:$0xff]
        %v615 = vld [vmem:[#allocation3 + $0x208] sm:$0xff]
        %v616 = vld [vmem:[#allocation3 + $0x210] sm:$0xff]
        %v617 = vld [vmem:[#allocation3 + $0x218] sm:$0xff]
        %v618 = vld [vmem:[#allocation3 + $0x220] sm:$0xff]
        %v619 = vld [vmem:[#allocation3 + $0x228] sm:$0xff]
        %v620 = vld [vmem:[#allocation3 + $0x230] sm:$0xff]
        %v621 = vld [vmem:[#allocation3 + $0x238] sm:$0xff]
        %v622 = vld [vmem:[#allocation3 + $0x240] sm:$0xff]
        %v623 = vld [vmem:[#allocation3 + $0x248] sm:$0xff]
        %v624 = vld [vmem:[#allocation3 + $0x250] sm:$0xff]
        %v625 = vld [vmem:[#allocation3 + $0x258] sm:$0xff]
        %v626 = vld [vmem:[#allocation3 + $0x260] sm:$0xff]
        %v627 = vld [vmem:[#allocation3 + $0x268] sm:$0xff]
        %v628 = vld [vmem:[#allocation3 + $0x270] sm:$0xff]
        %v629 = vld [vmem:[#allocation3 + $0x278] sm:$0xff]
        %v630 = vld [vmem:[#allocation3 + $0x280] sm:$0xff]
        %v631 = vld [vmem:[#allocation3 + $0x288] sm:$0xff]
        %v632 = vld [vmem:[#allocation3 + $0x290] sm:$0xff]
        %v633 = vld [vmem:[#allocation3 + $0x298] sm:$0xff]
        %v634 = vld [vmem:[#allocation3 + $0x2a0] sm:$0xff]
        %v635 = vld [vmem:[#allocation3 + $0x2a8] sm:$0xff]
        %v636 = vld [vmem:[#allocation3 + $0x2b0] sm:$0xff]
        %v637 = vld [vmem:[#allocation3 + $0x2b8] sm:$0xff]
        %v638 = vld [vmem:[#allocation3 + $0x2c0] sm:$0xff]
        %v639 = vld [vmem:[#allocation3 + $0x2c8] sm:$0xff]
        %v640 = vld [vmem:[#allocation3 + $0x2d0] sm:$0xff]
        %v641 = vld [vmem:[#allocation3 + $0x2d8] sm:$0xff]
        %v642 = vld [vmem:[#allocation3 + $0x2e0] sm:$0xff]
        %v643 = vld [vmem:[#allocation3 + $0x2e8] sm:$0xff]
        %v644 = vld [vmem:[#allocation3 + $0x2f0] sm:$0xff]
        %v645 = vld [vmem:[#allocation3 + $0x2f8] sm:$0xff]
        %v646 = vld [vmem:[#allocation3 + $0x300] sm:$0xff]
        %v647 = vld [vmem:[#allocation3 + $0x308] sm:$0xff]
        %v648 = vld [vmem:[#allocation3 + $0x310] sm:$0xff]
        %v649 = vld [vmem:[#allocation3 + $0x318] sm:$0xff]
        %v650 = vld [vmem:[#allocation3 + $0x320] sm:$0xff]
        %v651 = vld [vmem:[#allocation3 + $0x328] sm:$0xff]
        %v652 = vld [vmem:[#allocation3 + $0x330] sm:$0xff]
        %v653 = vld [vmem:[#allocation3 + $0x338] sm:$0xff]
        %v654 = vld [vmem:[#allocation3 + $0x340] sm:$0xff]
        %v655 = vld [vmem:[#allocation3 + $0x348] sm:$0xff]
        %v656 = vld [vmem:[#allocation3 + $0x350] sm:$0xff]
        %v657 = vld [vmem:[#allocation3 + $0x358] sm:$0xff]
        %v658 = vld [vmem:[#allocation3 + $0x360] sm:$0xff]
        %v659 = vld [vmem:[#allocation3 + $0x368] sm:$0xff]
        %v660 = vld [vmem:[#allocation3 + $0x370] sm:$0xff]
        %v661 = vld [vmem:[#allocation3 + $0x378] sm:$0xff]
        %v662 = vld [vmem:[#allocation3 + $0x380] sm:$0xff]
        %v663 = vld [vmem:[#allocation3 + $0x388] sm:$0xff]
        %v664 = vld [vmem:[#allocation3 + $0x390] sm:$0xff]
        %v665 = vld [vmem:[#allocation3 + $0x398] sm:$0xff]
        %v666 = vld [vmem:[#allocation3 + $0x3a0] sm:$0xff]
        %v667 = vld [vmem:[#allocation3 + $0x3a8] sm:$0xff]
        %v668 = vld [vmem:[#allocation3 + $0x3b0] sm:$0xff]
        %v669 = vld [vmem:[#allocation3 + $0x3b8] sm:$0xff]
        %v670 = vld [vmem:[#allocation3 + $0x3c0] sm:$0xff]
        %v671 = vld [vmem:[#allocation3 + $0x3c8] sm:$0xff]
        %v672 = vld [vmem:[#allocation3 + $0x3d0] sm:$0xff]
        %v673 = vld [vmem:[#allocation3 + $0x3d8] sm:$0xff]
        %v674 = vld [vmem:[#allocation3 + $0x3e0] sm:$0xff]
        %v675 = vld [vmem:[#allocation3 + $0x3e8] sm:$0xff]
        %v676 = vld [vmem:[#allocation3 + $0x3f0] sm:$0xff]
        %v677 = vld [vmem:[#allocation3 + $0x3f8] sm:$0xff]
        %v678 = vld [vmem:[%s244] sm:$0xff]
        %v679 = vld [vmem:[%s244 + $0x8] sm:$0xff]
        %v680 = vld [vmem:[%s244 + $0x10] sm:$0xff]
        %v681 = vld [vmem:[%s244 + $0x18] sm:$0xff]
        %v682 = vld [vmem:[%s244 + $0x20] sm:$0xff]
        %v683 = vld [vmem:[%s244 + $0x28] sm:$0xff]
        %v684 = vld [vmem:[%s244 + $0x30] sm:$0xff]
        %v685 = vld [vmem:[%s244 + $0x38] sm:$0xff]
        %v686 = vld [vmem:[%s244 + $0x40] sm:$0xff]
        %v687 = vld [vmem:[%s244 + $0x48] sm:$0xff]
        %v688 = vld [vmem:[%s244 + $0x50] sm:$0xff]
        %v689 = vld [vmem:[%s244 + $0x58] sm:$0xff]
        %v690 = vld [vmem:[%s244 + $0x60] sm:$0xff]
        %v691 = vld [vmem:[%s244 + $0x68] sm:$0xff]
        %v692 = vld [vmem:[%s244 + $0x70] sm:$0xff]
        %v693 = vld [vmem:[%s244 + $0x78] sm:$0xff]
        %v694 = vld [vmem:[%s244 + $0x80] sm:$0xff]
        %v695 = vld [vmem:[%s244 + $0x88] sm:$0xff]
        %v696 = vld [vmem:[%s244 + $0x90] sm:$0xff]
        %v697 = vld [vmem:[%s244 + $0x98] sm:$0xff]
        %v698 = vld [vmem:[%s244 + $0xa0] sm:$0xff]
        %v699 = vld [vmem:[%s244 + $0xa8] sm:$0xff]
        %v700 = vld [vmem:[%s244 + $0xb0] sm:$0xff]
        %v701 = vld [vmem:[%s244 + $0xb8] sm:$0xff]
        %v702 = vld [vmem:[%s244 + $0xc0] sm:$0xff]
        %v703 = vld [vmem:[%s244 + $0xc8] sm:$0xff]
        %v704 = vld [vmem:[%s244 + $0xd0] sm:$0xff]
        %v705 = vld [vmem:[%s244 + $0xd8] sm:$0xff]
        %v706 = vld [vmem:[%s244 + $0xe0] sm:$0xff]
        %v707 = vld [vmem:[%s244 + $0xe8] sm:$0xff]
        %v708 = vld [vmem:[%s244 + $0xf0] sm:$0xff]
        %v709 = vld [vmem:[%s244 + $0xf8] sm:$0xff]
        %v710 = vld [vmem:[%s244 + $0x100] sm:$0xff]
        %v711 = vld [vmem:[%s244 + $0x108] sm:$0xff]
        %v712 = vld [vmem:[%s244 + $0x110] sm:$0xff]
        %v713 = vld [vmem:[%s244 + $0x118] sm:$0xff]
        %v714 = vld [vmem:[%s244 + $0x120] sm:$0xff]
        %v715 = vld [vmem:[%s244 + $0x128] sm:$0xff]
        %v716 = vld [vmem:[%s244 + $0x130] sm:$0xff]
        %v717 = vld [vmem:[%s244 + $0x138] sm:$0xff]
        %v718 = vld [vmem:[%s244 + $0x140] sm:$0xff]
        %v719 = vld [vmem:[%s244 + $0x148] sm:$0xff]
        %v720 = vld [vmem:[%s244 + $0x150] sm:$0xff]
        %v721 = vld [vmem:[%s244 + $0x158] sm:$0xff]
        %v722 = vld [vmem:[%s244 + $0x160] sm:$0xff]
        %v723 = vld [vmem:[%s244 + $0x168] sm:$0xff]
        %v724 = vld [vmem:[%s244 + $0x170] sm:$0xff]
        %v725 = vld [vmem:[%s244 + $0x178] sm:$0xff]
        %v726 = vld [vmem:[%s244 + $0x180] sm:$0xff]
        %v727 = vld [vmem:[%s244 + $0x188] sm:$0xff]
        %v728 = vld [vmem:[%s244 + $0x190] sm:$0xff]
        %v729 = vld [vmem:[%s244 + $0x198] sm:$0xff]
        %v730 = vld [vmem:[%s244 + $0x1a0] sm:$0xff]
        %v731 = vld [vmem:[%s244 + $0x1a8] sm:$0xff]
        %v732 = vld [vmem:[%s244 + $0x1b0] sm:$0xff]
        %v733 = vld [vmem:[%s244 + $0x1b8] sm:$0xff]
        %v734 = vld [vmem:[%s244 + $0x1c0] sm:$0xff]
        %v735 = vld [vmem:[%s244 + $0x1c8] sm:$0xff]
        %v736 = vld [vmem:[%s244 + $0x1d0] sm:$0xff]
        %v737 = vld [vmem:[%s244 + $0x1d8] sm:$0xff]
        %v738 = vld [vmem:[%s244 + $0x1e0] sm:$0xff]
        %v739 = vld [vmem:[%s244 + $0x1e8] sm:$0xff]
        %v740 = vld [vmem:[%s244 + $0x1f0] sm:$0xff]
        %v741 = vld [vmem:[%s244 + $0x1f8] sm:$0xff]
        %v742 = vld [vmem:[%s244 + $0x200] sm:$0xff]
        %v743 = vld [vmem:[%s244 + $0x208] sm:$0xff]
        %v744 = vld [vmem:[%s244 + $0x210] sm:$0xff]
        %v745 = vld [vmem:[%s244 + $0x218] sm:$0xff]
        %v746 = vld [vmem:[%s244 + $0x220] sm:$0xff]
        %v747 = vld [vmem:[%s244 + $0x228] sm:$0xff]
        %v748 = vld [vmem:[%s244 + $0x230] sm:$0xff]
        %v749 = vld [vmem:[%s244 + $0x238] sm:$0xff]
        %v750 = vld [vmem:[%s244 + $0x240] sm:$0xff]
        %v751 = vld [vmem:[%s244 + $0x248] sm:$0xff]
        %v752 = vld [vmem:[%s244 + $0x250] sm:$0xff]
        %v753 = vld [vmem:[%s244 + $0x258] sm:$0xff]
        %v754 = vld [vmem:[%s244 + $0x260] sm:$0xff]
        %v755 = vld [vmem:[%s244 + $0x268] sm:$0xff]
        %v756 = vld [vmem:[%s244 + $0x270] sm:$0xff]
        %v757 = vld [vmem:[%s244 + $0x278] sm:$0xff]
        %v758 = vld [vmem:[%s244 + $0x280] sm:$0xff]
        %v759 = vld [vmem:[%s244 + $0x288] sm:$0xff]
        %v760 = vld [vmem:[%s244 + $0x290] sm:$0xff]
        %v761 = vld [vmem:[%s244 + $0x298] sm:$0xff]
        %v762 = vld [vmem:[%s244 + $0x2a0] sm:$0xff]
        %v763 = vld [vmem:[%s244 + $0x2a8] sm:$0xff]
        %v764 = vld [vmem:[%s244 + $0x2b0] sm:$0xff]
        %v765 = vld [vmem:[%s244 + $0x2b8] sm:$0xff]
        %v766 = vld [vmem:[%s244 + $0x2c0] sm:$0xff]
        %v767 = vld [vmem:[%s244 + $0x2c8] sm:$0xff]
        %v768 = vld [vmem:[%s244 + $0x2d0] sm:$0xff]
        %v769 = vld [vmem:[%s244 + $0x2d8] sm:$0xff]
        %v770 = vld [vmem:[%s244 + $0x2e0] sm:$0xff]
        %v771 = vld [vmem:[%s244 + $0x2e8] sm:$0xff]
        %v772 = vld [vmem:[%s244 + $0x2f0] sm:$0xff]
        %v773 = vld [vmem:[%s244 + $0x2f8] sm:$0xff]
        %v774 = vld [vmem:[%s244 + $0x300] sm:$0xff]
        %v775 = vld [vmem:[%s244 + $0x308] sm:$0xff]
        %v776 = vld [vmem:[%s244 + $0x310] sm:$0xff]
        %v777 = vld [vmem:[%s244 + $0x318] sm:$0xff]
        %v778 = vld [vmem:[%s244 + $0x320] sm:$0xff]
        %v779 = vld [vmem:[%s244 + $0x328] sm:$0xff]
        %v780 = vld [vmem:[%s244 + $0x330] sm:$0xff]
        %v781 = vld [vmem:[%s244 + $0x338] sm:$0xff]
        %v782 = vld [vmem:[%s244 + $0x340] sm:$0xff]
        %v783 = vld [vmem:[%s244 + $0x348] sm:$0xff]
        %v784 = vld [vmem:[%s244 + $0x350] sm:$0xff]
        %v785 = vld [vmem:[%s244 + $0x358] sm:$0xff]
        %v786 = vld [vmem:[%s244 + $0x360] sm:$0xff]
        %v787 = vld [vmem:[%s244 + $0x368] sm:$0xff]
        %v788 = vld [vmem:[%s244 + $0x370] sm:$0xff]
        %v789 = vld [vmem:[%s244 + $0x378] sm:$0xff]
        %v790 = vld [vmem:[%s244 + $0x380] sm:$0xff]
        %v791 = vld [vmem:[%s244 + $0x388] sm:$0xff]
        %v792 = vld [vmem:[%s244 + $0x390] sm:$0xff]
        %v793 = vld [vmem:[%s244 + $0x398] sm:$0xff]
        %v794 = vld [vmem:[%s244 + $0x3a0] sm:$0xff]
        %v795 = vld [vmem:[%s244 + $0x3a8] sm:$0xff]
        %v796 = vld [vmem:[%s244 + $0x3b0] sm:$0xff]
        %v797 = vld [vmem:[%s244 + $0x3b8] sm:$0xff]
        %v798 = vld [vmem:[%s244 + $0x3c0] sm:$0xff]
        %v799 = vld [vmem:[%s244 + $0x3c8] sm:$0xff]
        %v800 = vld [vmem:[%s244 + $0x3d0] sm:$0xff]
        %v801 = vld [vmem:[%s244 + $0x3d8] sm:$0xff]
        %v802 = vld [vmem:[%s244 + $0x3e0] sm:$0xff]
        %v803 = vld [vmem:[%s244 + $0x3e8] sm:$0xff]
        %v804 = vld [vmem:[%s244 + $0x3f0] sm:$0xff]
        %v805 = vld [vmem:[%s244 + $0x3f8] sm:$0xff]
        %v806 = vld [vmem:[%s244 + $0x400] sm:$0xff]
        %v807 = vld [vmem:[%s244 + $0x408] sm:$0xff]
        %v808 = vld [vmem:[%s244 + $0x410] sm:$0xff]
        %v809 = vld [vmem:[%s244 + $0x418] sm:$0xff]
        %v810 = vld [vmem:[%s244 + $0x420] sm:$0xff]
        %v811 = vld [vmem:[%s244 + $0x428] sm:$0xff]
        %v812 = vld [vmem:[%s244 + $0x430] sm:$0xff]
        %v813 = vld [vmem:[%s244 + $0x438] sm:$0xff]
        %v814 = vld [vmem:[%s244 + $0x440] sm:$0xff]
        %v815 = vld [vmem:[%s244 + $0x448] sm:$0xff]
        %v816 = vld [vmem:[%s244 + $0x450] sm:$0xff]
        %v817 = vld [vmem:[%s244 + $0x458] sm:$0xff]
        %v818 = vld [vmem:[%s244 + $0x460] sm:$0xff]
        %v819 = vld [vmem:[%s244 + $0x468] sm:$0xff]
        %v820 = vld [vmem:[%s244 + $0x470] sm:$0xff]
        %v821 = vld [vmem:[%s244 + $0x478] sm:$0xff]
        %v822 = vld [vmem:[%s244 + $0x480] sm:$0xff]
        %v823 = vld [vmem:[%s244 + $0x488] sm:$0xff]
        %v824 = vld [vmem:[%s244 + $0x490] sm:$0xff]
        %v825 = vld [vmem:[%s244 + $0x498] sm:$0xff]
        %v826 = vld [vmem:[%s244 + $0x4a0] sm:$0xff]
        %v827 = vld [vmem:[%s244 + $0x4a8] sm:$0xff]
        %v828 = vld [vmem:[%s244 + $0x4b0] sm:$0xff]
        %v829 = vld [vmem:[%s244 + $0x4b8] sm:$0xff]
        %v830 = vld [vmem:[%s244 + $0x4c0] sm:$0xff]
        %v831 = vld [vmem:[%s244 + $0x4c8] sm:$0xff]
        %v832 = vld [vmem:[%s244 + $0x4d0] sm:$0xff]
        %v833 = vld [vmem:[%s244 + $0x4d8] sm:$0xff]
        %v834 = vld [vmem:[%s244 + $0x4e0] sm:$0xff]
        %v835 = vld [vmem:[%s244 + $0x4e8] sm:$0xff]
        %v836 = vld [vmem:[%s244 + $0x4f0] sm:$0xff]
        %v837 = vld [vmem:[%s244 + $0x4f8] sm:$0xff]
        %v838 = vld [vmem:[%s244 + $0x500] sm:$0xff]
        %v839 = vld [vmem:[%s244 + $0x508] sm:$0xff]
        %v840 = vld [vmem:[%s244 + $0x510] sm:$0xff]
        %v841 = vld [vmem:[%s244 + $0x518] sm:$0xff]
        %v842 = vld [vmem:[%s244 + $0x520] sm:$0xff]
        %v843 = vld [vmem:[%s244 + $0x528] sm:$0xff]
        %v844 = vld [vmem:[%s244 + $0x530] sm:$0xff]
        %v845 = vld [vmem:[%s244 + $0x538] sm:$0xff]
        %v846 = vld [vmem:[%s244 + $0x540] sm:$0xff]
        %v847 = vld [vmem:[%s244 + $0x548] sm:$0xff]
        %v848 = vld [vmem:[%s244 + $0x550] sm:$0xff]
        %v849 = vld [vmem:[%s244 + $0x558] sm:$0xff]
        %v850 = vld [vmem:[%s244 + $0x560] sm:$0xff]
        %v851 = vld [vmem:[%s244 + $0x568] sm:$0xff]
        %v852 = vld [vmem:[%s244 + $0x570] sm:$0xff]
        %v853 = vld [vmem:[%s244 + $0x578] sm:$0xff]
        %v854 = vld [vmem:[%s244 + $0x580] sm:$0xff]
        %v855 = vld [vmem:[%s244 + $0x588] sm:$0xff]
        %v856 = vld [vmem:[%s244 + $0x590] sm:$0xff]
        %v857 = vld [vmem:[%s244 + $0x598] sm:$0xff]
        %v858 = vld [vmem:[%s244 + $0x5a0] sm:$0xff]
        %v859 = vld [vmem:[%s244 + $0x5a8] sm:$0xff]
        %v860 = vld [vmem:[%s244 + $0x5b0] sm:$0xff]
        %v861 = vld [vmem:[%s244 + $0x5b8] sm:$0xff]
        %v862 = vld [vmem:[%s244 + $0x5c0] sm:$0xff]
        %v863 = vld [vmem:[%s244 + $0x5c8] sm:$0xff]
        %v864 = vld [vmem:[%s244 + $0x5d0] sm:$0xff]
        %v865 = vld [vmem:[%s244 + $0x5d8] sm:$0xff]
        %v866 = vld [vmem:[%s244 + $0x5e0] sm:$0xff]
        %v867 = vld [vmem:[%s244 + $0x5e8] sm:$0xff]
        %v868 = vld [vmem:[%s244 + $0x5f0] sm:$0xff]
        %v869 = vld [vmem:[%s244 + $0x5f8] sm:$0xff]
        %v870 = vld [vmem:[%s244 + $0x600] sm:$0xff]
        %v871 = vld [vmem:[%s244 + $0x608] sm:$0xff]
        %v872 = vld [vmem:[%s244 + $0x610] sm:$0xff]
        %v873 = vld [vmem:[%s244 + $0x618] sm:$0xff]
        %v874 = vld [vmem:[%s244 + $0x620] sm:$0xff]
        %v875 = vld [vmem:[%s244 + $0x628] sm:$0xff]
        %v876 = vld [vmem:[%s244 + $0x630] sm:$0xff]
        %v877 = vld [vmem:[%s244 + $0x638] sm:$0xff]
        %v878 = vld [vmem:[%s244 + $0x640] sm:$0xff]
        %v879 = vld [vmem:[%s244 + $0x648] sm:$0xff]
        %v880 = vld [vmem:[%s244 + $0x650] sm:$0xff]
        %v881 = vld [vmem:[%s244 + $0x658] sm:$0xff]
        %v882 = vld [vmem:[%s244 + $0x660] sm:$0xff]
        %v883 = vld [vmem:[%s244 + $0x668] sm:$0xff]
        %v884 = vld [vmem:[%s244 + $0x670] sm:$0xff]
        %v885 = vld [vmem:[%s244 + $0x678] sm:$0xff]
        %v886 = vld [vmem:[%s244 + $0x680] sm:$0xff]
        %v887 = vld [vmem:[%s244 + $0x688] sm:$0xff]
        %v888 = vld [vmem:[%s244 + $0x690] sm:$0xff]
        %v889 = vld [vmem:[%s244 + $0x698] sm:$0xff]
        %v890 = vld [vmem:[%s244 + $0x6a0] sm:$0xff]
        %v891 = vld [vmem:[%s244 + $0x6a8] sm:$0xff]
        %v892 = vld [vmem:[%s244 + $0x6b0] sm:$0xff]
        %v893 = vld [vmem:[%s244 + $0x6b8] sm:$0xff]
        %v894 = vld [vmem:[%s244 + $0x6c0] sm:$0xff]
        %v895 = vld [vmem:[%s244 + $0x6c8] sm:$0xff]
        %v896 = vld [vmem:[%s244 + $0x6d0] sm:$0xff]
        %v897 = vld [vmem:[%s244 + $0x6d8] sm:$0xff]
        %v898 = vld [vmem:[%s244 + $0x6e0] sm:$0xff]
        %v899 = vld [vmem:[%s244 + $0x6e8] sm:$0xff]
        %v900 = vld [vmem:[%s244 + $0x6f0] sm:$0xff]
        %v901 = vld [vmem:[%s244 + $0x6f8] sm:$0xff]
        %v902 = vld [vmem:[%s244 + $0x700] sm:$0xff]
        %v903 = vld [vmem:[%s244 + $0x708] sm:$0xff]
        %v904 = vld [vmem:[%s244 + $0x710] sm:$0xff]
        %v905 = vld [vmem:[%s244 + $0x718] sm:$0xff]
        %v906 = vld [vmem:[%s244 + $0x720] sm:$0xff]
        %v907 = vld [vmem:[%s244 + $0x728] sm:$0xff]
        %v908 = vld [vmem:[%s244 + $0x730] sm:$0xff]
        %v909 = vld [vmem:[%s244 + $0x738] sm:$0xff]
        %v910 = vld [vmem:[%s244 + $0x740] sm:$0xff]
        %v911 = vld [vmem:[%s244 + $0x748] sm:$0xff]
        %v912 = vld [vmem:[%s244 + $0x750] sm:$0xff]
        %v913 = vld [vmem:[%s244 + $0x758] sm:$0xff]
        %v914 = vld [vmem:[%s244 + $0x760] sm:$0xff]
        %v915 = vld [vmem:[%s244 + $0x768] sm:$0xff]
        %v916 = vld [vmem:[%s244 + $0x770] sm:$0xff]
        %v917 = vld [vmem:[%s244 + $0x778] sm:$0xff]
        %v918 = vld [vmem:[%s244 + $0x780] sm:$0xff]
        %v919 = vld [vmem:[%s244 + $0x788] sm:$0xff]
        %v920 = vld [vmem:[%s244 + $0x790] sm:$0xff]
        %v921 = vld [vmem:[%s244 + $0x798] sm:$0xff]
        %v922 = vld [vmem:[%s244 + $0x7a0] sm:$0xff]
        %v923 = vld [vmem:[%s244 + $0x7a8] sm:$0xff]
        %v924 = vld [vmem:[%s244 + $0x7b0] sm:$0xff]
        %v925 = vld [vmem:[%s244 + $0x7b8] sm:$0xff]
        %v926 = vld [vmem:[%s244 + $0x7c0] sm:$0xff]
        %v927 = vld [vmem:[%s244 + $0x7c8] sm:$0xff]
        %v928 = vld [vmem:[%s244 + $0x7d0] sm:$0xff]
        %v929 = vld [vmem:[%s244 + $0x7d8] sm:$0xff]
        %v930 = vld [vmem:[%s244 + $0x7e0] sm:$0xff]
        %v931 = vld [vmem:[%s244 + $0x7e8] sm:$0xff]
        %v932 = vld [vmem:[%s244 + $0x7f0] sm:$0xff]
        %v933 = vld [vmem:[%s244 + $0x7f8] sm:$0xff]
        %934 = vmatpush.msra.mxu0 %v738
        %935 = vmatpush.msra.mxu0 %v734
        %936 = vmatpush.msra.mxu0 %v730
        %937 = vmatpush.msra.mxu0 %v726
        %938 = vmatpush.msra.mxu0 %v722
        %939 = vmatpush.msra.mxu0 %v718
        %940 = vmatpush.msra.mxu0 %v714
        %941 = vmatpush.msra.mxu0 %v710
        %942 = vmatpush.msra.mxu0 %v706
        %943 = vmatpush.msra.mxu0 %v702
        %944 = vmatpush.msra.mxu0 %v698
        %945 = vmatpush.msra.mxu0 %v694
        %946 = vmatpush.msra.mxu0 %v690
        %947 = vmatpush.msra.mxu0 %v686
        %948 = vmatpush.msra.mxu0 %v682
        %949 = vmatpush.msra.mxu0 %v678
        %950 = vmatmul.f32.gmra.mxu0 %v550
        %v951 = vpop.f32.mrf.mxu0
        %v952 = vadd.f32 0.0, %v951
        %953 = vmatmul.f32.gmra.mxu0 %v554
        %v954 = vpop.f32.mrf.mxu0
        %v955 = vadd.f32 0.0, %v954
        %956 = vmatmul.f32.gmra.mxu0 %v558
        %v957 = vpop.f32.mrf.mxu0
        %v958 = vadd.f32 0.0, %v957
        %959 = vmatmul.f32.gmra.mxu0 %v562
        %v960 = vpop.f32.mrf.mxu0
        %v961 = vadd.f32 0.0, %v960
        %962 = vmatmul.f32.gmra.mxu0 %v566
        %v963 = vpop.f32.mrf.mxu0
        %v964 = vadd.f32 0.0, %v963
        %965 = vmatmul.f32.gmra.mxu0 %v570
        %v966 = vpop.f32.mrf.mxu0
        %v967 = vadd.f32 0.0, %v966
        %968 = vmatmul.f32.gmra.mxu0 %v574
        %v969 = vpop.f32.mrf.mxu0
        %v970 = vadd.f32 0.0, %v969
        %971 = vmatmul.f32.gmra.mxu0 %v578
        %v972 = vpop.f32.mrf.mxu0
        %v973 = vadd.f32 0.0, %v972
        %974 = vmatmul.f32.gmra.mxu0 %v582
        %v975 = vpop.f32.mrf.mxu0
        %v976 = vadd.f32 0.0, %v975
        %977 = vmatmul.f32.gmra.mxu0 %v586
        %v978 = vpop.f32.mrf.mxu0
        %v979 = vadd.f32 0.0, %v978
        %980 = vmatmul.f32.gmra.mxu0 %v590
        %v981 = vpop.f32.mrf.mxu0
        %v982 = vadd.f32 0.0, %v981
        %983 = vmatmul.f32.gmra.mxu0 %v594
        %v984 = vpop.f32.mrf.mxu0
        %v985 = vadd.f32 0.0, %v984
        %986 = vmatmul.f32.gmra.mxu0 %v598
        %v987 = vpop.f32.mrf.mxu0
        %v988 = vadd.f32 0.0, %v987
        %989 = vmatmul.f32.gmra.mxu0 %v602
        %v990 = vpop.f32.mrf.mxu0
        %v991 = vadd.f32 0.0, %v990
        %992 = vmatmul.f32.gmra.mxu0 %v606
        %v993 = vpop.f32.mrf.mxu0
        %v994 = vadd.f32 0.0, %v993
        %995 = vmatmul.f32.gmra.mxu0 %v610
        %v996 = vpop.f32.mrf.mxu0
        %v997 = vadd.f32 0.0, %v996
        %998 = vmatmul.f32.gmra.mxu0 %v614
        %v999 = vpop.f32.mrf.mxu0
        %v1000 = vadd.f32 0.0, %v999
        %1001 = vmatmul.f32.gmra.mxu0 %v618
        %v1002 = vpop.f32.mrf.mxu0
        %v1003 = vadd.f32 0.0, %v1002
        %1004 = vmatmul.f32.gmra.mxu0 %v622
        %v1005 = vpop.f32.mrf.mxu0
        %v1006 = vadd.f32 0.0, %v1005
        %1007 = vmatmul.f32.gmra.mxu0 %v626
        %v1008 = vpop.f32.mrf.mxu0
        %v1009 = vadd.f32 0.0, %v1008
        %1010 = vmatmul.f32.gmra.mxu0 %v630
        %v1011 = vpop.f32.mrf.mxu0
        %v1012 = vadd.f32 0.0, %v1011
        %1013 = vmatmul.f32.gmra.mxu0 %v634
        %v1014 = vpop.f32.mrf.mxu0
        %v1015 = vadd.f32 0.0, %v1014
        %1016 = vmatmul.f32.gmra.mxu0 %v638
        %v1017 = vpop.f32.mrf.mxu0
        %v1018 = vadd.f32 0.0, %v1017
        %1019 = vmatmul.f32.gmra.mxu0 %v642
        %v1020 = vpop.f32.mrf.mxu0
        %v1021 = vadd.f32 0.0, %v1020
        %1022 = vmatmul.f32.gmra.mxu0 %v646
        %v1023 = vpop.f32.mrf.mxu0
        %v1024 = vadd.f32 0.0, %v1023
        %1025 = vmatmul.f32.gmra.mxu0 %v650
        %v1026 = vpop.f32.mrf.mxu0
        %v1027 = vadd.f32 0.0, %v1026
        %1028 = vmatmul.f32.gmra.mxu0 %v654
        %v1029 = vpop.f32.mrf.mxu0
        %v1030 = vadd.f32 0.0, %v1029
        %1031 = vmatmul.f32.gmra.mxu0 %v658
        %v1032 = vpop.f32.mrf.mxu0
        %v1033 = vadd.f32 0.0, %v1032
        %1034 = vmatmul.f32.gmra.mxu0 %v662
        %v1035 = vpop.f32.mrf.mxu0
        %v1036 = vadd.f32 0.0, %v1035
        %1037 = vmatmul.f32.gmra.mxu0 %v666
        %v1038 = vpop.f32.mrf.mxu0
        %v1039 = vadd.f32 0.0, %v1038
        %1040 = vmatmul.f32.gmra.mxu0 %v670
        %v1041 = vpop.f32.mrf.mxu0
        %v1042 = vadd.f32 0.0, %v1041
        %1043 = vmatmul.f32.gmra.mxu0 %v674
        %v1044 = vpop.f32.mrf.mxu0
        %v1045 = vadd.f32 0.0, %v1044
        %1046 = vdwg.mxu0
        %1047 = vmatpush.msra.mxu0 %v802
        %1048 = vmatpush.msra.mxu0 %v798
        %1049 = vmatpush.msra.mxu0 %v794
        %1050 = vmatpush.msra.mxu0 %v790
        %1051 = vmatpush.msra.mxu0 %v786
        %1052 = vmatpush.msra.mxu0 %v782
        %1053 = vmatpush.msra.mxu0 %v778
        %1054 = vmatpush.msra.mxu0 %v774
        %1055 = vmatpush.msra.mxu0 %v770
        %1056 = vmatpush.msra.mxu0 %v766
        %1057 = vmatpush.msra.mxu0 %v762
        %1058 = vmatpush.msra.mxu0 %v758
        %1059 = vmatpush.msra.mxu0 %v754
        %1060 = vmatpush.msra.mxu0 %v750
        %1061 = vmatpush.msra.mxu0 %v746
        %1062 = vmatpush.msra.mxu0 %v742
        %1063 = vmatmul.f32.gmra.mxu0 %v551
        %v1064 = vpop.f32.mrf.mxu0
        %v1065 = vadd.f32 %v952, %v1064
        %1066 = vmatmul.f32.gmra.mxu0 %v555
        %v1067 = vpop.f32.mrf.mxu0
        %v1068 = vadd.f32 %v955, %v1067
        %1069 = vmatmul.f32.gmra.mxu0 %v559
        %v1070 = vpop.f32.mrf.mxu0
        %v1071 = vadd.f32 %v958, %v1070
        %1072 = vmatmul.f32.gmra.mxu0 %v563
        %v1073 = vpop.f32.mrf.mxu0
        %v1074 = vadd.f32 %v961, %v1073
        %1075 = vmatmul.f32.gmra.mxu0 %v567
        %v1076 = vpop.f32.mrf.mxu0
        %v1077 = vadd.f32 %v964, %v1076
        %1078 = vmatmul.f32.gmra.mxu0 %v571
        %v1079 = vpop.f32.mrf.mxu0
        %v1080 = vadd.f32 %v967, %v1079
        %1081 = vmatmul.f32.gmra.mxu0 %v575
        %v1082 = vpop.f32.mrf.mxu0
        %v1083 = vadd.f32 %v970, %v1082
        %1084 = vmatmul.f32.gmra.mxu0 %v579
        %v1085 = vpop.f32.mrf.mxu0
        %v1086 = vadd.f32 %v973, %v1085
        %1087 = vmatmul.f32.gmra.mxu0 %v583
        %v1088 = vpop.f32.mrf.mxu0
        %v1089 = vadd.f32 %v976, %v1088
        %1090 = vmatmul.f32.gmra.mxu0 %v587
        %v1091 = vpop.f32.mrf.mxu0
        %v1092 = vadd.f32 %v979, %v1091
        %1093 = vmatmul.f32.gmra.mxu0 %v591
        %v1094 = vpop.f32.mrf.mxu0
        %v1095 = vadd.f32 %v982, %v1094
        %1096 = vmatmul.f32.gmra.mxu0 %v595
        %v1097 = vpop.f32.mrf.mxu0
        %v1098 = vadd.f32 %v985, %v1097
        %1099 = vmatmul.f32.gmra.mxu0 %v599
        %v1100 = vpop.f32.mrf.mxu0
        %v1101 = vadd.f32 %v988, %v1100
        %1102 = vmatmul.f32.gmra.mxu0 %v603
        %v1103 = vpop.f32.mrf.mxu0
        %v1104 = vadd.f32 %v991, %v1103
        %1105 = vmatmul.f32.gmra.mxu0 %v607
        %v1106 = vpop.f32.mrf.mxu0
        %v1107 = vadd.f32 %v994, %v1106
        %1108 = vmatmul.f32.gmra.mxu0 %v611
        %v1109 = vpop.f32.mrf.mxu0
        %v1110 = vadd.f32 %v997, %v1109
        %1111 = vmatmul.f32.gmra.mxu0 %v615
        %v1112 = vpop.f32.mrf.mxu0
        %v1113 = vadd.f32 %v1000, %v1112
        %1114 = vmatmul.f32.gmra.mxu0 %v619
        %v1115 = vpop.f32.mrf.mxu0
        %v1116 = vadd.f32 %v1003, %v1115
        %1117 = vmatmul.f32.gmra.mxu0 %v623
        %v1118 = vpop.f32.mrf.mxu0
        %v1119 = vadd.f32 %v1006, %v1118
        %1120 = vmatmul.f32.gmra.mxu0 %v627
        %v1121 = vpop.f32.mrf.mxu0
        %v1122 = vadd.f32 %v1009, %v1121
        %1123 = vmatmul.f32.gmra.mxu0 %v631
        %v1124 = vpop.f32.mrf.mxu0
        %v1125 = vadd.f32 %v1012, %v1124
        %1126 = vmatmul.f32.gmra.mxu0 %v635
        %v1127 = vpop.f32.mrf.mxu0
        %v1128 = vadd.f32 %v1015, %v1127
        %1129 = vmatmul.f32.gmra.mxu0 %v639
        %v1130 = vpop.f32.mrf.mxu0
        %v1131 = vadd.f32 %v1018, %v1130
        %1132 = vmatmul.f32.gmra.mxu0 %v643
        %v1133 = vpop.f32.mrf.mxu0
        %v1134 = vadd.f32 %v1021, %v1133
        %1135 = vmatmul.f32.gmra.mxu0 %v647
        %v1136 = vpop.f32.mrf.mxu0
        %v1137 = vadd.f32 %v1024, %v1136
        %1138 = vmatmul.f32.gmra.mxu0 %v651
        %v1139 = vpop.f32.mrf.mxu0
        %v1140 = vadd.f32 %v1027, %v1139
        %1141 = vmatmul.f32.gmra.mxu0 %v655
        %v1142 = vpop.f32.mrf.mxu0
        %v1143 = vadd.f32 %v1030, %v1142
        %1144 = vmatmul.f32.gmra.mxu0 %v659
        %v1145 = vpop.f32.mrf.mxu0
        %v1146 = vadd.f32 %v1033, %v1145
        %1147 = vmatmul.f32.gmra.mxu0 %v663
        %v1148 = vpop.f32.mrf.mxu0
        %v1149 = vadd.f32 %v1036, %v1148
        %1150 = vmatmul.f32.gmra.mxu0 %v667
        %v1151 = vpop.f32.mrf.mxu0
        %v1152 = vadd.f32 %v1039, %v1151
        %1153 = vmatmul.f32.gmra.mxu0 %v671
        %v1154 = vpop.f32.mrf.mxu0
        %v1155 = vadd.f32 %v1042, %v1154
        %1156 = vmatmul.f32.gmra.mxu0 %v675
        %v1157 = vpop.f32.mrf.mxu0
        %v1158 = vadd.f32 %v1045, %v1157
        %1159 = vdwg.mxu0
        %1160 = vmatpush.msra.mxu0 %v866
        %1161 = vmatpush.msra.mxu0 %v862
        %1162 = vmatpush.msra.mxu0 %v858
        %1163 = vmatpush.msra.mxu0 %v854
        %1164 = vmatpush.msra.mxu0 %v850
        %1165 = vmatpush.msra.mxu0 %v846
        %1166 = vmatpush.msra.mxu0 %v842
        %1167 = vmatpush.msra.mxu0 %v838
        %1168 = vmatpush.msra.mxu0 %v834
        %1169 = vmatpush.msra.mxu0 %v830
        %1170 = vmatpush.msra.mxu0 %v826
        %1171 = vmatpush.msra.mxu0 %v822
        %1172 = vmatpush.msra.mxu0 %v818
        %1173 = vmatpush.msra.mxu0 %v814
        %1174 = vmatpush.msra.mxu0 %v810
        %1175 = vmatpush.msra.mxu0 %v806
        %1176 = vmatmul.f32.gmra.mxu0 %v552
        %v1177 = vpop.f32.mrf.mxu0
        %v1178 = vadd.f32 %v1065, %v1177
        %1179 = vmatmul.f32.gmra.mxu0 %v556
        %v1180 = vpop.f32.mrf.mxu0
        %v1181 = vadd.f32 %v1068, %v1180
        %1182 = vmatmul.f32.gmra.mxu0 %v560
        %v1183 = vpop.f32.mrf.mxu0
        %v1184 = vadd.f32 %v1071, %v1183
        %1185 = vmatmul.f32.gmra.mxu0 %v564
        %v1186 = vpop.f32.mrf.mxu0
        %v1187 = vadd.f32 %v1074, %v1186
        %1188 = vmatmul.f32.gmra.mxu0 %v568
        %v1189 = vpop.f32.mrf.mxu0
        %v1190 = vadd.f32 %v1077, %v1189
        %1191 = vmatmul.f32.gmra.mxu0 %v572
        %v1192 = vpop.f32.mrf.mxu0
        %v1193 = vadd.f32 %v1080, %v1192
        %1194 = vmatmul.f32.gmra.mxu0 %v576
        %v1195 = vpop.f32.mrf.mxu0
        %v1196 = vadd.f32 %v1083, %v1195
        %1197 = vmatmul.f32.gmra.mxu0 %v580
        %v1198 = vpop.f32.mrf.mxu0
        %v1199 = vadd.f32 %v1086, %v1198
        %1200 = vmatmul.f32.gmra.mxu0 %v584
        %v1201 = vpop.f32.mrf.mxu0
        %v1202 = vadd.f32 %v1089, %v1201
        %1203 = vmatmul.f32.gmra.mxu0 %v588
        %v1204 = vpop.f32.mrf.mxu0
        %v1205 = vadd.f32 %v1092, %v1204
        %1206 = vmatmul.f32.gmra.mxu0 %v592
        %v1207 = vpop.f32.mrf.mxu0
        %v1208 = vadd.f32 %v1095, %v1207
        %1209 = vmatmul.f32.gmra.mxu0 %v596
        %v1210 = vpop.f32.mrf.mxu0
        %v1211 = vadd.f32 %v1098, %v1210
        %1212 = vmatmul.f32.gmra.mxu0 %v600
        %v1213 = vpop.f32.mrf.mxu0
        %v1214 = vadd.f32 %v1101, %v1213
        %1215 = vmatmul.f32.gmra.mxu0 %v604
        %v1216 = vpop.f32.mrf.mxu0
        %v1217 = vadd.f32 %v1104, %v1216
        %1218 = vmatmul.f32.gmra.mxu0 %v608
        %v1219 = vpop.f32.mrf.mxu0
        %v1220 = vadd.f32 %v1107, %v1219
        %1221 = vmatmul.f32.gmra.mxu0 %v612
        %v1222 = vpop.f32.mrf.mxu0
        %v1223 = vadd.f32 %v1110, %v1222
        %1224 = vmatmul.f32.gmra.mxu0 %v616
        %v1225 = vpop.f32.mrf.mxu0
        %v1226 = vadd.f32 %v1113, %v1225
        %1227 = vmatmul.f32.gmra.mxu0 %v620
        %v1228 = vpop.f32.mrf.mxu0
        %v1229 = vadd.f32 %v1116, %v1228
        %1230 = vmatmul.f32.gmra.mxu0 %v624
        %v1231 = vpop.f32.mrf.mxu0
        %v1232 = vadd.f32 %v1119, %v1231
        %1233 = vmatmul.f32.gmra.mxu0 %v628
        %v1234 = vpop.f32.mrf.mxu0
        %v1235 = vadd.f32 %v1122, %v1234
        %1236 = vmatmul.f32.gmra.mxu0 %v632
        %v1237 = vpop.f32.mrf.mxu0
        %v1238 = vadd.f32 %v1125, %v1237
        %1239 = vmatmul.f32.gmra.mxu0 %v636
        %v1240 = vpop.f32.mrf.mxu0
        %v1241 = vadd.f32 %v1128, %v1240
        %1242 = vmatmul.f32.gmra.mxu0 %v640
        %v1243 = vpop.f32.mrf.mxu0
        %v1244 = vadd.f32 %v1131, %v1243
        %1245 = vmatmul.f32.gmra.mxu0 %v644
        %v1246 = vpop.f32.mrf.mxu0
        %v1247 = vadd.f32 %v1134, %v1246
        %1248 = vmatmul.f32.gmra.mxu0 %v648
        %v1249 = vpop.f32.mrf.mxu0
        %v1250 = vadd.f32 %v1137, %v1249
        %1251 = vmatmul.f32.gmra.mxu0 %v652
        %v1252 = vpop.f32.mrf.mxu0
        %v1253 = vadd.f32 %v1140, %v1252
        %1254 = vmatmul.f32.gmra.mxu0 %v656
        %v1255 = vpop.f32.mrf.mxu0
        %v1256 = vadd.f32 %v1143, %v1255
        %1257 = vmatmul.f32.gmra.mxu0 %v660
        %v1258 = vpop.f32.mrf.mxu0
        %v1259 = vadd.f32 %v1146, %v1258
        %1260 = vmatmul.f32.gmra.mxu0 %v664
        %v1261 = vpop.f32.mrf.mxu0
        %v1262 = vadd.f32 %v1149, %v1261
        %1263 = vmatmul.f32.gmra.mxu0 %v668
        %v1264 = vpop.f32.mrf.mxu0
        %v1265 = vadd.f32 %v1152, %v1264
        %1266 = vmatmul.f32.gmra.mxu0 %v672
        %v1267 = vpop.f32.mrf.mxu0
        %v1268 = vadd.f32 %v1155, %v1267
        %1269 = vmatmul.f32.gmra.mxu0 %v676
        %v1270 = vpop.f32.mrf.mxu0
        %v1271 = vadd.f32 %v1158, %v1270
        %1272 = vdwg.mxu0
        %1273 = vmatpush.msra.mxu0 %v930
        %1274 = vmatpush.msra.mxu0 %v926
        %1275 = vmatpush.msra.mxu0 %v922
        %1276 = vmatpush.msra.mxu0 %v918
        %1277 = vmatpush.msra.mxu0 %v914
        %1278 = vmatpush.msra.mxu0 %v910
        %1279 = vmatpush.msra.mxu0 %v906
        %1280 = vmatpush.msra.mxu0 %v902
        %1281 = vmatpush.msra.mxu0 %v898
        %1282 = vmatpush.msra.mxu0 %v894
        %1283 = vmatpush.msra.mxu0 %v890
        %1284 = vmatpush.msra.mxu0 %v886
        %1285 = vmatpush.msra.mxu0 %v882
        %1286 = vmatpush.msra.mxu0 %v878
        %1287 = vmatpush.msra.mxu0 %v874
        %1288 = vmatpush.msra.mxu0 %v870
        %1289 = vmatmul.f32.gmra.mxu0 %v553
        %v1290 = vpop.f32.mrf.mxu0
        %v1291 = vadd.f32 %v1178, %v1290
        %1292 = vmatmul.f32.gmra.mxu0 %v557
        %v1293 = vpop.f32.mrf.mxu0
        %v1294 = vadd.f32 %v1181, %v1293
        %1295 = vmatmul.f32.gmra.mxu0 %v561
        %v1296 = vpop.f32.mrf.mxu0
        %v1297 = vadd.f32 %v1184, %v1296
        %1298 = vmatmul.f32.gmra.mxu0 %v565
        %v1299 = vpop.f32.mrf.mxu0
        %v1300 = vadd.f32 %v1187, %v1299
        %1301 = vmatmul.f32.gmra.mxu0 %v569
        %v1302 = vpop.f32.mrf.mxu0
        %v1303 = vadd.f32 %v1190, %v1302
        %1304 = vmatmul.f32.gmra.mxu0 %v573
        %v1305 = vpop.f32.mrf.mxu0
        %v1306 = vadd.f32 %v1193, %v1305
        %1307 = vmatmul.f32.gmra.mxu0 %v577
        %v1308 = vpop.f32.mrf.mxu0
        %v1309 = vadd.f32 %v1196, %v1308
        %1310 = vmatmul.f32.gmra.mxu0 %v581
        %v1311 = vpop.f32.mrf.mxu0
        %v1312 = vadd.f32 %v1199, %v1311
        %1313 = vmatmul.f32.gmra.mxu0 %v585
        %v1314 = vpop.f32.mrf.mxu0
        %v1315 = vadd.f32 %v1202, %v1314
        %1316 = vmatmul.f32.gmra.mxu0 %v589
        %v1317 = vpop.f32.mrf.mxu0
        %v1318 = vadd.f32 %v1205, %v1317
        %1319 = vmatmul.f32.gmra.mxu0 %v593
        %v1320 = vpop.f32.mrf.mxu0
        %v1321 = vadd.f32 %v1208, %v1320
        %1322 = vmatmul.f32.gmra.mxu0 %v597
        %v1323 = vpop.f32.mrf.mxu0
        %v1324 = vadd.f32 %v1211, %v1323
        %1325 = vmatmul.f32.gmra.mxu0 %v601
        %v1326 = vpop.f32.mrf.mxu0
        %v1327 = vadd.f32 %v1214, %v1326
        %1328 = vmatmul.f32.gmra.mxu0 %v605
        %v1329 = vpop.f32.mrf.mxu0
        %v1330 = vadd.f32 %v1217, %v1329
        %1331 = vmatmul.f32.gmra.mxu0 %v609
        %v1332 = vpop.f32.mrf.mxu0
        %v1333 = vadd.f32 %v1220, %v1332
        %1334 = vmatmul.f32.gmra.mxu0 %v613
        %v1335 = vpop.f32.mrf.mxu0
        %v1336 = vadd.f32 %v1223, %v1335
        %1337 = vmatmul.f32.gmra.mxu0 %v617
        %v1338 = vpop.f32.mrf.mxu0
        %v1339 = vadd.f32 %v1226, %v1338
        %1340 = vmatmul.f32.gmra.mxu0 %v621
        %v1341 = vpop.f32.mrf.mxu0
        %v1342 = vadd.f32 %v1229, %v1341
        %1343 = vmatmul.f32.gmra.mxu0 %v625
        %v1344 = vpop.f32.mrf.mxu0
        %v1345 = vadd.f32 %v1232, %v1344
        %1346 = vmatmul.f32.gmra.mxu0 %v629
        %v1347 = vpop.f32.mrf.mxu0
        %v1348 = vadd.f32 %v1235, %v1347
        %1349 = vmatmul.f32.gmra.mxu0 %v633
        %v1350 = vpop.f32.mrf.mxu0
        %v1351 = vadd.f32 %v1238, %v1350
        %1352 = vmatmul.f32.gmra.mxu0 %v637
        %v1353 = vpop.f32.mrf.mxu0
        %v1354 = vadd.f32 %v1241, %v1353
        %1355 = vmatmul.f32.gmra.mxu0 %v641
        %v1356 = vpop.f32.mrf.mxu0
        %v1357 = vadd.f32 %v1244, %v1356
        %1358 = vmatmul.f32.gmra.mxu0 %v645
        %v1359 = vpop.f32.mrf.mxu0
        %v1360 = vadd.f32 %v1247, %v1359
        %1361 = vmatmul.f32.gmra.mxu0 %v649
        %v1362 = vpop.f32.mrf.mxu0
        %v1363 = vadd.f32 %v1250, %v1362
        %1364 = vmatmul.f32.gmra.mxu0 %v653
        %v1365 = vpop.f32.mrf.mxu0
        %v1366 = vadd.f32 %v1253, %v1365
        %1367 = vmatmul.f32.gmra.mxu0 %v657
        %v1368 = vpop.f32.mrf.mxu0
        %v1369 = vadd.f32 %v1256, %v1368
        %1370 = vmatmul.f32.gmra.mxu0 %v661
        %v1371 = vpop.f32.mrf.mxu0
        %v1372 = vadd.f32 %v1259, %v1371
        %1373 = vmatmul.f32.gmra.mxu0 %v665
        %v1374 = vpop.f32.mrf.mxu0
        %v1375 = vadd.f32 %v1262, %v1374
        %1376 = vmatmul.f32.gmra.mxu0 %v669
        %v1377 = vpop.f32.mrf.mxu0
        %v1378 = vadd.f32 %v1265, %v1377
        %1379 = vmatmul.f32.gmra.mxu0 %v673
        %v1380 = vpop.f32.mrf.mxu0
        %v1381 = vadd.f32 %v1268, %v1380
        %1382 = vmatmul.f32.gmra.mxu0 %v677
        %v1383 = vpop.f32.mrf.mxu0
        %v1384 = vadd.f32 %v1271, %v1383
        %1385 = vdwg.mxu0
        %1386 = vmatpush.msra.mxu0 %v739
        %1387 = vmatpush.msra.mxu0 %v735
        %1388 = vmatpush.msra.mxu0 %v731
        %1389 = vmatpush.msra.mxu0 %v727
        %1390 = vmatpush.msra.mxu0 %v723
        %1391 = vmatpush.msra.mxu0 %v719
        %1392 = vmatpush.msra.mxu0 %v715
        %1393 = vmatpush.msra.mxu0 %v711
        %1394 = vmatpush.msra.mxu0 %v707
        %1395 = vmatpush.msra.mxu0 %v703
        %1396 = vmatpush.msra.mxu0 %v699
        %1397 = vmatpush.msra.mxu0 %v695
        %1398 = vmatpush.msra.mxu0 %v691
        %1399 = vmatpush.msra.mxu0 %v687
        %1400 = vmatpush.msra.mxu0 %v683
        %1401 = vmatpush.msra.mxu0 %v679
        %1402 = vmatmul.f32.gmra.mxu0 %v550
        %v1403 = vpop.f32.mrf.mxu0
        %v1404 = vadd.f32 0.0, %v1403
        %1405 = vmatmul.f32.gmra.mxu0 %v554
        %v1406 = vpop.f32.mrf.mxu0
        %v1407 = vadd.f32 0.0, %v1406
        %1408 = vmatmul.f32.gmra.mxu0 %v558
        %v1409 = vpop.f32.mrf.mxu0
        %v1410 = vadd.f32 0.0, %v1409
        %1411 = vmatmul.f32.gmra.mxu0 %v562
        %v1412 = vpop.f32.mrf.mxu0
        %v1413 = vadd.f32 0.0, %v1412
        %1414 = vmatmul.f32.gmra.mxu0 %v566
        %v1415 = vpop.f32.mrf.mxu0
        %v1416 = vadd.f32 0.0, %v1415
        %1417 = vmatmul.f32.gmra.mxu0 %v570
        %v1418 = vpop.f32.mrf.mxu0
        %v1419 = vadd.f32 0.0, %v1418
        %1420 = vmatmul.f32.gmra.mxu0 %v574
        %v1421 = vpop.f32.mrf.mxu0
        %v1422 = vadd.f32 0.0, %v1421
        %1423 = vmatmul.f32.gmra.mxu0 %v578
        %v1424 = vpop.f32.mrf.mxu0
        %v1425 = vadd.f32 0.0, %v1424
        %1426 = vmatmul.f32.gmra.mxu0 %v582
        %v1427 = vpop.f32.mrf.mxu0
        %v1428 = vadd.f32 0.0, %v1427
        %1429 = vmatmul.f32.gmra.mxu0 %v586
        %v1430 = vpop.f32.mrf.mxu0
        %v1431 = vadd.f32 0.0, %v1430
        %1432 = vmatmul.f32.gmra.mxu0 %v590
        %v1433 = vpop.f32.mrf.mxu0
        %v1434 = vadd.f32 0.0, %v1433
        %1435 = vmatmul.f32.gmra.mxu0 %v594
        %v1436 = vpop.f32.mrf.mxu0
        %v1437 = vadd.f32 0.0, %v1436
        %1438 = vmatmul.f32.gmra.mxu0 %v598
        %v1439 = vpop.f32.mrf.mxu0
        %v1440 = vadd.f32 0.0, %v1439
        %1441 = vmatmul.f32.gmra.mxu0 %v602
        %v1442 = vpop.f32.mrf.mxu0
        %v1443 = vadd.f32 0.0, %v1442
        %1444 = vmatmul.f32.gmra.mxu0 %v606
        %v1445 = vpop.f32.mrf.mxu0
        %v1446 = vadd.f32 0.0, %v1445
        %1447 = vmatmul.f32.gmra.mxu0 %v610
        %v1448 = vpop.f32.mrf.mxu0
        %v1449 = vadd.f32 0.0, %v1448
        %1450 = vmatmul.f32.gmra.mxu0 %v614
        %v1451 = vpop.f32.mrf.mxu0
        %v1452 = vadd.f32 0.0, %v1451
        %1453 = vmatmul.f32.gmra.mxu0 %v618
        %v1454 = vpop.f32.mrf.mxu0
        %v1455 = vadd.f32 0.0, %v1454
        %1456 = vmatmul.f32.gmra.mxu0 %v622
        %v1457 = vpop.f32.mrf.mxu0
        %v1458 = vadd.f32 0.0, %v1457
        %1459 = vmatmul.f32.gmra.mxu0 %v626
        %v1460 = vpop.f32.mrf.mxu0
        %v1461 = vadd.f32 0.0, %v1460
        %1462 = vmatmul.f32.gmra.mxu0 %v630
        %v1463 = vpop.f32.mrf.mxu0
        %v1464 = vadd.f32 0.0, %v1463
        %1465 = vmatmul.f32.gmra.mxu0 %v634
        %v1466 = vpop.f32.mrf.mxu0
        %v1467 = vadd.f32 0.0, %v1466
        %1468 = vmatmul.f32.gmra.mxu0 %v638
        %v1469 = vpop.f32.mrf.mxu0
        %v1470 = vadd.f32 0.0, %v1469
        %1471 = vmatmul.f32.gmra.mxu0 %v642
        %v1472 = vpop.f32.mrf.mxu0
        %v1473 = vadd.f32 0.0, %v1472
        %1474 = vmatmul.f32.gmra.mxu0 %v646
        %v1475 = vpop.f32.mrf.mxu0
        %v1476 = vadd.f32 0.0, %v1475
        %1477 = vmatmul.f32.gmra.mxu0 %v650
        %v1478 = vpop.f32.mrf.mxu0
        %v1479 = vadd.f32 0.0, %v1478
        %1480 = vmatmul.f32.gmra.mxu0 %v654
        %v1481 = vpop.f32.mrf.mxu0
        %v1482 = vadd.f32 0.0, %v1481
        %1483 = vmatmul.f32.gmra.mxu0 %v658
        %v1484 = vpop.f32.mrf.mxu0
        %v1485 = vadd.f32 0.0, %v1484
        %1486 = vmatmul.f32.gmra.mxu0 %v662
        %v1487 = vpop.f32.mrf.mxu0
        %v1488 = vadd.f32 0.0, %v1487
        %1489 = vmatmul.f32.gmra.mxu0 %v666
        %v1490 = vpop.f32.mrf.mxu0
        %v1491 = vadd.f32 0.0, %v1490
        %1492 = vmatmul.f32.gmra.mxu0 %v670
        %v1493 = vpop.f32.mrf.mxu0
        %v1494 = vadd.f32 0.0, %v1493
        %1495 = vmatmul.f32.gmra.mxu0 %v674
        %v1496 = vpop.f32.mrf.mxu0
        %v1497 = vadd.f32 0.0, %v1496
        %1498 = vdwg.mxu0
        %1499 = vmatpush.msra.mxu0 %v803
        %1500 = vmatpush.msra.mxu0 %v799
        %1501 = vmatpush.msra.mxu0 %v795
        %1502 = vmatpush.msra.mxu0 %v791
        %1503 = vmatpush.msra.mxu0 %v787
        %1504 = vmatpush.msra.mxu0 %v783
        %1505 = vmatpush.msra.mxu0 %v779
        %1506 = vmatpush.msra.mxu0 %v775
        %1507 = vmatpush.msra.mxu0 %v771
        %1508 = vmatpush.msra.mxu0 %v767
        %1509 = vmatpush.msra.mxu0 %v763
        %1510 = vmatpush.msra.mxu0 %v759
        %1511 = vmatpush.msra.mxu0 %v755
        %1512 = vmatpush.msra.mxu0 %v751
        %1513 = vmatpush.msra.mxu0 %v747
        %1514 = vmatpush.msra.mxu0 %v743
        %1515 = vmatmul.f32.gmra.mxu0 %v551
        %v1516 = vpop.f32.mrf.mxu0
        %v1517 = vadd.f32 %v1404, %v1516
        %1518 = vmatmul.f32.gmra.mxu0 %v555
        %v1519 = vpop.f32.mrf.mxu0
        %v1520 = vadd.f32 %v1407, %v1519
        %1521 = vmatmul.f32.gmra.mxu0 %v559
        %v1522 = vpop.f32.mrf.mxu0
        %v1523 = vadd.f32 %v1410, %v1522
        %1524 = vmatmul.f32.gmra.mxu0 %v563
        %v1525 = vpop.f32.mrf.mxu0
        %v1526 = vadd.f32 %v1413, %v1525
        %1527 = vmatmul.f32.gmra.mxu0 %v567
        %v1528 = vpop.f32.mrf.mxu0
        %v1529 = vadd.f32 %v1416, %v1528
        %1530 = vmatmul.f32.gmra.mxu0 %v571
        %v1531 = vpop.f32.mrf.mxu0
        %v1532 = vadd.f32 %v1419, %v1531
        %1533 = vmatmul.f32.gmra.mxu0 %v575
        %v1534 = vpop.f32.mrf.mxu0
        %v1535 = vadd.f32 %v1422, %v1534
        %1536 = vmatmul.f32.gmra.mxu0 %v579
        %v1537 = vpop.f32.mrf.mxu0
        %v1538 = vadd.f32 %v1425, %v1537
        %1539 = vmatmul.f32.gmra.mxu0 %v583
        %v1540 = vpop.f32.mrf.mxu0
        %v1541 = vadd.f32 %v1428, %v1540
        %1542 = vmatmul.f32.gmra.mxu0 %v587
        %v1543 = vpop.f32.mrf.mxu0
        %v1544 = vadd.f32 %v1431, %v1543
        %1545 = vmatmul.f32.gmra.mxu0 %v591
        %v1546 = vpop.f32.mrf.mxu0
        %v1547 = vadd.f32 %v1434, %v1546
        %1548 = vmatmul.f32.gmra.mxu0 %v595
        %v1549 = vpop.f32.mrf.mxu0
        %v1550 = vadd.f32 %v1437, %v1549
        %1551 = vmatmul.f32.gmra.mxu0 %v599
        %v1552 = vpop.f32.mrf.mxu0
        %v1553 = vadd.f32 %v1440, %v1552
        %1554 = vmatmul.f32.gmra.mxu0 %v603
        %v1555 = vpop.f32.mrf.mxu0
        %v1556 = vadd.f32 %v1443, %v1555
        %1557 = vmatmul.f32.gmra.mxu0 %v607
        %v1558 = vpop.f32.mrf.mxu0
        %v1559 = vadd.f32 %v1446, %v1558
        %1560 = vmatmul.f32.gmra.mxu0 %v611
        %v1561 = vpop.f32.mrf.mxu0
        %v1562 = vadd.f32 %v1449, %v1561
        %1563 = vmatmul.f32.gmra.mxu0 %v615
        %v1564 = vpop.f32.mrf.mxu0
        %v1565 = vadd.f32 %v1452, %v1564
        %1566 = vmatmul.f32.gmra.mxu0 %v619
        %v1567 = vpop.f32.mrf.mxu0
        %v1568 = vadd.f32 %v1455, %v1567
        %1569 = vmatmul.f32.gmra.mxu0 %v623
        %v1570 = vpop.f32.mrf.mxu0
        %v1571 = vadd.f32 %v1458, %v1570
        %1572 = vmatmul.f32.gmra.mxu0 %v627
        %v1573 = vpop.f32.mrf.mxu0
        %v1574 = vadd.f32 %v1461, %v1573
        %1575 = vmatmul.f32.gmra.mxu0 %v631
        %v1576 = vpop.f32.mrf.mxu0
        %v1577 = vadd.f32 %v1464, %v1576
        %1578 = vmatmul.f32.gmra.mxu0 %v635
        %v1579 = vpop.f32.mrf.mxu0
        %v1580 = vadd.f32 %v1467, %v1579
        %1581 = vmatmul.f32.gmra.mxu0 %v639
        %v1582 = vpop.f32.mrf.mxu0
        %v1583 = vadd.f32 %v1470, %v1582
        %1584 = vmatmul.f32.gmra.mxu0 %v643
        %v1585 = vpop.f32.mrf.mxu0
        %v1586 = vadd.f32 %v1473, %v1585
        %1587 = vmatmul.f32.gmra.mxu0 %v647
        %v1588 = vpop.f32.mrf.mxu0
        %v1589 = vadd.f32 %v1476, %v1588
        %1590 = vmatmul.f32.gmra.mxu0 %v651
        %v1591 = vpop.f32.mrf.mxu0
        %v1592 = vadd.f32 %v1479, %v1591
        %1593 = vmatmul.f32.gmra.mxu0 %v655
        %v1594 = vpop.f32.mrf.mxu0
        %v1595 = vadd.f32 %v1482, %v1594
        %1596 = vmatmul.f32.gmra.mxu0 %v659
        %v1597 = vpop.f32.mrf.mxu0
        %v1598 = vadd.f32 %v1485, %v1597
        %1599 = vmatmul.f32.gmra.mxu0 %v663
        %v1600 = vpop.f32.mrf.mxu0
        %v1601 = vadd.f32 %v1488, %v1600
        %1602 = vmatmul.f32.gmra.mxu0 %v667
        %v1603 = vpop.f32.mrf.mxu0
        %v1604 = vadd.f32 %v1491, %v1603
        %1605 = vmatmul.f32.gmra.mxu0 %v671
        %v1606 = vpop.f32.mrf.mxu0
        %v1607 = vadd.f32 %v1494, %v1606
        %1608 = vmatmul.f32.gmra.mxu0 %v675
        %v1609 = vpop.f32.mrf.mxu0
        %v1610 = vadd.f32 %v1497, %v1609
        %1611 = vdwg.mxu0
        %1612 = vmatpush.msra.mxu0 %v867
        %1613 = vmatpush.msra.mxu0 %v863
        %1614 = vmatpush.msra.mxu0 %v859
        %1615 = vmatpush.msra.mxu0 %v855
        %1616 = vmatpush.msra.mxu0 %v851
        %1617 = vmatpush.msra.mxu0 %v847
        %1618 = vmatpush.msra.mxu0 %v843
        %1619 = vmatpush.msra.mxu0 %v839
        %1620 = vmatpush.msra.mxu0 %v835
        %1621 = vmatpush.msra.mxu0 %v831
        %1622 = vmatpush.msra.mxu0 %v827
        %1623 = vmatpush.msra.mxu0 %v823
        %1624 = vmatpush.msra.mxu0 %v819
        %1625 = vmatpush.msra.mxu0 %v815
        %1626 = vmatpush.msra.mxu0 %v811
        %1627 = vmatpush.msra.mxu0 %v807
        %1628 = vmatmul.f32.gmra.mxu0 %v552
        %v1629 = vpop.f32.mrf.mxu0
        %v1630 = vadd.f32 %v1517, %v1629
        %1631 = vmatmul.f32.gmra.mxu0 %v556
        %v1632 = vpop.f32.mrf.mxu0
        %v1633 = vadd.f32 %v1520, %v1632
        %1634 = vmatmul.f32.gmra.mxu0 %v560
        %v1635 = vpop.f32.mrf.mxu0
        %v1636 = vadd.f32 %v1523, %v1635
        %1637 = vmatmul.f32.gmra.mxu0 %v564
        %v1638 = vpop.f32.mrf.mxu0
        %v1639 = vadd.f32 %v1526, %v1638
        %1640 = vmatmul.f32.gmra.mxu0 %v568
        %v1641 = vpop.f32.mrf.mxu0
        %v1642 = vadd.f32 %v1529, %v1641
        %1643 = vmatmul.f32.gmra.mxu0 %v572
        %v1644 = vpop.f32.mrf.mxu0
        %v1645 = vadd.f32 %v1532, %v1644
        %1646 = vmatmul.f32.gmra.mxu0 %v576
        %v1647 = vpop.f32.mrf.mxu0
        %v1648 = vadd.f32 %v1535, %v1647
        %1649 = vmatmul.f32.gmra.mxu0 %v580
        %v1650 = vpop.f32.mrf.mxu0
        %v1651 = vadd.f32 %v1538, %v1650
        %1652 = vmatmul.f32.gmra.mxu0 %v584
        %v1653 = vpop.f32.mrf.mxu0
        %v1654 = vadd.f32 %v1541, %v1653
        %1655 = vmatmul.f32.gmra.mxu0 %v588
        %v1656 = vpop.f32.mrf.mxu0
        %v1657 = vadd.f32 %v1544, %v1656
        %1658 = vmatmul.f32.gmra.mxu0 %v592
        %v1659 = vpop.f32.mrf.mxu0
        %v1660 = vadd.f32 %v1547, %v1659
        %1661 = vmatmul.f32.gmra.mxu0 %v596
        %v1662 = vpop.f32.mrf.mxu0
        %v1663 = vadd.f32 %v1550, %v1662
        %1664 = vmatmul.f32.gmra.mxu0 %v600
        %v1665 = vpop.f32.mrf.mxu0
        %v1666 = vadd.f32 %v1553, %v1665
        %1667 = vmatmul.f32.gmra.mxu0 %v604
        %v1668 = vpop.f32.mrf.mxu0
        %v1669 = vadd.f32 %v1556, %v1668
        %1670 = vmatmul.f32.gmra.mxu0 %v608
        %v1671 = vpop.f32.mrf.mxu0
        %v1672 = vadd.f32 %v1559, %v1671
        %1673 = vmatmul.f32.gmra.mxu0 %v612
        %v1674 = vpop.f32.mrf.mxu0
        %v1675 = vadd.f32 %v1562, %v1674
        %1676 = vmatmul.f32.gmra.mxu0 %v616
        %v1677 = vpop.f32.mrf.mxu0
        %v1678 = vadd.f32 %v1565, %v1677
        %1679 = vmatmul.f32.gmra.mxu0 %v620
        %v1680 = vpop.f32.mrf.mxu0
        %v1681 = vadd.f32 %v1568, %v1680
        %1682 = vmatmul.f32.gmra.mxu0 %v624
        %v1683 = vpop.f32.mrf.mxu0
        %v1684 = vadd.f32 %v1571, %v1683
        %1685 = vmatmul.f32.gmra.mxu0 %v628
        %v1686 = vpop.f32.mrf.mxu0
        %v1687 = vadd.f32 %v1574, %v1686
        %1688 = vmatmul.f32.gmra.mxu0 %v632
        %v1689 = vpop.f32.mrf.mxu0
        %v1690 = vadd.f32 %v1577, %v1689
        %1691 = vmatmul.f32.gmra.mxu0 %v636
        %v1692 = vpop.f32.mrf.mxu0
        %v1693 = vadd.f32 %v1580, %v1692
        %1694 = vmatmul.f32.gmra.mxu0 %v640
        %v1695 = vpop.f32.mrf.mxu0
        %v1696 = vadd.f32 %v1583, %v1695
        %1697 = vmatmul.f32.gmra.mxu0 %v644
        %v1698 = vpop.f32.mrf.mxu0
        %v1699 = vadd.f32 %v1586, %v1698
        %1700 = vmatmul.f32.gmra.mxu0 %v648
        %v1701 = vpop.f32.mrf.mxu0
        %v1702 = vadd.f32 %v1589, %v1701
        %1703 = vmatmul.f32.gmra.mxu0 %v652
        %v1704 = vpop.f32.mrf.mxu0
        %v1705 = vadd.f32 %v1592, %v1704
        %1706 = vmatmul.f32.gmra.mxu0 %v656
        %v1707 = vpop.f32.mrf.mxu0
        %v1708 = vadd.f32 %v1595, %v1707
        %1709 = vmatmul.f32.gmra.mxu0 %v660
        %v1710 = vpop.f32.mrf.mxu0
        %v1711 = vadd.f32 %v1598, %v1710
        %1712 = vmatmul.f32.gmra.mxu0 %v664
        %v1713 = vpop.f32.mrf.mxu0
        %v1714 = vadd.f32 %v1601, %v1713
        %1715 = vmatmul.f32.gmra.mxu0 %v668
        %v1716 = vpop.f32.mrf.mxu0
        %v1717 = vadd.f32 %v1604, %v1716
        %1718 = vmatmul.f32.gmra.mxu0 %v672
        %v1719 = vpop.f32.mrf.mxu0
        %v1720 = vadd.f32 %v1607, %v1719
        %1721 = vmatmul.f32.gmra.mxu0 %v676
        %v1722 = vpop.f32.mrf.mxu0
        %v1723 = vadd.f32 %v1610, %v1722
        %1724 = vdwg.mxu0
        %1725 = vmatpush.msra.mxu0 %v931
        %1726 = vmatpush.msra.mxu0 %v927
        %1727 = vmatpush.msra.mxu0 %v923
        %1728 = vmatpush.msra.mxu0 %v919
        %1729 = vmatpush.msra.mxu0 %v915
        %1730 = vmatpush.msra.mxu0 %v911
        %1731 = vmatpush.msra.mxu0 %v907
        %1732 = vmatpush.msra.mxu0 %v903
        %1733 = vmatpush.msra.mxu0 %v899
        %1734 = vmatpush.msra.mxu0 %v895
        %1735 = vmatpush.msra.mxu0 %v891
        %1736 = vmatpush.msra.mxu0 %v887
        %1737 = vmatpush.msra.mxu0 %v883
        %1738 = vmatpush.msra.mxu0 %v879
        %1739 = vmatpush.msra.mxu0 %v875
        %1740 = vmatpush.msra.mxu0 %v871
        %1741 = vmatmul.f32.gmra.mxu0 %v553
        %v1742 = vpop.f32.mrf.mxu0
        %v1743 = vadd.f32 %v1630, %v1742
        %1744 = vmatmul.f32.gmra.mxu0 %v557
        %v1745 = vpop.f32.mrf.mxu0
        %v1746 = vadd.f32 %v1633, %v1745
        %1747 = vmatmul.f32.gmra.mxu0 %v561
        %v1748 = vpop.f32.mrf.mxu0
        %v1749 = vadd.f32 %v1636, %v1748
        %1750 = vmatmul.f32.gmra.mxu0 %v565
        %v1751 = vpop.f32.mrf.mxu0
        %v1752 = vadd.f32 %v1639, %v1751
        %1753 = vmatmul.f32.gmra.mxu0 %v569
        %v1754 = vpop.f32.mrf.mxu0
        %v1755 = vadd.f32 %v1642, %v1754
        %1756 = vmatmul.f32.gmra.mxu0 %v573
        %v1757 = vpop.f32.mrf.mxu0
        %v1758 = vadd.f32 %v1645, %v1757
        %1759 = vmatmul.f32.gmra.mxu0 %v577
        %v1760 = vpop.f32.mrf.mxu0
        %v1761 = vadd.f32 %v1648, %v1760
        %1762 = vmatmul.f32.gmra.mxu0 %v581
        %v1763 = vpop.f32.mrf.mxu0
        %v1764 = vadd.f32 %v1651, %v1763
        %1765 = vmatmul.f32.gmra.mxu0 %v585
        %v1766 = vpop.f32.mrf.mxu0
        %v1767 = vadd.f32 %v1654, %v1766
        %1768 = vmatmul.f32.gmra.mxu0 %v589
        %v1769 = vpop.f32.mrf.mxu0
        %v1770 = vadd.f32 %v1657, %v1769
        %1771 = vmatmul.f32.gmra.mxu0 %v593
        %v1772 = vpop.f32.mrf.mxu0
        %v1773 = vadd.f32 %v1660, %v1772
        %1774 = vmatmul.f32.gmra.mxu0 %v597
        %v1775 = vpop.f32.mrf.mxu0
        %v1776 = vadd.f32 %v1663, %v1775
        %1777 = vmatmul.f32.gmra.mxu0 %v601
        %v1778 = vpop.f32.mrf.mxu0
        %v1779 = vadd.f32 %v1666, %v1778
        %1780 = vmatmul.f32.gmra.mxu0 %v605
        %v1781 = vpop.f32.mrf.mxu0
        %v1782 = vadd.f32 %v1669, %v1781
        %1783 = vmatmul.f32.gmra.mxu0 %v609
        %v1784 = vpop.f32.mrf.mxu0
        %v1785 = vadd.f32 %v1672, %v1784
        %1786 = vmatmul.f32.gmra.mxu0 %v613
        %v1787 = vpop.f32.mrf.mxu0
        %v1788 = vadd.f32 %v1675, %v1787
        %1789 = vmatmul.f32.gmra.mxu0 %v617
        %v1790 = vpop.f32.mrf.mxu0
        %v1791 = vadd.f32 %v1678, %v1790
        %1792 = vmatmul.f32.gmra.mxu0 %v621
        %v1793 = vpop.f32.mrf.mxu0
        %v1794 = vadd.f32 %v1681, %v1793
        %1795 = vmatmul.f32.gmra.mxu0 %v625
        %v1796 = vpop.f32.mrf.mxu0
        %v1797 = vadd.f32 %v1684, %v1796
        %1798 = vmatmul.f32.gmra.mxu0 %v629
        %v1799 = vpop.f32.mrf.mxu0
        %v1800 = vadd.f32 %v1687, %v1799
        %1801 = vmatmul.f32.gmra.mxu0 %v633
        %v1802 = vpop.f32.mrf.mxu0
        %v1803 = vadd.f32 %v1690, %v1802
        %1804 = vmatmul.f32.gmra.mxu0 %v637
        %v1805 = vpop.f32.mrf.mxu0
        %v1806 = vadd.f32 %v1693, %v1805
        %1807 = vmatmul.f32.gmra.mxu0 %v641
        %v1808 = vpop.f32.mrf.mxu0
        %v1809 = vadd.f32 %v1696, %v1808
        %1810 = vmatmul.f32.gmra.mxu0 %v645
        %v1811 = vpop.f32.mrf.mxu0
        %v1812 = vadd.f32 %v1699, %v1811
        %1813 = vmatmul.f32.gmra.mxu0 %v649
        %v1814 = vpop.f32.mrf.mxu0
        %v1815 = vadd.f32 %v1702, %v1814
        %1816 = vmatmul.f32.gmra.mxu0 %v653
        %v1817 = vpop.f32.mrf.mxu0
        %v1818 = vadd.f32 %v1705, %v1817
        %1819 = vmatmul.f32.gmra.mxu0 %v657
        %v1820 = vpop.f32.mrf.mxu0
        %v1821 = vadd.f32 %v1708, %v1820
        %1822 = vmatmul.f32.gmra.mxu0 %v661
        %v1823 = vpop.f32.mrf.mxu0
        %v1824 = vadd.f32 %v1711, %v1823
        %1825 = vmatmul.f32.gmra.mxu0 %v665
        %v1826 = vpop.f32.mrf.mxu0
        %v1827 = vadd.f32 %v1714, %v1826
        %1828 = vmatmul.f32.gmra.mxu0 %v669
        %v1829 = vpop.f32.mrf.mxu0
        %v1830 = vadd.f32 %v1717, %v1829
        %1831 = vmatmul.f32.gmra.mxu0 %v673
        %v1832 = vpop.f32.mrf.mxu0
        %v1833 = vadd.f32 %v1720, %v1832
        %1834 = vmatmul.f32.gmra.mxu0 %v677
        %v1835 = vpop.f32.mrf.mxu0
        %v1836 = vadd.f32 %v1723, %v1835
        %1837 = vdwg.mxu0
        %1838 = vmatpush.msra.mxu0 %v740
        %1839 = vmatpush.msra.mxu0 %v736
        %1840 = vmatpush.msra.mxu0 %v732
        %1841 = vmatpush.msra.mxu0 %v728
        %1842 = vmatpush.msra.mxu0 %v724
        %1843 = vmatpush.msra.mxu0 %v720
        %1844 = vmatpush.msra.mxu0 %v716
        %1845 = vmatpush.msra.mxu0 %v712
        %1846 = vmatpush.msra.mxu0 %v708
        %1847 = vmatpush.msra.mxu0 %v704
        %1848 = vmatpush.msra.mxu0 %v700
        %1849 = vmatpush.msra.mxu0 %v696
        %1850 = vmatpush.msra.mxu0 %v692
        %1851 = vmatpush.msra.mxu0 %v688
        %1852 = vmatpush.msra.mxu0 %v684
        %1853 = vmatpush.msra.mxu0 %v680
        %1854 = vmatmul.f32.gmra.mxu0 %v550
        %v1855 = vpop.f32.mrf.mxu0
        %v1856 = vadd.f32 0.0, %v1855
        %1857 = vmatmul.f32.gmra.mxu0 %v554
        %v1858 = vpop.f32.mrf.mxu0
        %v1859 = vadd.f32 0.0, %v1858
        %1860 = vmatmul.f32.gmra.mxu0 %v558
        %v1861 = vpop.f32.mrf.mxu0
        %v1862 = vadd.f32 0.0, %v1861
        %1863 = vmatmul.f32.gmra.mxu0 %v562
        %v1864 = vpop.f32.mrf.mxu0
        %v1865 = vadd.f32 0.0, %v1864
        %1866 = vmatmul.f32.gmra.mxu0 %v566
        %v1867 = vpop.f32.mrf.mxu0
        %v1868 = vadd.f32 0.0, %v1867
        %1869 = vmatmul.f32.gmra.mxu0 %v570
        %v1870 = vpop.f32.mrf.mxu0
        %v1871 = vadd.f32 0.0, %v1870
        %1872 = vmatmul.f32.gmra.mxu0 %v574
        %v1873 = vpop.f32.mrf.mxu0
        %v1874 = vadd.f32 0.0, %v1873
        %1875 = vmatmul.f32.gmra.mxu0 %v578
        %v1876 = vpop.f32.mrf.mxu0
        %v1877 = vadd.f32 0.0, %v1876
        %1878 = vmatmul.f32.gmra.mxu0 %v582
        %v1879 = vpop.f32.mrf.mxu0
        %v1880 = vadd.f32 0.0, %v1879
        %1881 = vmatmul.f32.gmra.mxu0 %v586
        %v1882 = vpop.f32.mrf.mxu0
        %v1883 = vadd.f32 0.0, %v1882
        %1884 = vmatmul.f32.gmra.mxu0 %v590
        %v1885 = vpop.f32.mrf.mxu0
        %v1886 = vadd.f32 0.0, %v1885
        %1887 = vmatmul.f32.gmra.mxu0 %v594
        %v1888 = vpop.f32.mrf.mxu0
        %v1889 = vadd.f32 0.0, %v1888
        %1890 = vmatmul.f32.gmra.mxu0 %v598
        %v1891 = vpop.f32.mrf.mxu0
        %v1892 = vadd.f32 0.0, %v1891
        %1893 = vmatmul.f32.gmra.mxu0 %v602
        %v1894 = vpop.f32.mrf.mxu0
        %v1895 = vadd.f32 0.0, %v1894
        %1896 = vmatmul.f32.gmra.mxu0 %v606
        %v1897 = vpop.f32.mrf.mxu0
        %v1898 = vadd.f32 0.0, %v1897
        %1899 = vmatmul.f32.gmra.mxu0 %v610
        %v1900 = vpop.f32.mrf.mxu0
        %v1901 = vadd.f32 0.0, %v1900
        %1902 = vmatmul.f32.gmra.mxu0 %v614
        %v1903 = vpop.f32.mrf.mxu0
        %v1904 = vadd.f32 0.0, %v1903
        %1905 = vmatmul.f32.gmra.mxu0 %v618
        %v1906 = vpop.f32.mrf.mxu0
        %v1907 = vadd.f32 0.0, %v1906
        %1908 = vmatmul.f32.gmra.mxu0 %v622
        %v1909 = vpop.f32.mrf.mxu0
        %v1910 = vadd.f32 0.0, %v1909
        %1911 = vmatmul.f32.gmra.mxu0 %v626
        %v1912 = vpop.f32.mrf.mxu0
        %v1913 = vadd.f32 0.0, %v1912
        %1914 = vmatmul.f32.gmra.mxu0 %v630
        %v1915 = vpop.f32.mrf.mxu0
        %v1916 = vadd.f32 0.0, %v1915
        %1917 = vmatmul.f32.gmra.mxu0 %v634
        %v1918 = vpop.f32.mrf.mxu0
        %v1919 = vadd.f32 0.0, %v1918
        %1920 = vmatmul.f32.gmra.mxu0 %v638
        %v1921 = vpop.f32.mrf.mxu0
        %v1922 = vadd.f32 0.0, %v1921
        %1923 = vmatmul.f32.gmra.mxu0 %v642
        %v1924 = vpop.f32.mrf.mxu0
        %v1925 = vadd.f32 0.0, %v1924
        %1926 = vmatmul.f32.gmra.mxu0 %v646
        %v1927 = vpop.f32.mrf.mxu0
        %v1928 = vadd.f32 0.0, %v1927
        %1929 = vmatmul.f32.gmra.mxu0 %v650
        %v1930 = vpop.f32.mrf.mxu0
        %v1931 = vadd.f32 0.0, %v1930
        %1932 = vmatmul.f32.gmra.mxu0 %v654
        %v1933 = vpop.f32.mrf.mxu0
        %v1934 = vadd.f32 0.0, %v1933
        %1935 = vmatmul.f32.gmra.mxu0 %v658
        %v1936 = vpop.f32.mrf.mxu0
        %v1937 = vadd.f32 0.0, %v1936
        %1938 = vmatmul.f32.gmra.mxu0 %v662
        %v1939 = vpop.f32.mrf.mxu0
        %v1940 = vadd.f32 0.0, %v1939
        %1941 = vmatmul.f32.gmra.mxu0 %v666
        %v1942 = vpop.f32.mrf.mxu0
        %v1943 = vadd.f32 0.0, %v1942
        %1944 = vmatmul.f32.gmra.mxu0 %v670
        %v1945 = vpop.f32.mrf.mxu0
        %v1946 = vadd.f32 0.0, %v1945
        %1947 = vmatmul.f32.gmra.mxu0 %v674
        %v1948 = vpop.f32.mrf.mxu0
        %v1949 = vadd.f32 0.0, %v1948
        %1950 = vdwg.mxu0
        %1951 = vmatpush.msra.mxu0 %v804
        %1952 = vmatpush.msra.mxu0 %v800
        %1953 = vmatpush.msra.mxu0 %v796
        %1954 = vmatpush.msra.mxu0 %v792
        %1955 = vmatpush.msra.mxu0 %v788
        %1956 = vmatpush.msra.mxu0 %v784
        %1957 = vmatpush.msra.mxu0 %v780
        %1958 = vmatpush.msra.mxu0 %v776
        %1959 = vmatpush.msra.mxu0 %v772
        %1960 = vmatpush.msra.mxu0 %v768
        %1961 = vmatpush.msra.mxu0 %v764
        %1962 = vmatpush.msra.mxu0 %v760
        %1963 = vmatpush.msra.mxu0 %v756
        %1964 = vmatpush.msra.mxu0 %v752
        %1965 = vmatpush.msra.mxu0 %v748
        %1966 = vmatpush.msra.mxu0 %v744
        %1967 = vmatmul.f32.gmra.mxu0 %v551
        %v1968 = vpop.f32.mrf.mxu0
        %v1969 = vadd.f32 %v1856, %v1968
        %1970 = vmatmul.f32.gmra.mxu0 %v555
        %v1971 = vpop.f32.mrf.mxu0
        %v1972 = vadd.f32 %v1859, %v1971
        %1973 = vmatmul.f32.gmra.mxu0 %v559
        %v1974 = vpop.f32.mrf.mxu0
        %v1975 = vadd.f32 %v1862, %v1974
        %1976 = vmatmul.f32.gmra.mxu0 %v563
        %v1977 = vpop.f32.mrf.mxu0
        %v1978 = vadd.f32 %v1865, %v1977
        %1979 = vmatmul.f32.gmra.mxu0 %v567
        %v1980 = vpop.f32.mrf.mxu0
        %v1981 = vadd.f32 %v1868, %v1980
        %1982 = vmatmul.f32.gmra.mxu0 %v571
        %v1983 = vpop.f32.mrf.mxu0
        %v1984 = vadd.f32 %v1871, %v1983
        %1985 = vmatmul.f32.gmra.mxu0 %v575
        %v1986 = vpop.f32.mrf.mxu0
        %v1987 = vadd.f32 %v1874, %v1986
        %1988 = vmatmul.f32.gmra.mxu0 %v579
        %v1989 = vpop.f32.mrf.mxu0
        %v1990 = vadd.f32 %v1877, %v1989
        %1991 = vmatmul.f32.gmra.mxu0 %v583
        %v1992 = vpop.f32.mrf.mxu0
        %v1993 = vadd.f32 %v1880, %v1992
        %1994 = vmatmul.f32.gmra.mxu0 %v587
        %v1995 = vpop.f32.mrf.mxu0
        %v1996 = vadd.f32 %v1883, %v1995
        %1997 = vmatmul.f32.gmra.mxu0 %v591
        %v1998 = vpop.f32.mrf.mxu0
        %v1999 = vadd.f32 %v1886, %v1998
        %2000 = vmatmul.f32.gmra.mxu0 %v595
        %v2001 = vpop.f32.mrf.mxu0
        %v2002 = vadd.f32 %v1889, %v2001
        %2003 = vmatmul.f32.gmra.mxu0 %v599
        %v2004 = vpop.f32.mrf.mxu0
        %v2005 = vadd.f32 %v1892, %v2004
        %2006 = vmatmul.f32.gmra.mxu0 %v603
        %v2007 = vpop.f32.mrf.mxu0
        %v2008 = vadd.f32 %v1895, %v2007
        %2009 = vmatmul.f32.gmra.mxu0 %v607
        %v2010 = vpop.f32.mrf.mxu0
        %v2011 = vadd.f32 %v1898, %v2010
        %2012 = vmatmul.f32.gmra.mxu0 %v611
        %v2013 = vpop.f32.mrf.mxu0
        %v2014 = vadd.f32 %v1901, %v2013
        %2015 = vmatmul.f32.gmra.mxu0 %v615
        %v2016 = vpop.f32.mrf.mxu0
        %v2017 = vadd.f32 %v1904, %v2016
        %2018 = vmatmul.f32.gmra.mxu0 %v619
        %v2019 = vpop.f32.mrf.mxu0
        %v2020 = vadd.f32 %v1907, %v2019
        %2021 = vmatmul.f32.gmra.mxu0 %v623
        %v2022 = vpop.f32.mrf.mxu0
        %v2023 = vadd.f32 %v1910, %v2022
        %2024 = vmatmul.f32.gmra.mxu0 %v627
        %v2025 = vpop.f32.mrf.mxu0
        %v2026 = vadd.f32 %v1913, %v2025
        %2027 = vmatmul.f32.gmra.mxu0 %v631
        %v2028 = vpop.f32.mrf.mxu0
        %v2029 = vadd.f32 %v1916, %v2028
        %2030 = vmatmul.f32.gmra.mxu0 %v635
        %v2031 = vpop.f32.mrf.mxu0
        %v2032 = vadd.f32 %v1919, %v2031
        %2033 = vmatmul.f32.gmra.mxu0 %v639
        %v2034 = vpop.f32.mrf.mxu0
        %v2035 = vadd.f32 %v1922, %v2034
        %2036 = vmatmul.f32.gmra.mxu0 %v643
        %v2037 = vpop.f32.mrf.mxu0
        %v2038 = vadd.f32 %v1925, %v2037
        %2039 = vmatmul.f32.gmra.mxu0 %v647
        %v2040 = vpop.f32.mrf.mxu0
        %v2041 = vadd.f32 %v1928, %v2040
        %2042 = vmatmul.f32.gmra.mxu0 %v651
        %v2043 = vpop.f32.mrf.mxu0
        %v2044 = vadd.f32 %v1931, %v2043
        %2045 = vmatmul.f32.gmra.mxu0 %v655
        %v2046 = vpop.f32.mrf.mxu0
        %v2047 = vadd.f32 %v1934, %v2046
        %2048 = vmatmul.f32.gmra.mxu0 %v659
        %v2049 = vpop.f32.mrf.mxu0
        %v2050 = vadd.f32 %v1937, %v2049
        %2051 = vmatmul.f32.gmra.mxu0 %v663
        %v2052 = vpop.f32.mrf.mxu0
        %v2053 = vadd.f32 %v1940, %v2052
        %2054 = vmatmul.f32.gmra.mxu0 %v667
        %v2055 = vpop.f32.mrf.mxu0
        %v2056 = vadd.f32 %v1943, %v2055
        %2057 = vmatmul.f32.gmra.mxu0 %v671
        %v2058 = vpop.f32.mrf.mxu0
        %v2059 = vadd.f32 %v1946, %v2058
        %2060 = vmatmul.f32.gmra.mxu0 %v675
        %v2061 = vpop.f32.mrf.mxu0
        %v2062 = vadd.f32 %v1949, %v2061
        %2063 = vdwg.mxu0
        %2064 = vmatpush.msra.mxu0 %v868
        %2065 = vmatpush.msra.mxu0 %v864
        %2066 = vmatpush.msra.mxu0 %v860
        %2067 = vmatpush.msra.mxu0 %v856
        %2068 = vmatpush.msra.mxu0 %v852
        %2069 = vmatpush.msra.mxu0 %v848
        %2070 = vmatpush.msra.mxu0 %v844
        %2071 = vmatpush.msra.mxu0 %v840
        %2072 = vmatpush.msra.mxu0 %v836
        %2073 = vmatpush.msra.mxu0 %v832
        %2074 = vmatpush.msra.mxu0 %v828
        %2075 = vmatpush.msra.mxu0 %v824
        %2076 = vmatpush.msra.mxu0 %v820
        %2077 = vmatpush.msra.mxu0 %v816
        %2078 = vmatpush.msra.mxu0 %v812
        %2079 = vmatpush.msra.mxu0 %v808
        %2080 = vmatmul.f32.gmra.mxu0 %v552
        %v2081 = vpop.f32.mrf.mxu0
        %v2082 = vadd.f32 %v1969, %v2081
        %2083 = vmatmul.f32.gmra.mxu0 %v556
        %v2084 = vpop.f32.mrf.mxu0
        %v2085 = vadd.f32 %v1972, %v2084
        %2086 = vmatmul.f32.gmra.mxu0 %v560
        %v2087 = vpop.f32.mrf.mxu0
        %v2088 = vadd.f32 %v1975, %v2087
        %2089 = vmatmul.f32.gmra.mxu0 %v564
        %v2090 = vpop.f32.mrf.mxu0
        %v2091 = vadd.f32 %v1978, %v2090
        %2092 = vmatmul.f32.gmra.mxu0 %v568
        %v2093 = vpop.f32.mrf.mxu0
        %v2094 = vadd.f32 %v1981, %v2093
        %2095 = vmatmul.f32.gmra.mxu0 %v572
        %v2096 = vpop.f32.mrf.mxu0
        %v2097 = vadd.f32 %v1984, %v2096
        %2098 = vmatmul.f32.gmra.mxu0 %v576
        %v2099 = vpop.f32.mrf.mxu0
        %v2100 = vadd.f32 %v1987, %v2099
        %2101 = vmatmul.f32.gmra.mxu0 %v580
        %v2102 = vpop.f32.mrf.mxu0
        %v2103 = vadd.f32 %v1990, %v2102
        %2104 = vmatmul.f32.gmra.mxu0 %v584
        %v2105 = vpop.f32.mrf.mxu0
        %v2106 = vadd.f32 %v1993, %v2105
        %2107 = vmatmul.f32.gmra.mxu0 %v588
        %v2108 = vpop.f32.mrf.mxu0
        %v2109 = vadd.f32 %v1996, %v2108
        %2110 = vmatmul.f32.gmra.mxu0 %v592
        %v2111 = vpop.f32.mrf.mxu0
        %v2112 = vadd.f32 %v1999, %v2111
        %2113 = vmatmul.f32.gmra.mxu0 %v596
        %v2114 = vpop.f32.mrf.mxu0
        %v2115 = vadd.f32 %v2002, %v2114
        %2116 = vmatmul.f32.gmra.mxu0 %v600
        %v2117 = vpop.f32.mrf.mxu0
        %v2118 = vadd.f32 %v2005, %v2117
        %2119 = vmatmul.f32.gmra.mxu0 %v604
        %v2120 = vpop.f32.mrf.mxu0
        %v2121 = vadd.f32 %v2008, %v2120
        %2122 = vmatmul.f32.gmra.mxu0 %v608
        %v2123 = vpop.f32.mrf.mxu0
        %v2124 = vadd.f32 %v2011, %v2123
        %2125 = vmatmul.f32.gmra.mxu0 %v612
        %v2126 = vpop.f32.mrf.mxu0
        %v2127 = vadd.f32 %v2014, %v2126
        %2128 = vmatmul.f32.gmra.mxu0 %v616
        %v2129 = vpop.f32.mrf.mxu0
        %v2130 = vadd.f32 %v2017, %v2129
        %2131 = vmatmul.f32.gmra.mxu0 %v620
        %v2132 = vpop.f32.mrf.mxu0
        %v2133 = vadd.f32 %v2020, %v2132
        %2134 = vmatmul.f32.gmra.mxu0 %v624
        %v2135 = vpop.f32.mrf.mxu0
        %v2136 = vadd.f32 %v2023, %v2135
        %2137 = vmatmul.f32.gmra.mxu0 %v628
        %v2138 = vpop.f32.mrf.mxu0
        %v2139 = vadd.f32 %v2026, %v2138
        %2140 = vmatmul.f32.gmra.mxu0 %v632
        %v2141 = vpop.f32.mrf.mxu0
        %v2142 = vadd.f32 %v2029, %v2141
        %2143 = vmatmul.f32.gmra.mxu0 %v636
        %v2144 = vpop.f32.mrf.mxu0
        %v2145 = vadd.f32 %v2032, %v2144
        %2146 = vmatmul.f32.gmra.mxu0 %v640
        %v2147 = vpop.f32.mrf.mxu0
        %v2148 = vadd.f32 %v2035, %v2147
        %2149 = vmatmul.f32.gmra.mxu0 %v644
        %v2150 = vpop.f32.mrf.mxu0
        %v2151 = vadd.f32 %v2038, %v2150
        %2152 = vmatmul.f32.gmra.mxu0 %v648
        %v2153 = vpop.f32.mrf.mxu0
        %v2154 = vadd.f32 %v2041, %v2153
        %2155 = vmatmul.f32.gmra.mxu0 %v652
        %v2156 = vpop.f32.mrf.mxu0
        %v2157 = vadd.f32 %v2044, %v2156
        %2158 = vmatmul.f32.gmra.mxu0 %v656
        %v2159 = vpop.f32.mrf.mxu0
        %v2160 = vadd.f32 %v2047, %v2159
        %2161 = vmatmul.f32.gmra.mxu0 %v660
        %v2162 = vpop.f32.mrf.mxu0
        %v2163 = vadd.f32 %v2050, %v2162
        %2164 = vmatmul.f32.gmra.mxu0 %v664
        %v2165 = vpop.f32.mrf.mxu0
        %v2166 = vadd.f32 %v2053, %v2165
        %2167 = vmatmul.f32.gmra.mxu0 %v668
        %v2168 = vpop.f32.mrf.mxu0
        %v2169 = vadd.f32 %v2056, %v2168
        %2170 = vmatmul.f32.gmra.mxu0 %v672
        %v2171 = vpop.f32.mrf.mxu0
        %v2172 = vadd.f32 %v2059, %v2171
        %2173 = vmatmul.f32.gmra.mxu0 %v676
        %v2174 = vpop.f32.mrf.mxu0
        %v2175 = vadd.f32 %v2062, %v2174
        %2176 = vdwg.mxu0
        %2177 = vmatpush.msra.mxu0 %v932
        %2178 = vmatpush.msra.mxu0 %v928
        %2179 = vmatpush.msra.mxu0 %v924
        %2180 = vmatpush.msra.mxu0 %v920
        %2181 = vmatpush.msra.mxu0 %v916
        %2182 = vmatpush.msra.mxu0 %v912
        %2183 = vmatpush.msra.mxu0 %v908
        %2184 = vmatpush.msra.mxu0 %v904
        %2185 = vmatpush.msra.mxu0 %v900
        %2186 = vmatpush.msra.mxu0 %v896
        %2187 = vmatpush.msra.mxu0 %v892
        %2188 = vmatpush.msra.mxu0 %v888
        %2189 = vmatpush.msra.mxu0 %v884
        %2190 = vmatpush.msra.mxu0 %v880
        %2191 = vmatpush.msra.mxu0 %v876
        %2192 = vmatpush.msra.mxu0 %v872
        %2193 = vmatmul.f32.gmra.mxu0 %v553
        %v2194 = vpop.f32.mrf.mxu0
        %v2195 = vadd.f32 %v2082, %v2194
        %2196 = vmatmul.f32.gmra.mxu0 %v557
        %v2197 = vpop.f32.mrf.mxu0
        %v2198 = vadd.f32 %v2085, %v2197
        %2199 = vmatmul.f32.gmra.mxu0 %v561
        %v2200 = vpop.f32.mrf.mxu0
        %v2201 = vadd.f32 %v2088, %v2200
        %2202 = vmatmul.f32.gmra.mxu0 %v565
        %v2203 = vpop.f32.mrf.mxu0
        %v2204 = vadd.f32 %v2091, %v2203
        %2205 = vmatmul.f32.gmra.mxu0 %v569
        %v2206 = vpop.f32.mrf.mxu0
        %v2207 = vadd.f32 %v2094, %v2206
        %2208 = vmatmul.f32.gmra.mxu0 %v573
        %v2209 = vpop.f32.mrf.mxu0
        %v2210 = vadd.f32 %v2097, %v2209
        %2211 = vmatmul.f32.gmra.mxu0 %v577
        %v2212 = vpop.f32.mrf.mxu0
        %v2213 = vadd.f32 %v2100, %v2212
        %2214 = vmatmul.f32.gmra.mxu0 %v581
        %v2215 = vpop.f32.mrf.mxu0
        %v2216 = vadd.f32 %v2103, %v2215
        %2217 = vmatmul.f32.gmra.mxu0 %v585
        %v2218 = vpop.f32.mrf.mxu0
        %v2219 = vadd.f32 %v2106, %v2218
        %2220 = vmatmul.f32.gmra.mxu0 %v589
        %v2221 = vpop.f32.mrf.mxu0
        %v2222 = vadd.f32 %v2109, %v2221
        %2223 = vmatmul.f32.gmra.mxu0 %v593
        %v2224 = vpop.f32.mrf.mxu0
        %v2225 = vadd.f32 %v2112, %v2224
        %2226 = vmatmul.f32.gmra.mxu0 %v597
        %v2227 = vpop.f32.mrf.mxu0
        %v2228 = vadd.f32 %v2115, %v2227
        %2229 = vmatmul.f32.gmra.mxu0 %v601
        %v2230 = vpop.f32.mrf.mxu0
        %v2231 = vadd.f32 %v2118, %v2230
        %2232 = vmatmul.f32.gmra.mxu0 %v605
        %v2233 = vpop.f32.mrf.mxu0
        %v2234 = vadd.f32 %v2121, %v2233
        %2235 = vmatmul.f32.gmra.mxu0 %v609
        %v2236 = vpop.f32.mrf.mxu0
        %v2237 = vadd.f32 %v2124, %v2236
        %2238 = vmatmul.f32.gmra.mxu0 %v613
        %v2239 = vpop.f32.mrf.mxu0
        %v2240 = vadd.f32 %v2127, %v2239
        %2241 = vmatmul.f32.gmra.mxu0 %v617
        %v2242 = vpop.f32.mrf.mxu0
        %v2243 = vadd.f32 %v2130, %v2242
        %2244 = vmatmul.f32.gmra.mxu0 %v621
        %v2245 = vpop.f32.mrf.mxu0
        %v2246 = vadd.f32 %v2133, %v2245
        %2247 = vmatmul.f32.gmra.mxu0 %v625
        %v2248 = vpop.f32.mrf.mxu0
        %v2249 = vadd.f32 %v2136, %v2248
        %2250 = vmatmul.f32.gmra.mxu0 %v629
        %v2251 = vpop.f32.mrf.mxu0
        %v2252 = vadd.f32 %v2139, %v2251
        %2253 = vmatmul.f32.gmra.mxu0 %v633
        %v2254 = vpop.f32.mrf.mxu0
        %v2255 = vadd.f32 %v2142, %v2254
        %2256 = vmatmul.f32.gmra.mxu0 %v637
        %v2257 = vpop.f32.mrf.mxu0
        %v2258 = vadd.f32 %v2145, %v2257
        %2259 = vmatmul.f32.gmra.mxu0 %v641
        %v2260 = vpop.f32.mrf.mxu0
        %v2261 = vadd.f32 %v2148, %v2260
        %2262 = vmatmul.f32.gmra.mxu0 %v645
        %v2263 = vpop.f32.mrf.mxu0
        %v2264 = vadd.f32 %v2151, %v2263
        %2265 = vmatmul.f32.gmra.mxu0 %v649
        %v2266 = vpop.f32.mrf.mxu0
        %v2267 = vadd.f32 %v2154, %v2266
        %2268 = vmatmul.f32.gmra.mxu0 %v653
        %v2269 = vpop.f32.mrf.mxu0
        %v2270 = vadd.f32 %v2157, %v2269
        %2271 = vmatmul.f32.gmra.mxu0 %v657
        %v2272 = vpop.f32.mrf.mxu0
        %v2273 = vadd.f32 %v2160, %v2272
        %2274 = vmatmul.f32.gmra.mxu0 %v661
        %v2275 = vpop.f32.mrf.mxu0
        %v2276 = vadd.f32 %v2163, %v2275
        %2277 = vmatmul.f32.gmra.mxu0 %v665
        %v2278 = vpop.f32.mrf.mxu0
        %v2279 = vadd.f32 %v2166, %v2278
        %2280 = vmatmul.f32.gmra.mxu0 %v669
        %v2281 = vpop.f32.mrf.mxu0
        %v2282 = vadd.f32 %v2169, %v2281
        %2283 = vmatmul.f32.gmra.mxu0 %v673
        %v2284 = vpop.f32.mrf.mxu0
        %v2285 = vadd.f32 %v2172, %v2284
        %2286 = vmatmul.f32.gmra.mxu0 %v677
        %v2287 = vpop.f32.mrf.mxu0
        %v2288 = vadd.f32 %v2175, %v2287
        %2289 = vdwg.mxu0
        %2290 = vmatpush.msra.mxu0 %v741
        %2291 = vmatpush.msra.mxu0 %v737
        %2292 = vmatpush.msra.mxu0 %v733
        %2293 = vmatpush.msra.mxu0 %v729
        %2294 = vmatpush.msra.mxu0 %v725
        %2295 = vmatpush.msra.mxu0 %v721
        %2296 = vmatpush.msra.mxu0 %v717
        %2297 = vmatpush.msra.mxu0 %v713
        %2298 = vmatpush.msra.mxu0 %v709
        %2299 = vmatpush.msra.mxu0 %v705
        %2300 = vmatpush.msra.mxu0 %v701
        %2301 = vmatpush.msra.mxu0 %v697
        %2302 = vmatpush.msra.mxu0 %v693
        %2303 = vmatpush.msra.mxu0 %v689
        %2304 = vmatpush.msra.mxu0 %v685
        %2305 = vmatpush.msra.mxu0 %v681
        %2306 = vmatmul.f32.gmra.mxu0 %v550
        %v2307 = vpop.f32.mrf.mxu0
        %v2308 = vadd.f32 0.0, %v2307
        %2309 = vmatmul.f32.gmra.mxu0 %v554
        %v2310 = vpop.f32.mrf.mxu0
        %v2311 = vadd.f32 0.0, %v2310
        %2312 = vmatmul.f32.gmra.mxu0 %v558
        %v2313 = vpop.f32.mrf.mxu0
        %v2314 = vadd.f32 0.0, %v2313
        %2315 = vmatmul.f32.gmra.mxu0 %v562
        %v2316 = vpop.f32.mrf.mxu0
        %v2317 = vadd.f32 0.0, %v2316
        %2318 = vmatmul.f32.gmra.mxu0 %v566
        %v2319 = vpop.f32.mrf.mxu0
        %v2320 = vadd.f32 0.0, %v2319
        %2321 = vmatmul.f32.gmra.mxu0 %v570
        %v2322 = vpop.f32.mrf.mxu0
        %v2323 = vadd.f32 0.0, %v2322
        %2324 = vmatmul.f32.gmra.mxu0 %v574
        %v2325 = vpop.f32.mrf.mxu0
        %v2326 = vadd.f32 0.0, %v2325
        %2327 = vmatmul.f32.gmra.mxu0 %v578
        %v2328 = vpop.f32.mrf.mxu0
        %v2329 = vadd.f32 0.0, %v2328
        %2330 = vmatmul.f32.gmra.mxu0 %v582
        %v2331 = vpop.f32.mrf.mxu0
        %v2332 = vadd.f32 0.0, %v2331
        %2333 = vmatmul.f32.gmra.mxu0 %v586
        %v2334 = vpop.f32.mrf.mxu0
        %v2335 = vadd.f32 0.0, %v2334
        %2336 = vmatmul.f32.gmra.mxu0 %v590
        %v2337 = vpop.f32.mrf.mxu0
        %v2338 = vadd.f32 0.0, %v2337
        %2339 = vmatmul.f32.gmra.mxu0 %v594
        %v2340 = vpop.f32.mrf.mxu0
        %v2341 = vadd.f32 0.0, %v2340
        %2342 = vmatmul.f32.gmra.mxu0 %v598
        %v2343 = vpop.f32.mrf.mxu0
        %v2344 = vadd.f32 0.0, %v2343
        %2345 = vmatmul.f32.gmra.mxu0 %v602
        %v2346 = vpop.f32.mrf.mxu0
        %v2347 = vadd.f32 0.0, %v2346
        %2348 = vmatmul.f32.gmra.mxu0 %v606
        %v2349 = vpop.f32.mrf.mxu0
        %v2350 = vadd.f32 0.0, %v2349
        %2351 = vmatmul.f32.gmra.mxu0 %v610
        %v2352 = vpop.f32.mrf.mxu0
        %v2353 = vadd.f32 0.0, %v2352
        %2354 = vmatmul.f32.gmra.mxu0 %v614
        %v2355 = vpop.f32.mrf.mxu0
        %v2356 = vadd.f32 0.0, %v2355
        %2357 = vmatmul.f32.gmra.mxu0 %v618
        %v2358 = vpop.f32.mrf.mxu0
        %v2359 = vadd.f32 0.0, %v2358
        %2360 = vmatmul.f32.gmra.mxu0 %v622
        %v2361 = vpop.f32.mrf.mxu0
        %v2362 = vadd.f32 0.0, %v2361
        %2363 = vmatmul.f32.gmra.mxu0 %v626
        %v2364 = vpop.f32.mrf.mxu0
        %v2365 = vadd.f32 0.0, %v2364
        %2366 = vmatmul.f32.gmra.mxu0 %v630
        %v2367 = vpop.f32.mrf.mxu0
        %v2368 = vadd.f32 0.0, %v2367
        %2369 = vmatmul.f32.gmra.mxu0 %v634
        %v2370 = vpop.f32.mrf.mxu0
        %v2371 = vadd.f32 0.0, %v2370
        %2372 = vmatmul.f32.gmra.mxu0 %v638
        %v2373 = vpop.f32.mrf.mxu0
        %v2374 = vadd.f32 0.0, %v2373
        %2375 = vmatmul.f32.gmra.mxu0 %v642
        %v2376 = vpop.f32.mrf.mxu0
        %v2377 = vadd.f32 0.0, %v2376
        %2378 = vmatmul.f32.gmra.mxu0 %v646
        %v2379 = vpop.f32.mrf.mxu0
        %v2380 = vadd.f32 0.0, %v2379
        %2381 = vmatmul.f32.gmra.mxu0 %v650
        %v2382 = vpop.f32.mrf.mxu0
        %v2383 = vadd.f32 0.0, %v2382
        %2384 = vmatmul.f32.gmra.mxu0 %v654
        %v2385 = vpop.f32.mrf.mxu0
        %v2386 = vadd.f32 0.0, %v2385
        %2387 = vmatmul.f32.gmra.mxu0 %v658
        %v2388 = vpop.f32.mrf.mxu0
        %v2389 = vadd.f32 0.0, %v2388
        %2390 = vmatmul.f32.gmra.mxu0 %v662
        %v2391 = vpop.f32.mrf.mxu0
        %v2392 = vadd.f32 0.0, %v2391
        %2393 = vmatmul.f32.gmra.mxu0 %v666
        %v2394 = vpop.f32.mrf.mxu0
        %v2395 = vadd.f32 0.0, %v2394
        %2396 = vmatmul.f32.gmra.mxu0 %v670
        %v2397 = vpop.f32.mrf.mxu0
        %v2398 = vadd.f32 0.0, %v2397
        %2399 = vmatmul.f32.gmra.mxu0 %v674
        %v2400 = vpop.f32.mrf.mxu0
        %v2401 = vadd.f32 0.0, %v2400
        %2402 = vdwg.mxu0
        %2403 = vmatpush.msra.mxu0 %v805
        %2404 = vmatpush.msra.mxu0 %v801
        %2405 = vmatpush.msra.mxu0 %v797
        %2406 = vmatpush.msra.mxu0 %v793
        %2407 = vmatpush.msra.mxu0 %v789
        %2408 = vmatpush.msra.mxu0 %v785
        %2409 = vmatpush.msra.mxu0 %v781
        %2410 = vmatpush.msra.mxu0 %v777
        %2411 = vmatpush.msra.mxu0 %v773
        %2412 = vmatpush.msra.mxu0 %v769
        %2413 = vmatpush.msra.mxu0 %v765
        %2414 = vmatpush.msra.mxu0 %v761
        %2415 = vmatpush.msra.mxu0 %v757
        %2416 = vmatpush.msra.mxu0 %v753
        %2417 = vmatpush.msra.mxu0 %v749
        %2418 = vmatpush.msra.mxu0 %v745
        %2419 = vmatmul.f32.gmra.mxu0 %v551
        %v2420 = vpop.f32.mrf.mxu0
        %v2421 = vadd.f32 %v2308, %v2420
        %2422 = vmatmul.f32.gmra.mxu0 %v555
        %v2423 = vpop.f32.mrf.mxu0
        %v2424 = vadd.f32 %v2311, %v2423
        %2425 = vmatmul.f32.gmra.mxu0 %v559
        %v2426 = vpop.f32.mrf.mxu0
        %v2427 = vadd.f32 %v2314, %v2426
        %2428 = vmatmul.f32.gmra.mxu0 %v563
        %v2429 = vpop.f32.mrf.mxu0
        %v2430 = vadd.f32 %v2317, %v2429
        %2431 = vmatmul.f32.gmra.mxu0 %v567
        %v2432 = vpop.f32.mrf.mxu0
        %v2433 = vadd.f32 %v2320, %v2432
        %2434 = vmatmul.f32.gmra.mxu0 %v571
        %v2435 = vpop.f32.mrf.mxu0
        %v2436 = vadd.f32 %v2323, %v2435
        %2437 = vmatmul.f32.gmra.mxu0 %v575
        %v2438 = vpop.f32.mrf.mxu0
        %v2439 = vadd.f32 %v2326, %v2438
        %2440 = vmatmul.f32.gmra.mxu0 %v579
        %v2441 = vpop.f32.mrf.mxu0
        %v2442 = vadd.f32 %v2329, %v2441
        %2443 = vmatmul.f32.gmra.mxu0 %v583
        %v2444 = vpop.f32.mrf.mxu0
        %v2445 = vadd.f32 %v2332, %v2444
        %2446 = vmatmul.f32.gmra.mxu0 %v587
        %v2447 = vpop.f32.mrf.mxu0
        %v2448 = vadd.f32 %v2335, %v2447
        %2449 = vmatmul.f32.gmra.mxu0 %v591
        %v2450 = vpop.f32.mrf.mxu0
        %v2451 = vadd.f32 %v2338, %v2450
        %2452 = vmatmul.f32.gmra.mxu0 %v595
        %v2453 = vpop.f32.mrf.mxu0
        %v2454 = vadd.f32 %v2341, %v2453
        %2455 = vmatmul.f32.gmra.mxu0 %v599
        %v2456 = vpop.f32.mrf.mxu0
        %v2457 = vadd.f32 %v2344, %v2456
        %2458 = vmatmul.f32.gmra.mxu0 %v603
        %v2459 = vpop.f32.mrf.mxu0
        %v2460 = vadd.f32 %v2347, %v2459
        %2461 = vmatmul.f32.gmra.mxu0 %v607
        %v2462 = vpop.f32.mrf.mxu0
        %v2463 = vadd.f32 %v2350, %v2462
        %2464 = vmatmul.f32.gmra.mxu0 %v611
        %v2465 = vpop.f32.mrf.mxu0
        %v2466 = vadd.f32 %v2353, %v2465
        %2467 = vmatmul.f32.gmra.mxu0 %v615
        %v2468 = vpop.f32.mrf.mxu0
        %v2469 = vadd.f32 %v2356, %v2468
        %2470 = vmatmul.f32.gmra.mxu0 %v619
        %v2471 = vpop.f32.mrf.mxu0
        %v2472 = vadd.f32 %v2359, %v2471
        %2473 = vmatmul.f32.gmra.mxu0 %v623
        %v2474 = vpop.f32.mrf.mxu0
        %v2475 = vadd.f32 %v2362, %v2474
        %2476 = vmatmul.f32.gmra.mxu0 %v627
        %v2477 = vpop.f32.mrf.mxu0
        %v2478 = vadd.f32 %v2365, %v2477
        %2479 = vmatmul.f32.gmra.mxu0 %v631
        %v2480 = vpop.f32.mrf.mxu0
        %v2481 = vadd.f32 %v2368, %v2480
        %2482 = vmatmul.f32.gmra.mxu0 %v635
        %v2483 = vpop.f32.mrf.mxu0
        %v2484 = vadd.f32 %v2371, %v2483
        %2485 = vmatmul.f32.gmra.mxu0 %v639
        %v2486 = vpop.f32.mrf.mxu0
        %v2487 = vadd.f32 %v2374, %v2486
        %2488 = vmatmul.f32.gmra.mxu0 %v643
        %v2489 = vpop.f32.mrf.mxu0
        %v2490 = vadd.f32 %v2377, %v2489
        %2491 = vmatmul.f32.gmra.mxu0 %v647
        %v2492 = vpop.f32.mrf.mxu0
        %v2493 = vadd.f32 %v2380, %v2492
        %2494 = vmatmul.f32.gmra.mxu0 %v651
        %v2495 = vpop.f32.mrf.mxu0
        %v2496 = vadd.f32 %v2383, %v2495
        %2497 = vmatmul.f32.gmra.mxu0 %v655
        %v2498 = vpop.f32.mrf.mxu0
        %v2499 = vadd.f32 %v2386, %v2498
        %2500 = vmatmul.f32.gmra.mxu0 %v659
        %v2501 = vpop.f32.mrf.mxu0
        %v2502 = vadd.f32 %v2389, %v2501
        %2503 = vmatmul.f32.gmra.mxu0 %v663
        %v2504 = vpop.f32.mrf.mxu0
        %v2505 = vadd.f32 %v2392, %v2504
        %2506 = vmatmul.f32.gmra.mxu0 %v667
        %v2507 = vpop.f32.mrf.mxu0
        %v2508 = vadd.f32 %v2395, %v2507
        %2509 = vmatmul.f32.gmra.mxu0 %v671
        %v2510 = vpop.f32.mrf.mxu0
        %v2511 = vadd.f32 %v2398, %v2510
        %2512 = vmatmul.f32.gmra.mxu0 %v675
        %v2513 = vpop.f32.mrf.mxu0
        %v2514 = vadd.f32 %v2401, %v2513
        %2515 = vdwg.mxu0
        %2516 = vmatpush.msra.mxu0 %v869
        %2517 = vmatpush.msra.mxu0 %v865
        %2518 = vmatpush.msra.mxu0 %v861
        %2519 = vmatpush.msra.mxu0 %v857
        %2520 = vmatpush.msra.mxu0 %v853
        %2521 = vmatpush.msra.mxu0 %v849
        %2522 = vmatpush.msra.mxu0 %v845
        %2523 = vmatpush.msra.mxu0 %v841
        %2524 = vmatpush.msra.mxu0 %v837
        %2525 = vmatpush.msra.mxu0 %v833
        %2526 = vmatpush.msra.mxu0 %v829
        %2527 = vmatpush.msra.mxu0 %v825
        %2528 = vmatpush.msra.mxu0 %v821
        %2529 = vmatpush.msra.mxu0 %v817
        %2530 = vmatpush.msra.mxu0 %v813
        %2531 = vmatpush.msra.mxu0 %v809
        %2532 = vmatmul.f32.gmra.mxu0 %v552
        %v2533 = vpop.f32.mrf.mxu0
        %v2534 = vadd.f32 %v2421, %v2533
        %2535 = vmatmul.f32.gmra.mxu0 %v556
        %v2536 = vpop.f32.mrf.mxu0
        %v2537 = vadd.f32 %v2424, %v2536
        %2538 = vmatmul.f32.gmra.mxu0 %v560
        %v2539 = vpop.f32.mrf.mxu0
        %v2540 = vadd.f32 %v2427, %v2539
        %2541 = vmatmul.f32.gmra.mxu0 %v564
        %v2542 = vpop.f32.mrf.mxu0
        %v2543 = vadd.f32 %v2430, %v2542
        %2544 = vmatmul.f32.gmra.mxu0 %v568
        %v2545 = vpop.f32.mrf.mxu0
        %v2546 = vadd.f32 %v2433, %v2545
        %2547 = vmatmul.f32.gmra.mxu0 %v572
        %v2548 = vpop.f32.mrf.mxu0
        %v2549 = vadd.f32 %v2436, %v2548
        %2550 = vmatmul.f32.gmra.mxu0 %v576
        %v2551 = vpop.f32.mrf.mxu0
        %v2552 = vadd.f32 %v2439, %v2551
        %2553 = vmatmul.f32.gmra.mxu0 %v580
        %v2554 = vpop.f32.mrf.mxu0
        %v2555 = vadd.f32 %v2442, %v2554
        %2556 = vmatmul.f32.gmra.mxu0 %v584
        %v2557 = vpop.f32.mrf.mxu0
        %v2558 = vadd.f32 %v2445, %v2557
        %2559 = vmatmul.f32.gmra.mxu0 %v588
        %v2560 = vpop.f32.mrf.mxu0
        %v2561 = vadd.f32 %v2448, %v2560
        %2562 = vmatmul.f32.gmra.mxu0 %v592
        %v2563 = vpop.f32.mrf.mxu0
        %v2564 = vadd.f32 %v2451, %v2563
        %2565 = vmatmul.f32.gmra.mxu0 %v596
        %v2566 = vpop.f32.mrf.mxu0
        %v2567 = vadd.f32 %v2454, %v2566
        %2568 = vmatmul.f32.gmra.mxu0 %v600
        %v2569 = vpop.f32.mrf.mxu0
        %v2570 = vadd.f32 %v2457, %v2569
        %2571 = vmatmul.f32.gmra.mxu0 %v604
        %v2572 = vpop.f32.mrf.mxu0
        %v2573 = vadd.f32 %v2460, %v2572
        %2574 = vmatmul.f32.gmra.mxu0 %v608
        %v2575 = vpop.f32.mrf.mxu0
        %v2576 = vadd.f32 %v2463, %v2575
        %2577 = vmatmul.f32.gmra.mxu0 %v612
        %v2578 = vpop.f32.mrf.mxu0
        %v2579 = vadd.f32 %v2466, %v2578
        %2580 = vmatmul.f32.gmra.mxu0 %v616
        %v2581 = vpop.f32.mrf.mxu0
        %v2582 = vadd.f32 %v2469, %v2581
        %2583 = vmatmul.f32.gmra.mxu0 %v620
        %v2584 = vpop.f32.mrf.mxu0
        %v2585 = vadd.f32 %v2472, %v2584
        %2586 = vmatmul.f32.gmra.mxu0 %v624
        %v2587 = vpop.f32.mrf.mxu0
        %v2588 = vadd.f32 %v2475, %v2587
        %2589 = vmatmul.f32.gmra.mxu0 %v628
        %v2590 = vpop.f32.mrf.mxu0
        %v2591 = vadd.f32 %v2478, %v2590
        %2592 = vmatmul.f32.gmra.mxu0 %v632
        %v2593 = vpop.f32.mrf.mxu0
        %v2594 = vadd.f32 %v2481, %v2593
        %2595 = vmatmul.f32.gmra.mxu0 %v636
        %v2596 = vpop.f32.mrf.mxu0
        %v2597 = vadd.f32 %v2484, %v2596
        %2598 = vmatmul.f32.gmra.mxu0 %v640
        %v2599 = vpop.f32.mrf.mxu0
        %v2600 = vadd.f32 %v2487, %v2599
        %2601 = vmatmul.f32.gmra.mxu0 %v644
        %v2602 = vpop.f32.mrf.mxu0
        %v2603 = vadd.f32 %v2490, %v2602
        %2604 = vmatmul.f32.gmra.mxu0 %v648
        %v2605 = vpop.f32.mrf.mxu0
        %v2606 = vadd.f32 %v2493, %v2605
        %2607 = vmatmul.f32.gmra.mxu0 %v652
        %v2608 = vpop.f32.mrf.mxu0
        %v2609 = vadd.f32 %v2496, %v2608
        %2610 = vmatmul.f32.gmra.mxu0 %v656
        %v2611 = vpop.f32.mrf.mxu0
        %v2612 = vadd.f32 %v2499, %v2611
        %2613 = vmatmul.f32.gmra.mxu0 %v660
        %v2614 = vpop.f32.mrf.mxu0
        %v2615 = vadd.f32 %v2502, %v2614
        %2616 = vmatmul.f32.gmra.mxu0 %v664
        %v2617 = vpop.f32.mrf.mxu0
        %v2618 = vadd.f32 %v2505, %v2617
        %2619 = vmatmul.f32.gmra.mxu0 %v668
        %v2620 = vpop.f32.mrf.mxu0
        %v2621 = vadd.f32 %v2508, %v2620
        %2622 = vmatmul.f32.gmra.mxu0 %v672
        %v2623 = vpop.f32.mrf.mxu0
        %v2624 = vadd.f32 %v2511, %v2623
        %2625 = vmatmul.f32.gmra.mxu0 %v676
        %v2626 = vpop.f32.mrf.mxu0
        %v2627 = vadd.f32 %v2514, %v2626
        %2628 = vdwg.mxu0
        %2629 = vmatpush.msra.mxu0 %v933
        %2630 = vmatpush.msra.mxu0 %v929
        %2631 = vmatpush.msra.mxu0 %v925
        %2632 = vmatpush.msra.mxu0 %v921
        %2633 = vmatpush.msra.mxu0 %v917
        %2634 = vmatpush.msra.mxu0 %v913
        %2635 = vmatpush.msra.mxu0 %v909
        %2636 = vmatpush.msra.mxu0 %v905
        %2637 = vmatpush.msra.mxu0 %v901
        %2638 = vmatpush.msra.mxu0 %v897
        %2639 = vmatpush.msra.mxu0 %v893
        %2640 = vmatpush.msra.mxu0 %v889
        %2641 = vmatpush.msra.mxu0 %v885
        %2642 = vmatpush.msra.mxu0 %v881
        %2643 = vmatpush.msra.mxu0 %v877
        %2644 = vmatpush.msra.mxu0 %v873
        %2645 = vmatmul.f32.gmra.mxu0 %v553
        %v2646 = vpop.f32.mrf.mxu0
        %v2647 = vadd.f32 %v2534, %v2646
        %2648 = vmatmul.f32.gmra.mxu0 %v557
        %v2649 = vpop.f32.mrf.mxu0
        %v2650 = vadd.f32 %v2537, %v2649
        %2651 = vmatmul.f32.gmra.mxu0 %v561
        %v2652 = vpop.f32.mrf.mxu0
        %v2653 = vadd.f32 %v2540, %v2652
        %2654 = vmatmul.f32.gmra.mxu0 %v565
        %v2655 = vpop.f32.mrf.mxu0
        %v2656 = vadd.f32 %v2543, %v2655
        %2657 = vmatmul.f32.gmra.mxu0 %v569
        %v2658 = vpop.f32.mrf.mxu0
        %v2659 = vadd.f32 %v2546, %v2658
        %2660 = vmatmul.f32.gmra.mxu0 %v573
        %v2661 = vpop.f32.mrf.mxu0
        %v2662 = vadd.f32 %v2549, %v2661
        %2663 = vmatmul.f32.gmra.mxu0 %v577
        %v2664 = vpop.f32.mrf.mxu0
        %v2665 = vadd.f32 %v2552, %v2664
        %2666 = vmatmul.f32.gmra.mxu0 %v581
        %v2667 = vpop.f32.mrf.mxu0
        %v2668 = vadd.f32 %v2555, %v2667
        %2669 = vmatmul.f32.gmra.mxu0 %v585
        %v2670 = vpop.f32.mrf.mxu0
        %v2671 = vadd.f32 %v2558, %v2670
        %2672 = vmatmul.f32.gmra.mxu0 %v589
        %v2673 = vpop.f32.mrf.mxu0
        %v2674 = vadd.f32 %v2561, %v2673
        %2675 = vmatmul.f32.gmra.mxu0 %v593
        %v2676 = vpop.f32.mrf.mxu0
        %v2677 = vadd.f32 %v2564, %v2676
        %2678 = vmatmul.f32.gmra.mxu0 %v597
        %v2679 = vpop.f32.mrf.mxu0
        %v2680 = vadd.f32 %v2567, %v2679
        %2681 = vmatmul.f32.gmra.mxu0 %v601
        %v2682 = vpop.f32.mrf.mxu0
        %v2683 = vadd.f32 %v2570, %v2682
        %2684 = vmatmul.f32.gmra.mxu0 %v605
        %v2685 = vpop.f32.mrf.mxu0
        %v2686 = vadd.f32 %v2573, %v2685
        %2687 = vmatmul.f32.gmra.mxu0 %v609
        %v2688 = vpop.f32.mrf.mxu0
        %v2689 = vadd.f32 %v2576, %v2688
        %2690 = vmatmul.f32.gmra.mxu0 %v613
        %v2691 = vpop.f32.mrf.mxu0
        %v2692 = vadd.f32 %v2579, %v2691
        %2693 = vmatmul.f32.gmra.mxu0 %v617
        %v2694 = vpop.f32.mrf.mxu0
        %v2695 = vadd.f32 %v2582, %v2694
        %2696 = vmatmul.f32.gmra.mxu0 %v621
        %v2697 = vpop.f32.mrf.mxu0
        %v2698 = vadd.f32 %v2585, %v2697
        %2699 = vmatmul.f32.gmra.mxu0 %v625
        %v2700 = vpop.f32.mrf.mxu0
        %v2701 = vadd.f32 %v2588, %v2700
        %2702 = vmatmul.f32.gmra.mxu0 %v629
        %v2703 = vpop.f32.mrf.mxu0
        %v2704 = vadd.f32 %v2591, %v2703
        %2705 = vmatmul.f32.gmra.mxu0 %v633
        %v2706 = vpop.f32.mrf.mxu0
        %v2707 = vadd.f32 %v2594, %v2706
        %2708 = vmatmul.f32.gmra.mxu0 %v637
        %v2709 = vpop.f32.mrf.mxu0
        %v2710 = vadd.f32 %v2597, %v2709
        %2711 = vmatmul.f32.gmra.mxu0 %v641
        %v2712 = vpop.f32.mrf.mxu0
        %v2713 = vadd.f32 %v2600, %v2712
        %2714 = vmatmul.f32.gmra.mxu0 %v645
        %v2715 = vpop.f32.mrf.mxu0
        %v2716 = vadd.f32 %v2603, %v2715
        %2717 = vmatmul.f32.gmra.mxu0 %v649
        %v2718 = vpop.f32.mrf.mxu0
        %v2719 = vadd.f32 %v2606, %v2718
        %2720 = vmatmul.f32.gmra.mxu0 %v653
        %v2721 = vpop.f32.mrf.mxu0
        %v2722 = vadd.f32 %v2609, %v2721
        %2723 = vmatmul.f32.gmra.mxu0 %v657
        %v2724 = vpop.f32.mrf.mxu0
        %v2725 = vadd.f32 %v2612, %v2724
        %2726 = vmatmul.f32.gmra.mxu0 %v661
        %v2727 = vpop.f32.mrf.mxu0
        %v2728 = vadd.f32 %v2615, %v2727
        %2729 = vmatmul.f32.gmra.mxu0 %v665
        %v2730 = vpop.f32.mrf.mxu0
        %v2731 = vadd.f32 %v2618, %v2730
        %2732 = vmatmul.f32.gmra.mxu0 %v669
        %v2733 = vpop.f32.mrf.mxu0
        %v2734 = vadd.f32 %v2621, %v2733
        %2735 = vmatmul.f32.gmra.mxu0 %v673
        %v2736 = vpop.f32.mrf.mxu0
        %v2737 = vadd.f32 %v2624, %v2736
        %2738 = vmatmul.f32.gmra.mxu0 %v677
        %v2739 = vpop.f32.mrf.mxu0
        %v2740 = vadd.f32 %v2627, %v2739
        %2741 = vdwg.mxu0
        %v2742 = vadd.f32 %v422, %v1291
        %v2743 = vadd.f32 %v423, %v1743
        %v2744 = vadd.f32 %v424, %v2195
        %v2745 = vadd.f32 %v425, %v2647
        %v2746 = vadd.f32 %v426, %v1294
        %v2747 = vadd.f32 %v427, %v1746
        %v2748 = vadd.f32 %v428, %v2198
        %v2749 = vadd.f32 %v429, %v2650
        %v2750 = vadd.f32 %v430, %v1297
        %v2751 = vadd.f32 %v431, %v1749
        %v2752 = vadd.f32 %v432, %v2201
        %v2753 = vadd.f32 %v433, %v2653
        %v2754 = vadd.f32 %v434, %v1300
        %v2755 = vadd.f32 %v435, %v1752
        %v2756 = vadd.f32 %v436, %v2204
        %v2757 = vadd.f32 %v437, %v2656
        %v2758 = vadd.f32 %v438, %v1303
        %v2759 = vadd.f32 %v439, %v1755
        %v2760 = vadd.f32 %v440, %v2207
        %v2761 = vadd.f32 %v441, %v2659
        %v2762 = vadd.f32 %v442, %v1306
        %v2763 = vadd.f32 %v443, %v1758
        %v2764 = vadd.f32 %v444, %v2210
        %v2765 = vadd.f32 %v445, %v2662
        %v2766 = vadd.f32 %v446, %v1309
        %v2767 = vadd.f32 %v447, %v1761
        %v2768 = vadd.f32 %v448, %v2213
        %v2769 = vadd.f32 %v449, %v2665
        %v2770 = vadd.f32 %v450, %v1312
        %v2771 = vadd.f32 %v451, %v1764
        %v2772 = vadd.f32 %v452, %v2216
        %v2773 = vadd.f32 %v453, %v2668
        %v2774 = vadd.f32 %v454, %v1315
        %v2775 = vadd.f32 %v455, %v1767
        %v2776 = vadd.f32 %v456, %v2219
        %v2777 = vadd.f32 %v457, %v2671
        %v2778 = vadd.f32 %v458, %v1318
        %v2779 = vadd.f32 %v459, %v1770
        %v2780 = vadd.f32 %v460, %v2222
        %v2781 = vadd.f32 %v461, %v2674
        %v2782 = vadd.f32 %v462, %v1321
        %v2783 = vadd.f32 %v463, %v1773
        %v2784 = vadd.f32 %v464, %v2225
        %v2785 = vadd.f32 %v465, %v2677
        %v2786 = vadd.f32 %v466, %v1324
        %v2787 = vadd.f32 %v467, %v1776
        %v2788 = vadd.f32 %v468, %v2228
        %v2789 = vadd.f32 %v469, %v2680
        %v2790 = vadd.f32 %v470, %v1327
        %v2791 = vadd.f32 %v471, %v1779
        %v2792 = vadd.f32 %v472, %v2231
        %v2793 = vadd.f32 %v473, %v2683
        %v2794 = vadd.f32 %v474, %v1330
        %v2795 = vadd.f32 %v475, %v1782
        %v2796 = vadd.f32 %v476, %v2234
        %v2797 = vadd.f32 %v477, %v2686
        %v2798 = vadd.f32 %v478, %v1333
        %v2799 = vadd.f32 %v479, %v1785
        %v2800 = vadd.f32 %v480, %v2237
        %v2801 = vadd.f32 %v481, %v2689
        %v2802 = vadd.f32 %v482, %v1336
        %v2803 = vadd.f32 %v483, %v1788
        %v2804 = vadd.f32 %v484, %v2240
        %v2805 = vadd.f32 %v485, %v2692
        %v2806 = vadd.f32 %v486, %v1339
        %v2807 = vadd.f32 %v487, %v1791
        %v2808 = vadd.f32 %v488, %v2243
        %v2809 = vadd.f32 %v489, %v2695
        %v2810 = vadd.f32 %v490, %v1342
        %v2811 = vadd.f32 %v491, %v1794
        %v2812 = vadd.f32 %v492, %v2246
        %v2813 = vadd.f32 %v493, %v2698
        %v2814 = vadd.f32 %v494, %v1345
        %v2815 = vadd.f32 %v495, %v1797
        %v2816 = vadd.f32 %v496, %v2249
        %v2817 = vadd.f32 %v497, %v2701
        %v2818 = vadd.f32 %v498, %v1348
        %v2819 = vadd.f32 %v499, %v1800
        %v2820 = vadd.f32 %v500, %v2252
        %v2821 = vadd.f32 %v501, %v2704
        %v2822 = vadd.f32 %v502, %v1351
        %v2823 = vadd.f32 %v503, %v1803
        %v2824 = vadd.f32 %v504, %v2255
        %v2825 = vadd.f32 %v505, %v2707
        %v2826 = vadd.f32 %v506, %v1354
        %v2827 = vadd.f32 %v507, %v1806
        %v2828 = vadd.f32 %v508, %v2258
        %v2829 = vadd.f32 %v509, %v2710
        %v2830 = vadd.f32 %v510, %v1357
        %v2831 = vadd.f32 %v511, %v1809
        %v2832 = vadd.f32 %v512, %v2261
        %v2833 = vadd.f32 %v513, %v2713
        %v2834 = vadd.f32 %v514, %v1360
        %v2835 = vadd.f32 %v515, %v1812
        %v2836 = vadd.f32 %v516, %v2264
        %v2837 = vadd.f32 %v517, %v2716
        %v2838 = vadd.f32 %v518, %v1363
        %v2839 = vadd.f32 %v519, %v1815
        %v2840 = vadd.f32 %v520, %v2267
        %v2841 = vadd.f32 %v521, %v2719
        %v2842 = vadd.f32 %v522, %v1366
        %v2843 = vadd.f32 %v523, %v1818
        %v2844 = vadd.f32 %v524, %v2270
        %v2845 = vadd.f32 %v525, %v2722
        %v2846 = vadd.f32 %v526, %v1369
        %v2847 = vadd.f32 %v527, %v1821
        %v2848 = vadd.f32 %v528, %v2273
        %v2849 = vadd.f32 %v529, %v2725
        %v2850 = vadd.f32 %v530, %v1372
        %v2851 = vadd.f32 %v531, %v1824
        %v2852 = vadd.f32 %v532, %v2276
        %v2853 = vadd.f32 %v533, %v2728
        %v2854 = vadd.f32 %v534, %v1375
        %v2855 = vadd.f32 %v535, %v1827
        %v2856 = vadd.f32 %v536, %v2279
        %v2857 = vadd.f32 %v537, %v2731
        %v2858 = vadd.f32 %v538, %v1378
        %v2859 = vadd.f32 %v539, %v1830
        %v2860 = vadd.f32 %v540, %v2282
        %v2861 = vadd.f32 %v541, %v2734
        %v2862 = vadd.f32 %v542, %v1381
        %v2863 = vadd.f32 %v543, %v1833
        %v2864 = vadd.f32 %v544, %v2285
        %v2865 = vadd.f32 %v545, %v2737
        %v2866 = vadd.f32 %v546, %v1384
        %v2867 = vadd.f32 %v547, %v1836
        %v2868 = vadd.f32 %v548, %v2288
        %v2869 = vadd.f32 %v549, %v2740
        %2870 = vst [vmem:[#allocation2] sm:$0xff] %v2742
        %2871 = vst [vmem:[#allocation2 + $0x8] sm:$0xff] %v2743
        %2872 = vst [vmem:[#allocation2 + $0x10] sm:$0xff] %v2744
        %2873 = vst [vmem:[#allocation2 + $0x18] sm:$0xff] %v2745
        %2874 = vst [vmem:[#allocation2 + $0x20] sm:$0xff] %v2746
        %2875 = vst [vmem:[#allocation2 + $0x28] sm:$0xff] %v2747
        %2876 = vst [vmem:[#allocation2 + $0x30] sm:$0xff] %v2748
        %2877 = vst [vmem:[#allocation2 + $0x38] sm:$0xff] %v2749
        %2878 = vst [vmem:[#allocation2 + $0x40] sm:$0xff] %v2750
        %2879 = vst [vmem:[#allocation2 + $0x48] sm:$0xff] %v2751
        %2880 = vst [vmem:[#allocation2 + $0x50] sm:$0xff] %v2752
        %2881 = vst [vmem:[#allocation2 + $0x58] sm:$0xff] %v2753
        %2882 = vst [vmem:[#allocation2 + $0x60] sm:$0xff] %v2754
        %2883 = vst [vmem:[#allocation2 + $0x68] sm:$0xff] %v2755
        %2884 = vst [vmem:[#allocation2 + $0x70] sm:$0xff] %v2756
        %2885 = vst [vmem:[#allocation2 + $0x78] sm:$0xff] %v2757
        %2886 = vst [vmem:[#allocation2 + $0x80] sm:$0xff] %v2758
        %2887 = vst [vmem:[#allocation2 + $0x88] sm:$0xff] %v2759
        %2888 = vst [vmem:[#allocation2 + $0x90] sm:$0xff] %v2760
        %2889 = vst [vmem:[#allocation2 + $0x98] sm:$0xff] %v2761
        %2890 = vst [vmem:[#allocation2 + $0xa0] sm:$0xff] %v2762
        %2891 = vst [vmem:[#allocation2 + $0xa8] sm:$0xff] %v2763
        %2892 = vst [vmem:[#allocation2 + $0xb0] sm:$0xff] %v2764
        %2893 = vst [vmem:[#allocation2 + $0xb8] sm:$0xff] %v2765
        %2894 = vst [vmem:[#allocation2 + $0xc0] sm:$0xff] %v2766
        %2895 = vst [vmem:[#allocation2 + $0xc8] sm:$0xff] %v2767
        %2896 = vst [vmem:[#allocation2 + $0xd0] sm:$0xff] %v2768
        %2897 = vst [vmem:[#allocation2 + $0xd8] sm:$0xff] %v2769
        %2898 = vst [vmem:[#allocation2 + $0xe0] sm:$0xff] %v2770
        %2899 = vst [vmem:[#allocation2 + $0xe8] sm:$0xff] %v2771
        %2900 = vst [vmem:[#allocation2 + $0xf0] sm:$0xff] %v2772
        %2901 = vst [vmem:[#allocation2 + $0xf8] sm:$0xff] %v2773
        %2902 = vst [vmem:[#allocation2 + $0x100] sm:$0xff] %v2774
        %2903 = vst [vmem:[#allocation2 + $0x108] sm:$0xff] %v2775
        %2904 = vst [vmem:[#allocation2 + $0x110] sm:$0xff] %v2776
        %2905 = vst [vmem:[#allocation2 + $0x118] sm:$0xff] %v2777
        %2906 = vst [vmem:[#allocation2 + $0x120] sm:$0xff] %v2778
        %2907 = vst [vmem:[#allocation2 + $0x128] sm:$0xff] %v2779
        %2908 = vst [vmem:[#allocation2 + $0x130] sm:$0xff] %v2780
        %2909 = vst [vmem:[#allocation2 + $0x138] sm:$0xff] %v2781
        %2910 = vst [vmem:[#allocation2 + $0x140] sm:$0xff] %v2782
        %2911 = vst [vmem:[#allocation2 + $0x148] sm:$0xff] %v2783
        %2912 = vst [vmem:[#allocation2 + $0x150] sm:$0xff] %v2784
        %2913 = vst [vmem:[#allocation2 + $0x158] sm:$0xff] %v2785
        %2914 = vst [vmem:[#allocation2 + $0x160] sm:$0xff] %v2786
        %2915 = vst [vmem:[#allocation2 + $0x168] sm:$0xff] %v2787
        %2916 = vst [vmem:[#allocation2 + $0x170] sm:$0xff] %v2788
        %2917 = vst [vmem:[#allocation2 + $0x178] sm:$0xff] %v2789
        %2918 = vst [vmem:[#allocation2 + $0x180] sm:$0xff] %v2790
        %2919 = vst [vmem:[#allocation2 + $0x188] sm:$0xff] %v2791
        %2920 = vst [vmem:[#allocation2 + $0x190] sm:$0xff] %v2792
        %2921 = vst [vmem:[#allocation2 + $0x198] sm:$0xff] %v2793
        %2922 = vst [vmem:[#allocation2 + $0x1a0] sm:$0xff] %v2794
        %2923 = vst [vmem:[#allocation2 + $0x1a8] sm:$0xff] %v2795
        %2924 = vst [vmem:[#allocation2 + $0x1b0] sm:$0xff] %v2796
        %2925 = vst [vmem:[#allocation2 + $0x1b8] sm:$0xff] %v2797
        %2926 = vst [vmem:[#allocation2 + $0x1c0] sm:$0xff] %v2798
        %2927 = vst [vmem:[#allocation2 + $0x1c8] sm:$0xff] %v2799
        %2928 = vst [vmem:[#allocation2 + $0x1d0] sm:$0xff] %v2800
        %2929 = vst [vmem:[#allocation2 + $0x1d8] sm:$0xff] %v2801
        %2930 = vst [vmem:[#allocation2 + $0x1e0] sm:$0xff] %v2802
        %2931 = vst [vmem:[#allocation2 + $0x1e8] sm:$0xff] %v2803
        %2932 = vst [vmem:[#allocation2 + $0x1f0] sm:$0xff] %v2804
        %2933 = vst [vmem:[#allocation2 + $0x1f8] sm:$0xff] %v2805
        %2934 = vst [vmem:[#allocation2 + $0x200] sm:$0xff] %v2806
        %2935 = vst [vmem:[#allocation2 + $0x208] sm:$0xff] %v2807
        %2936 = vst [vmem:[#allocation2 + $0x210] sm:$0xff] %v2808
        %2937 = vst [vmem:[#allocation2 + $0x218] sm:$0xff] %v2809
        %2938 = vst [vmem:[#allocation2 + $0x220] sm:$0xff] %v2810
        %2939 = vst [vmem:[#allocation2 + $0x228] sm:$0xff] %v2811
        %2940 = vst [vmem:[#allocation2 + $0x230] sm:$0xff] %v2812
        %2941 = vst [vmem:[#allocation2 + $0x238] sm:$0xff] %v2813
        %2942 = vst [vmem:[#allocation2 + $0x240] sm:$0xff] %v2814
        %2943 = vst [vmem:[#allocation2 + $0x248] sm:$0xff] %v2815
        %2944 = vst [vmem:[#allocation2 + $0x250] sm:$0xff] %v2816
        %2945 = vst [vmem:[#allocation2 + $0x258] sm:$0xff] %v2817
        %2946 = vst [vmem:[#allocation2 + $0x260] sm:$0xff] %v2818
        %2947 = vst [vmem:[#allocation2 + $0x268] sm:$0xff] %v2819
        %2948 = vst [vmem:[#allocation2 + $0x270] sm:$0xff] %v2820
        %2949 = vst [vmem:[#allocation2 + $0x278] sm:$0xff] %v2821
        %2950 = vst [vmem:[#allocation2 + $0x280] sm:$0xff] %v2822
        %2951 = vst [vmem:[#allocation2 + $0x288] sm:$0xff] %v2823
        %2952 = vst [vmem:[#allocation2 + $0x290] sm:$0xff] %v2824
        %2953 = vst [vmem:[#allocation2 + $0x298] sm:$0xff] %v2825
        %2954 = vst [vmem:[#allocation2 + $0x2a0] sm:$0xff] %v2826
        %2955 = vst [vmem:[#allocation2 + $0x2a8] sm:$0xff] %v2827
        %2956 = vst [vmem:[#allocation2 + $0x2b0] sm:$0xff] %v2828
        %2957 = vst [vmem:[#allocation2 + $0x2b8] sm:$0xff] %v2829
        %2958 = vst [vmem:[#allocation2 + $0x2c0] sm:$0xff] %v2830
        %2959 = vst [vmem:[#allocation2 + $0x2c8] sm:$0xff] %v2831
        %2960 = vst [vmem:[#allocation2 + $0x2d0] sm:$0xff] %v2832
        %2961 = vst [vmem:[#allocation2 + $0x2d8] sm:$0xff] %v2833
        %2962 = vst [vmem:[#allocation2 + $0x2e0] sm:$0xff] %v2834
        %2963 = vst [vmem:[#allocation2 + $0x2e8] sm:$0xff] %v2835
        %2964 = vst [vmem:[#allocation2 + $0x2f0] sm:$0xff] %v2836
        %2965 = vst [vmem:[#allocation2 + $0x2f8] sm:$0xff] %v2837
        %2966 = vst [vmem:[#allocation2 + $0x300] sm:$0xff] %v2838
        %2967 = vst [vmem:[#allocation2 + $0x308] sm:$0xff] %v2839
        %2968 = vst [vmem:[#allocation2 + $0x310] sm:$0xff] %v2840
        %2969 = vst [vmem:[#allocation2 + $0x318] sm:$0xff] %v2841
        %2970 = vst [vmem:[#allocation2 + $0x320] sm:$0xff] %v2842
        %2971 = vst [vmem:[#allocation2 + $0x328] sm:$0xff] %v2843
        %2972 = vst [vmem:[#allocation2 + $0x330] sm:$0xff] %v2844
        %2973 = vst [vmem:[#allocation2 + $0x338] sm:$0xff] %v2845
        %2974 = vst [vmem:[#allocation2 + $0x340] sm:$0xff] %v2846
        %2975 = vst [vmem:[#allocation2 + $0x348] sm:$0xff] %v2847
        %2976 = vst [vmem:[#allocation2 + $0x350] sm:$0xff] %v2848
        %2977 = vst [vmem:[#allocation2 + $0x358] sm:$0xff] %v2849
        %2978 = vst [vmem:[#allocation2 + $0x360] sm:$0xff] %v2850
        %2979 = vst [vmem:[#allocation2 + $0x368] sm:$0xff] %v2851
        %2980 = vst [vmem:[#allocation2 + $0x370] sm:$0xff] %v2852
        %2981 = vst [vmem:[#allocation2 + $0x378] sm:$0xff] %v2853
        %2982 = vst [vmem:[#allocation2 + $0x380] sm:$0xff] %v2854
        %2983 = vst [vmem:[#allocation2 + $0x388] sm:$0xff] %v2855
        %2984 = vst [vmem:[#allocation2 + $0x390] sm:$0xff] %v2856
        %2985 = vst [vmem:[#allocation2 + $0x398] sm:$0xff] %v2857
        %2986 = vst [vmem:[#allocation2 + $0x3a0] sm:$0xff] %v2858
        %2987 = vst [vmem:[#allocation2 + $0x3a8] sm:$0xff] %v2859
        %2988 = vst [vmem:[#allocation2 + $0x3b0] sm:$0xff] %v2860
        %2989 = vst [vmem:[#allocation2 + $0x3b8] sm:$0xff] %v2861
        %2990 = vst [vmem:[#allocation2 + $0x3c0] sm:$0xff] %v2862
        %2991 = vst [vmem:[#allocation2 + $0x3c8] sm:$0xff] %v2863
        %2992 = vst [vmem:[#allocation2 + $0x3d0] sm:$0xff] %v2864
        %2993 = vst [vmem:[#allocation2 + $0x3d8] sm:$0xff] %v2865
        %2994 = vst [vmem:[#allocation2 + $0x3e0] sm:$0xff] %v2866
        %2995 = vst [vmem:[#allocation2 + $0x3e8] sm:$0xff] %v2867
        %2996 = vst [vmem:[#allocation2 + $0x3f0] sm:$0xff] %v2868
        %2997 = vst [vmem:[#allocation2 + $0x3f8] sm:$0xff] %v2869
        // Predicated region
        $region49: #{tpu_custom_call.1} parent=31 // pred_check
          %p2998 = pneg %p290
        $region50: #{tpu_custom_call.1} parent=31 // pred_check_branch
          %3000 = sbr.rel (%p2998) target = $region52
        $region51: #{tpu_custom_call.1} parent=31 // pred_region
          %v3001 = vld [vmem:[#allocation2] sm:$0xff]
          %v3002 = vld [vmem:[#allocation2 + $0x8] sm:$0xff]
          %v3003 = vld [vmem:[#allocation2 + $0x10] sm:$0xff]
          %v3004 = vld [vmem:[#allocation2 + $0x18] sm:$0xff]
          %v3005 = vld [vmem:[#allocation2 + $0x20] sm:$0xff]
          %v3006 = vld [vmem:[#allocation2 + $0x28] sm:$0xff]
          %v3007 = vld [vmem:[#allocation2 + $0x30] sm:$0xff]
          %v3008 = vld [vmem:[#allocation2 + $0x38] sm:$0xff]
          %v3009 = vld [vmem:[#allocation2 + $0x40] sm:$0xff]
          %v3010 = vld [vmem:[#allocation2 + $0x48] sm:$0xff]
          %v3011 = vld [vmem:[#allocation2 + $0x50] sm:$0xff]
          %v3012 = vld [vmem:[#allocation2 + $0x58] sm:$0xff]
          %v3013 = vld [vmem:[#allocation2 + $0x60] sm:$0xff]
          %v3014 = vld [vmem:[#allocation2 + $0x68] sm:$0xff]
          %v3015 = vld [vmem:[#allocation2 + $0x70] sm:$0xff]
          %v3016 = vld [vmem:[#allocation2 + $0x78] sm:$0xff]
          %v3017 = vld [vmem:[#allocation2 + $0x80] sm:$0xff]
          %v3018 = vld [vmem:[#allocation2 + $0x88] sm:$0xff]
          %v3019 = vld [vmem:[#allocation2 + $0x90] sm:$0xff]
          %v3020 = vld [vmem:[#allocation2 + $0x98] sm:$0xff]
          %v3021 = vld [vmem:[#allocation2 + $0xa0] sm:$0xff]
          %v3022 = vld [vmem:[#allocation2 + $0xa8] sm:$0xff]
          %v3023 = vld [vmem:[#allocation2 + $0xb0] sm:$0xff]
          %v3024 = vld [vmem:[#allocation2 + $0xb8] sm:$0xff]
          %v3025 = vld [vmem:[#allocation2 + $0xc0] sm:$0xff]
          %v3026 = vld [vmem:[#allocation2 + $0xc8] sm:$0xff]
          %v3027 = vld [vmem:[#allocation2 + $0xd0] sm:$0xff]
          %v3028 = vld [vmem:[#allocation2 + $0xd8] sm:$0xff]
          %v3029 = vld [vmem:[#allocation2 + $0xe0] sm:$0xff]
          %v3030 = vld [vmem:[#allocation2 + $0xe8] sm:$0xff]
          %v3031 = vld [vmem:[#allocation2 + $0xf0] sm:$0xff]
          %v3032 = vld [vmem:[#allocation2 + $0xf8] sm:$0xff]
          %v3033 = vld [vmem:[#allocation2 + $0x100] sm:$0xff]
          %v3034 = vld [vmem:[#allocation2 + $0x108] sm:$0xff]
          %v3035 = vld [vmem:[#allocation2 + $0x110] sm:$0xff]
          %v3036 = vld [vmem:[#allocation2 + $0x118] sm:$0xff]
          %v3037 = vld [vmem:[#allocation2 + $0x120] sm:$0xff]
          %v3038 = vld [vmem:[#allocation2 + $0x128] sm:$0xff]
          %v3039 = vld [vmem:[#allocation2 + $0x130] sm:$0xff]
          %v3040 = vld [vmem:[#allocation2 + $0x138] sm:$0xff]
          %v3041 = vld [vmem:[#allocation2 + $0x140] sm:$0xff]
          %v3042 = vld [vmem:[#allocation2 + $0x148] sm:$0xff]
          %v3043 = vld [vmem:[#allocation2 + $0x150] sm:$0xff]
          %v3044 = vld [vmem:[#allocation2 + $0x158] sm:$0xff]
          %v3045 = vld [vmem:[#allocation2 + $0x160] sm:$0xff]
          %v3046 = vld [vmem:[#allocation2 + $0x168] sm:$0xff]
          %v3047 = vld [vmem:[#allocation2 + $0x170] sm:$0xff]
          %v3048 = vld [vmem:[#allocation2 + $0x178] sm:$0xff]
          %v3049 = vld [vmem:[#allocation2 + $0x180] sm:$0xff]
          %v3050 = vld [vmem:[#allocation2 + $0x188] sm:$0xff]
          %v3051 = vld [vmem:[#allocation2 + $0x190] sm:$0xff]
          %v3052 = vld [vmem:[#allocation2 + $0x198] sm:$0xff]
          %v3053 = vld [vmem:[#allocation2 + $0x1a0] sm:$0xff]
          %v3054 = vld [vmem:[#allocation2 + $0x1a8] sm:$0xff]
          %v3055 = vld [vmem:[#allocation2 + $0x1b0] sm:$0xff]
          %v3056 = vld [vmem:[#allocation2 + $0x1b8] sm:$0xff]
          %v3057 = vld [vmem:[#allocation2 + $0x1c0] sm:$0xff]
          %v3058 = vld [vmem:[#allocation2 + $0x1c8] sm:$0xff]
          %v3059 = vld [vmem:[#allocation2 + $0x1d0] sm:$0xff]
          %v3060 = vld [vmem:[#allocation2 + $0x1d8] sm:$0xff]
          %v3061 = vld [vmem:[#allocation2 + $0x1e0] sm:$0xff]
          %v3062 = vld [vmem:[#allocation2 + $0x1e8] sm:$0xff]
          %v3063 = vld [vmem:[#allocation2 + $0x1f0] sm:$0xff]
          %v3064 = vld [vmem:[#allocation2 + $0x1f8] sm:$0xff]
          %v3065 = vld [vmem:[#allocation2 + $0x200] sm:$0xff]
          %v3066 = vld [vmem:[#allocation2 + $0x208] sm:$0xff]
          %v3067 = vld [vmem:[#allocation2 + $0x210] sm:$0xff]
          %v3068 = vld [vmem:[#allocation2 + $0x218] sm:$0xff]
          %v3069 = vld [vmem:[#allocation2 + $0x220] sm:$0xff]
          %v3070 = vld [vmem:[#allocation2 + $0x228] sm:$0xff]
          %v3071 = vld [vmem:[#allocation2 + $0x230] sm:$0xff]
          %v3072 = vld [vmem:[#allocation2 + $0x238] sm:$0xff]
          %v3073 = vld [vmem:[#allocation2 + $0x240] sm:$0xff]
          %v3074 = vld [vmem:[#allocation2 + $0x248] sm:$0xff]
          %v3075 = vld [vmem:[#allocation2 + $0x250] sm:$0xff]
          %v3076 = vld [vmem:[#allocation2 + $0x258] sm:$0xff]
          %v3077 = vld [vmem:[#allocation2 + $0x260] sm:$0xff]
          %v3078 = vld [vmem:[#allocation2 + $0x268] sm:$0xff]
          %v3079 = vld [vmem:[#allocation2 + $0x270] sm:$0xff]
          %v3080 = vld [vmem:[#allocation2 + $0x278] sm:$0xff]
          %v3081 = vld [vmem:[#allocation2 + $0x280] sm:$0xff]
          %v3082 = vld [vmem:[#allocation2 + $0x288] sm:$0xff]
          %v3083 = vld [vmem:[#allocation2 + $0x290] sm:$0xff]
          %v3084 = vld [vmem:[#allocation2 + $0x298] sm:$0xff]
          %v3085 = vld [vmem:[#allocation2 + $0x2a0] sm:$0xff]
          %v3086 = vld [vmem:[#allocation2 + $0x2a8] sm:$0xff]
          %v3087 = vld [vmem:[#allocation2 + $0x2b0] sm:$0xff]
          %v3088 = vld [vmem:[#allocation2 + $0x2b8] sm:$0xff]
          %v3089 = vld [vmem:[#allocation2 + $0x2c0] sm:$0xff]
          %v3090 = vld [vmem:[#allocation2 + $0x2c8] sm:$0xff]
          %v3091 = vld [vmem:[#allocation2 + $0x2d0] sm:$0xff]
          %v3092 = vld [vmem:[#allocation2 + $0x2d8] sm:$0xff]
          %v3093 = vld [vmem:[#allocation2 + $0x2e0] sm:$0xff]
          %v3094 = vld [vmem:[#allocation2 + $0x2e8] sm:$0xff]
          %v3095 = vld [vmem:[#allocation2 + $0x2f0] sm:$0xff]
          %v3096 = vld [vmem:[#allocation2 + $0x2f8] sm:$0xff]
          %v3097 = vld [vmem:[#allocation2 + $0x300] sm:$0xff]
          %v3098 = vld [vmem:[#allocation2 + $0x308] sm:$0xff]
          %v3099 = vld [vmem:[#allocation2 + $0x310] sm:$0xff]
          %v3100 = vld [vmem:[#allocation2 + $0x318] sm:$0xff]
          %v3101 = vld [vmem:[#allocation2 + $0x320] sm:$0xff]
          %v3102 = vld [vmem:[#allocation2 + $0x328] sm:$0xff]
          %v3103 = vld [vmem:[#allocation2 + $0x330] sm:$0xff]
          %v3104 = vld [vmem:[#allocation2 + $0x338] sm:$0xff]
          %v3105 = vld [vmem:[#allocation2 + $0x340] sm:$0xff]
          %v3106 = vld [vmem:[#allocation2 + $0x348] sm:$0xff]
          %v3107 = vld [vmem:[#allocation2 + $0x350] sm:$0xff]
          %v3108 = vld [vmem:[#allocation2 + $0x358] sm:$0xff]
          %v3109 = vld [vmem:[#allocation2 + $0x360] sm:$0xff]
          %v3110 = vld [vmem:[#allocation2 + $0x368] sm:$0xff]
          %v3111 = vld [vmem:[#allocation2 + $0x370] sm:$0xff]
          %v3112 = vld [vmem:[#allocation2 + $0x378] sm:$0xff]
          %v3113 = vld [vmem:[#allocation2 + $0x380] sm:$0xff]
          %v3114 = vld [vmem:[#allocation2 + $0x388] sm:$0xff]
          %v3115 = vld [vmem:[#allocation2 + $0x390] sm:$0xff]
          %v3116 = vld [vmem:[#allocation2 + $0x398] sm:$0xff]
          %v3117 = vld [vmem:[#allocation2 + $0x3a0] sm:$0xff]
          %v3118 = vld [vmem:[#allocation2 + $0x3a8] sm:$0xff]
          %v3119 = vld [vmem:[#allocation2 + $0x3b0] sm:$0xff]
          %v3120 = vld [vmem:[#allocation2 + $0x3b8] sm:$0xff]
          %v3121 = vld [vmem:[#allocation2 + $0x3c0] sm:$0xff]
          %v3122 = vld [vmem:[#allocation2 + $0x3c8] sm:$0xff]
          %v3123 = vld [vmem:[#allocation2 + $0x3d0] sm:$0xff]
          %v3124 = vld [vmem:[#allocation2 + $0x3d8] sm:$0xff]
          %v3125 = vld [vmem:[#allocation2 + $0x3e0] sm:$0xff]
          %v3126 = vld [vmem:[#allocation2 + $0x3e8] sm:$0xff]
          %v3127 = vld [vmem:[#allocation2 + $0x3f0] sm:$0xff]
          %v3128 = vld [vmem:[#allocation2 + $0x3f8] sm:$0xff]
          %v3129 = vld [vmem:[%s254] sm:$0xf]
          %v3131 = vperm.slane %v3129, 0
          %v3132 = vperm.slane %v3129, 1
          %v3133 = vperm.slane %v3129, 2
          %v3134 = vperm.slane %v3129, 3
          %v3139 = vadd.f32 %v3001, %v3131
          %v3140 = vadd.f32 %v3002, %v3132
          %v3141 = vadd.f32 %v3003, %v3133
          %v3142 = vadd.f32 %v3004, %v3134
          %v3143 = vadd.f32 %v3005, %v3131
          %v3144 = vadd.f32 %v3006, %v3132
          %v3145 = vadd.f32 %v3007, %v3133
          %v3146 = vadd.f32 %v3008, %v3134
          %v3147 = vadd.f32 %v3009, %v3131
          %v3148 = vadd.f32 %v3010, %v3132
          %v3149 = vadd.f32 %v3011, %v3133
          %v3150 = vadd.f32 %v3012, %v3134
          %v3151 = vadd.f32 %v3013, %v3131
          %v3152 = vadd.f32 %v3014, %v3132
          %v3153 = vadd.f32 %v3015, %v3133
          %v3154 = vadd.f32 %v3016, %v3134
          %v3155 = vadd.f32 %v3017, %v3131
          %v3156 = vadd.f32 %v3018, %v3132
          %v3157 = vadd.f32 %v3019, %v3133
          %v3158 = vadd.f32 %v3020, %v3134
          %v3159 = vadd.f32 %v3021, %v3131
          %v3160 = vadd.f32 %v3022, %v3132
          %v3161 = vadd.f32 %v3023, %v3133
          %v3162 = vadd.f32 %v3024, %v3134
          %v3163 = vadd.f32 %v3025, %v3131
          %v3164 = vadd.f32 %v3026, %v3132
          %v3165 = vadd.f32 %v3027, %v3133
          %v3166 = vadd.f32 %v3028, %v3134
          %v3167 = vadd.f32 %v3029, %v3131
          %v3168 = vadd.f32 %v3030, %v3132
          %v3169 = vadd.f32 %v3031, %v3133
          %v3170 = vadd.f32 %v3032, %v3134
          %v3171 = vadd.f32 %v3033, %v3131
          %v3172 = vadd.f32 %v3034, %v3132
          %v3173 = vadd.f32 %v3035, %v3133
          %v3174 = vadd.f32 %v3036, %v3134
          %v3175 = vadd.f32 %v3037, %v3131
          %v3176 = vadd.f32 %v3038, %v3132
          %v3177 = vadd.f32 %v3039, %v3133
          %v3178 = vadd.f32 %v3040, %v3134
          %v3179 = vadd.f32 %v3041, %v3131
          %v3180 = vadd.f32 %v3042, %v3132
          %v3181 = vadd.f32 %v3043, %v3133
          %v3182 = vadd.f32 %v3044, %v3134
          %v3183 = vadd.f32 %v3045, %v3131
          %v3184 = vadd.f32 %v3046, %v3132
          %v3185 = vadd.f32 %v3047, %v3133
          %v3186 = vadd.f32 %v3048, %v3134
          %v3187 = vadd.f32 %v3049, %v3131
          %v3188 = vadd.f32 %v3050, %v3132
          %v3189 = vadd.f32 %v3051, %v3133
          %v3190 = vadd.f32 %v3052, %v3134
          %v3191 = vadd.f32 %v3053, %v3131
          %v3192 = vadd.f32 %v3054, %v3132
          %v3193 = vadd.f32 %v3055, %v3133
          %v3194 = vadd.f32 %v3056, %v3134
          %v3195 = vadd.f32 %v3057, %v3131
          %v3196 = vadd.f32 %v3058, %v3132
          %v3197 = vadd.f32 %v3059, %v3133
          %v3198 = vadd.f32 %v3060, %v3134
          %v3199 = vadd.f32 %v3061, %v3131
          %v3200 = vadd.f32 %v3062, %v3132
          %v3201 = vadd.f32 %v3063, %v3133
          %v3202 = vadd.f32 %v3064, %v3134
          %v3203 = vadd.f32 %v3065, %v3131
          %v3204 = vadd.f32 %v3066, %v3132
          %v3205 = vadd.f32 %v3067, %v3133
          %v3206 = vadd.f32 %v3068, %v3134
          %v3207 = vadd.f32 %v3069, %v3131
          %v3208 = vadd.f32 %v3070, %v3132
          %v3209 = vadd.f32 %v3071, %v3133
          %v3210 = vadd.f32 %v3072, %v3134
          %v3211 = vadd.f32 %v3073, %v3131
          %v3212 = vadd.f32 %v3074, %v3132
          %v3213 = vadd.f32 %v3075, %v3133
          %v3214 = vadd.f32 %v3076, %v3134
          %v3215 = vadd.f32 %v3077, %v3131
          %v3216 = vadd.f32 %v3078, %v3132
          %v3217 = vadd.f32 %v3079, %v3133
          %v3218 = vadd.f32 %v3080, %v3134
          %v3219 = vadd.f32 %v3081, %v3131
          %v3220 = vadd.f32 %v3082, %v3132
          %v3221 = vadd.f32 %v3083, %v3133
          %v3222 = vadd.f32 %v3084, %v3134
          %v3223 = vadd.f32 %v3085, %v3131
          %v3224 = vadd.f32 %v3086, %v3132
          %v3225 = vadd.f32 %v3087, %v3133
          %v3226 = vadd.f32 %v3088, %v3134
          %v3227 = vadd.f32 %v3089, %v3131
          %v3228 = vadd.f32 %v3090, %v3132
          %v3229 = vadd.f32 %v3091, %v3133
          %v3230 = vadd.f32 %v3092, %v3134
          %v3231 = vadd.f32 %v3093, %v3131
          %v3232 = vadd.f32 %v3094, %v3132
          %v3233 = vadd.f32 %v3095, %v3133
          %v3234 = vadd.f32 %v3096, %v3134
          %v3235 = vadd.f32 %v3097, %v3131
          %v3236 = vadd.f32 %v3098, %v3132
          %v3237 = vadd.f32 %v3099, %v3133
          %v3238 = vadd.f32 %v3100, %v3134
          %v3239 = vadd.f32 %v3101, %v3131
          %v3240 = vadd.f32 %v3102, %v3132
          %v3241 = vadd.f32 %v3103, %v3133
          %v3242 = vadd.f32 %v3104, %v3134
          %v3243 = vadd.f32 %v3105, %v3131
          %v3244 = vadd.f32 %v3106, %v3132
          %v3245 = vadd.f32 %v3107, %v3133
          %v3246 = vadd.f32 %v3108, %v3134
          %v3247 = vadd.f32 %v3109, %v3131
          %v3248 = vadd.f32 %v3110, %v3132
          %v3249 = vadd.f32 %v3111, %v3133
          %v3250 = vadd.f32 %v3112, %v3134
          %v3251 = vadd.f32 %v3113, %v3131
          %v3252 = vadd.f32 %v3114, %v3132
          %v3253 = vadd.f32 %v3115, %v3133
          %v3254 = vadd.f32 %v3116, %v3134
          %v3255 = vadd.f32 %v3117, %v3131
          %v3256 = vadd.f32 %v3118, %v3132
          %v3257 = vadd.f32 %v3119, %v3133
          %v3258 = vadd.f32 %v3120, %v3134
          %v3259 = vadd.f32 %v3121, %v3131
          %v3260 = vadd.f32 %v3122, %v3132
          %v3261 = vadd.f32 %v3123, %v3133
          %v3262 = vadd.f32 %v3124, %v3134
          %v3263 = vadd.f32 %v3125, %v3131
          %v3264 = vadd.f32 %v3126, %v3132
          %v3265 = vadd.f32 %v3127, %v3133
          %v3266 = vadd.f32 %v3128, %v3134
          %3267 = vst [vmem:[%s282] sm:$0xff] %v3139
          %3268 = vst [vmem:[%s282 + $0x8] sm:$0xff] %v3140
          %3269 = vst [vmem:[%s282 + $0x10] sm:$0xff] %v3141
          %3270 = vst [vmem:[%s282 + $0x18] sm:$0xff] %v3142
          %3271 = vst [vmem:[%s282 + $0x20] sm:$0xff] %v3143
          %3272 = vst [vmem:[%s282 + $0x28] sm:$0xff] %v3144
          %3273 = vst [vmem:[%s282 + $0x30] sm:$0xff] %v3145
          %3274 = vst [vmem:[%s282 + $0x38] sm:$0xff] %v3146
          %3275 = vst [vmem:[%s282 + $0x40] sm:$0xff] %v3147
          %3276 = vst [vmem:[%s282 + $0x48] sm:$0xff] %v3148
          %3277 = vst [vmem:[%s282 + $0x50] sm:$0xff] %v3149
          %3278 = vst [vmem:[%s282 + $0x58] sm:$0xff] %v3150
          %3279 = vst [vmem:[%s282 + $0x60] sm:$0xff] %v3151
          %3280 = vst [vmem:[%s282 + $0x68] sm:$0xff] %v3152
          %3281 = vst [vmem:[%s282 + $0x70] sm:$0xff] %v3153
          %3282 = vst [vmem:[%s282 + $0x78] sm:$0xff] %v3154
          %3283 = vst [vmem:[%s282 + $0x80] sm:$0xff] %v3155
          %3284 = vst [vmem:[%s282 + $0x88] sm:$0xff] %v3156
          %3285 = vst [vmem:[%s282 + $0x90] sm:$0xff] %v3157
          %3286 = vst [vmem:[%s282 + $0x98] sm:$0xff] %v3158
          %3287 = vst [vmem:[%s282 + $0xa0] sm:$0xff] %v3159
          %3288 = vst [vmem:[%s282 + $0xa8] sm:$0xff] %v3160
          %3289 = vst [vmem:[%s282 + $0xb0] sm:$0xff] %v3161
          %3290 = vst [vmem:[%s282 + $0xb8] sm:$0xff] %v3162
          %3291 = vst [vmem:[%s282 + $0xc0] sm:$0xff] %v3163
          %3292 = vst [vmem:[%s282 + $0xc8] sm:$0xff] %v3164
          %3293 = vst [vmem:[%s282 + $0xd0] sm:$0xff] %v3165
          %3294 = vst [vmem:[%s282 + $0xd8] sm:$0xff] %v3166
          %3295 = vst [vmem:[%s282 + $0xe0] sm:$0xff] %v3167
          %3296 = vst [vmem:[%s282 + $0xe8] sm:$0xff] %v3168
          %3297 = vst [vmem:[%s282 + $0xf0] sm:$0xff] %v3169
          %3298 = vst [vmem:[%s282 + $0xf8] sm:$0xff] %v3170
          %3299 = vst [vmem:[%s282 + $0x100] sm:$0xff] %v3171
          %3300 = vst [vmem:[%s282 + $0x108] sm:$0xff] %v3172
          %3301 = vst [vmem:[%s282 + $0x110] sm:$0xff] %v3173
          %3302 = vst [vmem:[%s282 + $0x118] sm:$0xff] %v3174
          %3303 = vst [vmem:[%s282 + $0x120] sm:$0xff] %v3175
          %3304 = vst [vmem:[%s282 + $0x128] sm:$0xff] %v3176
          %3305 = vst [vmem:[%s282 + $0x130] sm:$0xff] %v3177
          %3306 = vst [vmem:[%s282 + $0x138] sm:$0xff] %v3178
          %3307 = vst [vmem:[%s282 + $0x140] sm:$0xff] %v3179
          %3308 = vst [vmem:[%s282 + $0x148] sm:$0xff] %v3180
          %3309 = vst [vmem:[%s282 + $0x150] sm:$0xff] %v3181
          %3310 = vst [vmem:[%s282 + $0x158] sm:$0xff] %v3182
          %3311 = vst [vmem:[%s282 + $0x160] sm:$0xff] %v3183
          %3312 = vst [vmem:[%s282 + $0x168] sm:$0xff] %v3184
          %3313 = vst [vmem:[%s282 + $0x170] sm:$0xff] %v3185
          %3314 = vst [vmem:[%s282 + $0x178] sm:$0xff] %v3186
          %3315 = vst [vmem:[%s282 + $0x180] sm:$0xff] %v3187
          %3316 = vst [vmem:[%s282 + $0x188] sm:$0xff] %v3188
          %3317 = vst [vmem:[%s282 + $0x190] sm:$0xff] %v3189
          %3318 = vst [vmem:[%s282 + $0x198] sm:$0xff] %v3190
          %3319 = vst [vmem:[%s282 + $0x1a0] sm:$0xff] %v3191
          %3320 = vst [vmem:[%s282 + $0x1a8] sm:$0xff] %v3192
          %3321 = vst [vmem:[%s282 + $0x1b0] sm:$0xff] %v3193
          %3322 = vst [vmem:[%s282 + $0x1b8] sm:$0xff] %v3194
          %3323 = vst [vmem:[%s282 + $0x1c0] sm:$0xff] %v3195
          %3324 = vst [vmem:[%s282 + $0x1c8] sm:$0xff] %v3196
          %3325 = vst [vmem:[%s282 + $0x1d0] sm:$0xff] %v3197
          %3326 = vst [vmem:[%s282 + $0x1d8] sm:$0xff] %v3198
          %3327 = vst [vmem:[%s282 + $0x1e0] sm:$0xff] %v3199
          %3328 = vst [vmem:[%s282 + $0x1e8] sm:$0xff] %v3200
          %3329 = vst [vmem:[%s282 + $0x1f0] sm:$0xff] %v3201
          %3330 = vst [vmem:[%s282 + $0x1f8] sm:$0xff] %v3202
          %3331 = vst [vmem:[%s282 + $0x200] sm:$0xff] %v3203
          %3332 = vst [vmem:[%s282 + $0x208] sm:$0xff] %v3204
          %3333 = vst [vmem:[%s282 + $0x210] sm:$0xff] %v3205
          %3334 = vst [vmem:[%s282 + $0x218] sm:$0xff] %v3206
          %3335 = vst [vmem:[%s282 + $0x220] sm:$0xff] %v3207
          %3336 = vst [vmem:[%s282 + $0x228] sm:$0xff] %v3208
          %3337 = vst [vmem:[%s282 + $0x230] sm:$0xff] %v3209
          %3338 = vst [vmem:[%s282 + $0x238] sm:$0xff] %v3210
          %3339 = vst [vmem:[%s282 + $0x240] sm:$0xff] %v3211
          %3340 = vst [vmem:[%s282 + $0x248] sm:$0xff] %v3212
          %3341 = vst [vmem:[%s282 + $0x250] sm:$0xff] %v3213
          %3342 = vst [vmem:[%s282 + $0x258] sm:$0xff] %v3214
          %3343 = vst [vmem:[%s282 + $0x260] sm:$0xff] %v3215
          %3344 = vst [vmem:[%s282 + $0x268] sm:$0xff] %v3216
          %3345 = vst [vmem:[%s282 + $0x270] sm:$0xff] %v3217
          %3346 = vst [vmem:[%s282 + $0x278] sm:$0xff] %v3218
          %3347 = vst [vmem:[%s282 + $0x280] sm:$0xff] %v3219
          %3348 = vst [vmem:[%s282 + $0x288] sm:$0xff] %v3220
          %3349 = vst [vmem:[%s282 + $0x290] sm:$0xff] %v3221
          %3350 = vst [vmem:[%s282 + $0x298] sm:$0xff] %v3222
          %3351 = vst [vmem:[%s282 + $0x2a0] sm:$0xff] %v3223
          %3352 = vst [vmem:[%s282 + $0x2a8] sm:$0xff] %v3224
          %3353 = vst [vmem:[%s282 + $0x2b0] sm:$0xff] %v3225
          %3354 = vst [vmem:[%s282 + $0x2b8] sm:$0xff] %v3226
          %3355 = vst [vmem:[%s282 + $0x2c0] sm:$0xff] %v3227
          %3356 = vst [vmem:[%s282 + $0x2c8] sm:$0xff] %v3228
          %3357 = vst [vmem:[%s282 + $0x2d0] sm:$0xff] %v3229
          %3358 = vst [vmem:[%s282 + $0x2d8] sm:$0xff] %v3230
          %3359 = vst [vmem:[%s282 + $0x2e0] sm:$0xff] %v3231
          %3360 = vst [vmem:[%s282 + $0x2e8] sm:$0xff] %v3232
          %3361 = vst [vmem:[%s282 + $0x2f0] sm:$0xff] %v3233
          %3362 = vst [vmem:[%s282 + $0x2f8] sm:$0xff] %v3234
          %3363 = vst [vmem:[%s282 + $0x300] sm:$0xff] %v3235
          %3364 = vst [vmem:[%s282 + $0x308] sm:$0xff] %v3236
          %3365 = vst [vmem:[%s282 + $0x310] sm:$0xff] %v3237
          %3366 = vst [vmem:[%s282 + $0x318] sm:$0xff] %v3238
          %3367 = vst [vmem:[%s282 + $0x320] sm:$0xff] %v3239
          %3368 = vst [vmem:[%s282 + $0x328] sm:$0xff] %v3240
          %3369 = vst [vmem:[%s282 + $0x330] sm:$0xff] %v3241
          %3370 = vst [vmem:[%s282 + $0x338] sm:$0xff] %v3242
          %3371 = vst [vmem:[%s282 + $0x340] sm:$0xff] %v3243
          %3372 = vst [vmem:[%s282 + $0x348] sm:$0xff] %v3244
          %3373 = vst [vmem:[%s282 + $0x350] sm:$0xff] %v3245
          %3374 = vst [vmem:[%s282 + $0x358] sm:$0xff] %v3246
          %3375 = vst [vmem:[%s282 + $0x360] sm:$0xff] %v3247
          %3376 = vst [vmem:[%s282 + $0x368] sm:$0xff] %v3248
          %3377 = vst [vmem:[%s282 + $0x370] sm:$0xff] %v3249
          %3378 = vst [vmem:[%s282 + $0x378] sm:$0xff] %v3250
          %3379 = vst [vmem:[%s282 + $0x380] sm:$0xff] %v3251
          %3380 = vst [vmem:[%s282 + $0x388] sm:$0xff] %v3252
          %3381 = vst [vmem:[%s282 + $0x390] sm:$0xff] %v3253
          %3382 = vst [vmem:[%s282 + $0x398] sm:$0xff] %v3254
          %3383 = vst [vmem:[%s282 + $0x3a0] sm:$0xff] %v3255
          %3384 = vst [vmem:[%s282 + $0x3a8] sm:$0xff] %v3256
          %3385 = vst [vmem:[%s282 + $0x3b0] sm:$0xff] %v3257
          %3386 = vst [vmem:[%s282 + $0x3b8] sm:$0xff] %v3258
          %3387 = vst [vmem:[%s282 + $0x3c0] sm:$0xff] %v3259
          %3388 = vst [vmem:[%s282 + $0x3c8] sm:$0xff] %v3260
          %3389 = vst [vmem:[%s282 + $0x3d0] sm:$0xff] %v3261
          %3390 = vst [vmem:[%s282 + $0x3d8] sm:$0xff] %v3262
          %3391 = vst [vmem:[%s282 + $0x3e0] sm:$0xff] %v3263
          %3392 = vst [vmem:[%s282 + $0x3e8] sm:$0xff] %v3264
          %3393 = vst [vmem:[%s282 + $0x3f0] sm:$0xff] %v3265
          %3394 = vst [vmem:[%s282 + $0x3f8] sm:$0xff] %v3266
        $region52: #{tpu_custom_call.1} parent=31 // pred_fallthru
          _
        %s3395 = sand.u32 %s132, 1
        %s3396 = scalar_lea.sflag [#allocation5], %s3395
        %s3397 = sand.u32 %s132, 1
        %s3398 = smul.addr %s3397, 1024
        %s3399 = scalar_lea.vmem [#allocation9], %s3398
        // Predicated region
        $region53: #{tpu_custom_call.1} parent=31 // pred_check
          %p3400 = pneg %p142
        $region54: #{tpu_custom_call.1} parent=31 // pred_check_branch
          %3402 = sbr.rel (%p3400) target = $region56
        $region55: #{tpu_custom_call.1} parent=31 // pred_region
          %s3403 = smul.u32 32, %s26
          %s3404 = smul.u32 4, %s27
          %3406 = vsyncadd %s3396, 0
          %s3407 = smul.addr %s3403, 8
          %s3408 = sadd.s32 %s3404, %s3407
          %s3409 = smul.addr %s3408, 8
          %s3410 = scalar_lea.hbm %s3, %s3409
          %s3411 = sshll.u32 %s3399, 4
          %s3412 = int_to_ptr.vmem [resolvable:$true] %s3411
          %s3413 = sshll.u32 %s3410, 4
          %s3414 = int_to_ptr.hbm [resolvable:$true] %s3413
          %3419 = dma.vmem_to_hbm [thread:$0]  %s3412, 16384, %s3414, %s3396, 512, 1024, 32
        $region56: #{tpu_custom_call.1} parent=31 // pred_fallthru
          _
      $region32: #{tpu_custom_call.1} parent=5 // pred_fallthru
        _
      %p3420 = scmp.le.s32.totalorder 2, %s16
      // Predicated region
      $region57: #{tpu_custom_call.1} parent=5 // pred_check
        %p3421 = pneg %p3420
      $region58: #{tpu_custom_call.1} parent=5 // pred_check_branch
        %3423 = sbr.rel (%p3421) target = $region60
      $region59: #{tpu_custom_call.1} parent=5 // pred_region
        %s3424 = ssub.s32 %s16, 2
        // Predicated region
        $region61: #{tpu_custom_call.1} parent=59 // pred_check
          %p3425 = pneg %p148
        $region62: #{tpu_custom_call.1} parent=59 // pred_check_branch
          %3427 = sbr.rel (%p3425) target = $region64
        $region63: #{tpu_custom_call.1} parent=59 // pred_region
          %s3428 = sand.u32 %s133, 1
          %s3429 = scalar_lea.sflag [#allocation5], %s3428
          %s3430 = sand.u32 %s133, 1
          %s3431 = smul.addr %s3430, 1024
          %s3432 = scalar_lea.vmem [#allocation9], %s3431
          %3434 = dma.done %s3429, 16384
        $region64: #{tpu_custom_call.1} parent=59 // pred_fallthru
          _
      $region60: #{tpu_custom_call.1} parent=5 // pred_fallthru
        _
    $region6: #{tpu_custom_call.1} parent=1 // loop_footer
      %s20 = sadd.s32 1, %s16
    $region7: #{tpu_custom_call.1} parent=1 // loop_footer_branch
      %15 = sbr.rel target = $region3
    $region8: #{tpu_custom_call.1} parent=1 // loop_exit
      _
    %3435 = vsyncpa [#allocation4], 1
    %s3436 = scalar_lea.sflag [#allocation4], 1
    %3437 = vsyncpa %s3436, 1
    %3438 = vsyncpa [#allocation7], 1
    %s3439 = scalar_lea.sflag [#allocation7], 1
    %3440 = vsyncpa %s3439, 1
    %3441 = vsyncpa [#allocation5], 1
    %s3442 = scalar_lea.sflag [#allocation5], 1
    %3443 = vsyncpa %s3442, 1

</llo_original>
